<compile_context>
chip_gen: v5e
topology: v5e:2x2
jax: 0.10.0
libtpu: 0.0.40
codegen_flags: <defaults>
</compile_context>

<pallas_src>
import math
import functools

import jax
import jax.numpy as jnp
from jax.experimental import pallas as pl
from jax.experimental.pallas import tpu as pltpu


TEXT_DIM = 768  # hard-coded in the PyTorch module

_PARAM_ORDER = [
    "g_norm_o", "b_norm_o", "g_norm_v", "b_norm_v", "g_norm_t", "b_norm_t",
    "w_obj_qk", "b_obj_qk", "w_obj_v", "b_obj_v",
    "w_vis_qk", "b_vis_qk", "w_vis_v", "b_vis_v",
    "w_txt_qkv", "b_txt_qkv",
    "w_out_obj", "b_out_obj", "w_out_vis", "b_out_vis", "w_out_txt", "b_out_txt",
]


# ------------------------- fused whole-stack kernel --------------------------

def _encoder_stack_kernel(
    # activations (one batch block per grid step along axis 0)
    bias_ref, tgt_ref, pos_o_ref, vis_ref, pos_v_ref, txt_ref,
    # layernorm params (layer-streamed, block leading dim = 1)
    g_no_ref, b_no_ref, g_nv_ref, b_nv_ref, g_nt_ref, b_nt_ref,
    # packed input projections (bf16)
    w_oqk_ref, b_oqk_ref, w_ov_ref, b_ov_ref,
    w_vqk_ref, b_vqk_ref, w_vv_ref, b_vv_ref,
    w_tqkv_ref, b_tqkv_ref,
    # output projections (bf16)
    w_oo_ref, b_oo_ref, w_vo_ref, b_vo_ref, w_to_ref, b_to_ref,
    # outputs
    obj_o_ref, txt_o_ref, vis_o_ref,
    # carried activations + q/k/v assembly scratch
    tgt_s, txt_s, vis_s, q_s, k_s, v_s,
    *, o_len, t_len, v_len, E, TD, h, bb):

    f32 = jnp.float32
    L = o_len + t_len + v_len
    dh = E // h
    layer = pl.program_id(1)
    n_layers = pl.num_programs(1)

    # first layer of each batch block: load activations into resident scratch
    @pl.when(layer == 0)
    def _():
        tgt_s[...] = tgt_ref[...].astype(f32)
        txt_s[...] = txt_ref[...].astype(f32)
        vis_s[...] = vis_ref[...].astype(f32)

    tgt = tgt_s[...]              # (bb, o_len, E)   carried, f32
    txt = txt_s[...]              # (bb, t_len, TD)
    vis = vis_s[...]              # (bb, v_len, E)
    pos_o = pos_o_ref[...].astype(f32)
    pos_v = pos_v_ref[...].astype(f32)

    def layer_norm(x, g_ref, b_ref):
        mu = jnp.mean(x, axis=-1, keepdims=True)
        var = jnp.mean(jnp.square(x - mu), axis=-1, keepdims=True)
        return (x - mu) * jax.lax.rsqrt(var + 1e-5) * g_ref[0] + b_ref[0]

    def dense(x2d, w_ref, b_ref):
        # bf16 MXU operands, f32 accumulation, f32 bias add
        return jnp.dot(x2d.astype(w_ref.dtype), w_ref[0],
                       preferred_element_type=f32) + b_ref[0]

    # pre-norm
    obj2 = layer_norm(tgt, g_no_ref, b_no_ref)
    vis2 = layer_norm(vis, g_nv_ref, b_nv_ref)
    txt2 = layer_norm(txt, g_nt_ref, b_nt_ref)

    # packed projections, batch-folded M dimension (pos only feeds q/k, not v)
    obj_qk_in = (obj2 + pos_o).reshape(bb * o_len, E)
    vis_qk_in = (vis2 + pos_v).reshape(bb * v_len, E)

    obj_qk = dense(obj_qk_in, w_oqk_ref, b_oqk_ref)                   # (bb*o, 2E)
    obj_v = dense(obj2.reshape(bb * o_len, E), w_ov_ref, b_ov_ref)    # (bb*o, E)
    vis_qk = dense(vis_qk_in, w_vqk_ref, b_vqk_ref)                   # (bb*v, 2E)
    vis_v = dense(vis2.reshape(bb * v_len, E), w_vv_ref, b_vv_ref)    # (bb*v, E)
    txt_qkv = dense(txt2.reshape(bb * t_len, TD), w_tqkv_ref, b_tqkv_ref)  # (bb*t, 3E)

    # assemble full-sequence q/k/v into VMEM scratch at static 8-aligned offsets,
    # key/query order [object, text, visual] (q columns already carry 1/sqrt(dh))
    o_end = o_len
    t_end = o_len + t_len
    q_s[:, :o_end, :] = obj_qk[:, :E].reshape(bb, o_len, E)
    k_s[:, :o_end, :] = obj_qk[:, E:2 * E].reshape(bb, o_len, E)
    v_s[:, :o_end, :] = obj_v.reshape(bb, o_len, E)
    q_s[:, o_end:t_end, :] = txt_qkv[:, :E].reshape(bb, t_len, E)
    k_s[:, o_end:t_end, :] = txt_qkv[:, E:2 * E].reshape(bb, t_len, E)
    v_s[:, o_end:t_end, :] = txt_qkv[:, 2 * E:3 * E].reshape(bb, t_len, E)
    q_s[:, t_end:, :] = vis_qk[:, :E].reshape(bb, v_len, E)
    k_s[:, t_end:, :] = vis_qk[:, E:2 * E].reshape(bb, v_len, E)
    v_s[:, t_end:, :] = vis_v.reshape(bb, v_len, E)

    q = q_s[...]
    k = k_s[...]
    v = v_s[...]

    # key-padding bias materialized once (finite -1e30, not -inf) and reused per head
    bias_full = jnp.broadcast_to(bias_ref[...].astype(f32), (bb, L, L))

    # multi-head attention, batched over the batch block; static unroll over heads
    # TODO(synk): dropout / bernoulli(0.1)*-1e-12 logit noise of the reference
    # (training-mode randomness) are treated as identity (eval mode).
    head_outs = []
    for hd in range(h):
        c0 = hd * dh
        qh = q[:, :, c0:c0 + dh]                     # (bb, L, dh)
        kh = k[:, :, c0:c0 + dh]
        vh = v[:, :, c0:c0 + dh]
        s = jax.lax.dot_general(qh, kh, (((2,), (2,)), ((0,), (0,))),
                                preferred_element_type=f32)   # (bb, L, L)
        s = s + bias_full
        s = s - jnp.max(s, axis=-1, keepdims=True)
        p = jnp.exp(s)
        p = p * pl.reciprocal(jnp.sum(p, axis=-1, keepdims=True), approx=True)
        head_outs.append(
            jax.lax.dot_general(p, vh, (((2,), (1,)), ((0,), (0,))),
                                preferred_element_type=f32))  # (bb, L, dh)
    attn = jnp.concatenate(head_outs, axis=-1)                # (bb, L, E)

    obj_attn = attn[:, :o_end, :].reshape(bb * o_len, E)
    txt_attn = attn[:, o_end:t_end, :].reshape(bb * t_len, E)
    vis_attn = attn[:, t_end:, :].reshape(bb * v_len, E)

    # output projections + residuals (residual uses un-normalized carried inputs)
    new_tgt = dense(obj_attn, w_oo_ref, b_oo_ref).reshape(bb, o_len, E) + tgt
    new_txt = dense(txt_attn, w_to_ref, b_to_ref).reshape(bb, t_len, TD) + txt
    new_vis = dense(vis_attn, w_vo_ref, b_vo_ref).reshape(bb, v_len, E) + vis

    tgt_s[...] = new_tgt
    txt_s[...] = new_txt
    vis_s[...] = new_vis

    # write HBM outputs only after the last layer of this batch block
    @pl.when(layer == n_layers - 1)
    def _():
        obj_o_ref[...] = new_tgt.astype(obj_o_ref.dtype)
        txt_o_ref[...] = new_txt.astype(txt_o_ref.dtype)
        vis_o_ref[...] = new_vis.astype(vis_o_ref.dtype)


def _stack_layer_params(params_list, E, num_heads):
    """Stack per-layer params along a leading layer axis; fold the 1/sqrt(dh)
    attention scale into the Q columns of the packed QK / QKV projections and
    cast matmul weights to bf16 (MXU operands)."""
    scale = 1.0 / math.sqrt(E // num_heads)
    prepared = []
    for p in params_list:
        q = dict(p)
        for wn, bn in (("w_obj_qk", "b_obj_qk"), ("w_vis_qk", "b_vis_qk"),
                       ("w_txt_qkv", "b_txt_qkv")):
            q[wn] = p[wn].at[:, :E].multiply(scale)
            q[bn] = p[bn].at[:, :E].multiply(scale)
        prepared.append(q)
    stacked = {}
    for name in _PARAM_ORDER:
        arr = jnp.stack([q[name] for q in prepared], axis=0)
        if name.startswith("w_"):
            arr = arr.astype(jnp.bfloat16)
        stacked[name] = arr
    return stacked


def fused_encoder_stack(stacked, tgt_b, pos_o_b, vis_b, pos_v_b, txt_b,
                        attn_bias, num_heads):
    """Whole layer stack as one pallas_call. Tensors are batch-major (B, L, D)."""
    bs, o_len, E = tgt_b.shape
    v_len = vis_b.shape[1]
    t_len = txt_b.shape[1]
    TD = txt_b.shape[2]
    L = o_len + t_len + v_len
    n_layers = stacked["w_obj_qk"].shape[0]

    # half-batch parallel split so both v7x TensorCores get work
    nb = 2 if (bs >= 2 and bs % 2 == 0) else 1
    bb = bs // nb

    kern = functools.partial(
        _encoder_stack_kernel,
        o_len=o_len, t_len=t_len, v_len=v_len, E=E, TD=TD, h=num_heads, bb=bb)

    def act_spec(ln, d):
        return pl.BlockSpec((bb, ln, d), lambda b, l: (b, 0, 0))

    def w_spec(shape):
        return pl.BlockSpec((1,) + shape[1:], lambda b, l: (l, 0, 0))

    flat_params = [stacked[name] for name in _PARAM_ORDER]

    in_specs = [
        act_spec(1, L),          # attn_bias (bs, 1, L)
        act_spec(o_len, E),      # tgt
        act_spec(o_len, E),      # tgt_pos
        act_spec(v_len, E),      # visual
        act_spec(v_len, E),      # visual_pos
        act_spec(t_len, TD),     # text
    ] + [w_spec(p.shape) for p in flat_params]

    out_shape = (
        jax.ShapeDtypeStruct((bs, o_len, E), tgt_b.dtype),
        jax.ShapeDtypeStruct((bs, t_len, TD), txt_b.dtype),
        jax.ShapeDtypeStruct((bs, v_len, E), vis_b.dtype),
    )
    out_specs = (act_spec(o_len, E), act_spec(t_len, TD), act_spec(v_len, E))

    scratch_shapes = [
        pltpu.VMEM((bb, o_len, E), jnp.float32),   # carried object activations
        pltpu.VMEM((bb, t_len, TD), jnp.float32),  # carried text activations
        pltpu.VMEM((bb, v_len, E), jnp.float32),   # carried visual activations
        pltpu.VMEM((bb, L, E), jnp.float32),       # q
        pltpu.VMEM((bb, L, E), jnp.float32),       # k
        pltpu.VMEM((bb, L, E), jnp.float32),       # v
    ]

    obj_out, txt_out, vis_out = pl.pallas_call(
        kern,
        out_shape=out_shape,
        grid=(nb, n_layers),
        in_specs=in_specs,
        out_specs=out_specs,
        scratch_shapes=scratch_shapes,
        compiler_params=pltpu.CompilerParams(
            dimension_semantics=("parallel", "arbitrary"),
            vmem_limit_bytes=32 * 1024 * 1024),
    )(attn_bias, tgt_b, pos_o_b, vis_b, pos_v_b, txt_b, *flat_params)
    return obj_out, txt_out, vis_out


# ------------------------- parameters / forward pass -------------------------

def init_layer_params(key, embed_dim, std=0.02):
    E = embed_dim
    keys = jax.random.split(key, 8)

    def w(k, din, dout):
        return jax.random.normal(k, (din, dout), jnp.float32) * std

    def b(dout):
        return jnp.zeros((1, dout), jnp.float32)

    return {
        "g_norm_o": jnp.ones((1, E), jnp.float32), "b_norm_o": jnp.zeros((1, E), jnp.float32),
        "g_norm_v": jnp.ones((1, E), jnp.float32), "b_norm_v": jnp.zeros((1, E), jnp.float32),
        "g_norm_t": jnp.ones((1, TEXT_DIM), jnp.float32),
        "b_norm_t": jnp.zeros((1, TEXT_DIM), jnp.float32),
        # packed [Wq | Wk] and standalone Wv for object / visual; [Wq|Wk|Wv] for text
        "w_obj_qk": w(keys[0], E, 2 * E), "b_obj_qk": b(2 * E),
        "w_obj_v": w(keys[1], E, E), "b_obj_v": b(E),
        "w_vis_qk": w(keys[2], E, 2 * E), "b_vis_qk": b(2 * E),
        "w_vis_v": w(keys[3], E, E), "b_vis_v": b(E),
        "w_txt_qkv": w(keys[4], TEXT_DIM, 3 * E), "b_txt_qkv": b(3 * E),
        "w_out_obj": w(keys[5], E, E), "b_out_obj": b(E),
        "w_out_vis": w(keys[6], E, E), "b_out_vis": b(E),
        "w_out_txt": w(keys[7], E, TEXT_DIM), "b_out_txt": b(TEXT_DIM),
    }


def transformer_encoder_forward(params, tgt_src, tgt_pos, visual_src, visual_mask,
                                visual_pos, text_src, text_mask, num_heads):
    """Stack of fused Triple_Alignment layers (TransformerEncoder semantics):
    the outputs of one layer feed the next. Inputs are sequence-first (L, B, D)."""
    o_len, bs, E = tgt_src.shape
    v_len = visual_src.shape[0]
    t_len = text_src.shape[0]
    assert E % num_heads == 0

    # batch-major once for the whole stack (lane-dense per-batch slabs for Pallas)
    to_b = lambda x: jnp.transpose(x, (1, 0, 2))
    tgt_b = to_b(tgt_src)
    pos_o_b = to_b(tgt_pos) if tgt_pos is not None else jnp.zeros_like(tgt_b)
    vis_b = to_b(visual_src)
    pos_v_b = to_b(visual_pos) if visual_pos is not None else jnp.zeros_like(vis_b)
    txt_b = to_b(text_src)

    # additive key-padding bias, key order [object, text, visual]; finite large
    # negative instead of -inf to avoid inf-inf -> NaN if a row is fully masked.
    obj_mask = jnp.zeros((bs, o_len), dtype=bool)
    kp_mask = jnp.concatenate([obj_mask, text_mask, visual_mask], axis=-1)      # (bs, L)
    attn_bias = jnp.where(kp_mask, -1e30, 0.0).astype(jnp.float32)[:, None, :]  # (bs,1,L)

    stacked = _stack_layer_params(params, E, num_heads)

    obj_b, txt_b, vis_b = fused_encoder_stack(
        stacked, tgt_b, pos_o_b, vis_b, pos_v_b, txt_b, attn_bias, num_heads)

    from_b = lambda x: jnp.transpose(x, (1, 0, 2))
    return from_b(vis_b), from_b(txt_b), from_b(obj_b)


# ----------------------------------- main ------------------------------------

if __name__ == "__main__":
    num_layers = 2
    embed_dim = 32
    num_heads = 4
    o_len, v_len, t_len, bs = 8, 16, 8, 2

    key = jax.random.PRNGKey(0)
    k_par, k_in = jax.random.split(key)
    params = [init_layer_params(k, embed_dim) for k in jax.random.split(k_par, num_layers)]

    keys = jax.random.split(k_in, 5)
    tgt_src = jax.random.normal(keys[0], (o_len, bs, embed_dim), jnp.float32)
    tgt_pos = jax.random.normal(keys[1], (o_len, bs, embed_dim), jnp.float32)
    visual_src = jax.random.normal(keys[2], (v_len, bs, embed_dim), jnp.float32)
    visual_pos = jax.random.normal(keys[3], (v_len, bs, embed_dim), jnp.float32)
    text_src = jax.random.normal(keys[4], (t_len, bs, TEXT_DIM), jnp.float32)
    visual_mask = jnp.zeros((bs, v_len), dtype=bool).at[:, -3:].set(True)
    text_mask = jnp.zeros((bs, t_len), dtype=bool).at[:, -2:].set(True)

    @jax.jit
    def run(params, tgt_src, tgt_pos, visual_src, visual_mask, visual_pos,
            text_src, text_mask):
        return transformer_encoder_forward(
            params, tgt_src, tgt_pos, visual_src, visual_mask, visual_pos,
            text_src, text_mask, num_heads)

    v_out, t_out, o_out = run(params, tgt_src, tgt_pos, visual_src, visual_mask,
                              visual_pos, text_src, text_mask)
    jax.block_until_ready((v_out, t_out, o_out))

    assert v_out.shape == (v_len, bs, embed_dim)
    assert t_out.shape == (t_len, bs, TEXT_DIM)
    assert o_out.shape == (o_len, bs, embed_dim)
    assert bool(jnp.all(jnp.isfinite(v_out)))
    assert bool(jnp.all(jnp.isfinite(t_out)))
    assert bool(jnp.all(jnp.isfinite(o_out)))
    print("KERNEL_OK")
</pallas_src>

<mosaic_0001>
module attributes {stable_mosaic.version = 11 : i64} {
  func.func @_encoder_stack_kernel(%arg0: i32, %arg1: i32, %arg2: memref<1x1x32xf32, #tpu.memory_space<vmem>>, %arg3: memref<1x8x32xf32, #tpu.memory_space<vmem>>, %arg4: memref<1x8x32xf32, #tpu.memory_space<vmem>>, %arg5: memref<1x16x32xf32, #tpu.memory_space<vmem>>, %arg6: memref<1x16x32xf32, #tpu.memory_space<vmem>>, %arg7: memref<1x8x768xf32, #tpu.memory_space<vmem>>, %arg8: memref<1x1x32xf32, #tpu.memory_space<vmem>>, %arg9: memref<1x1x32xf32, #tpu.memory_space<vmem>>, %arg10: memref<1x1x32xf32, #tpu.memory_space<vmem>>, %arg11: memref<1x1x32xf32, #tpu.memory_space<vmem>>, %arg12: memref<1x1x768xf32, #tpu.memory_space<vmem>>, %arg13: memref<1x1x768xf32, #tpu.memory_space<vmem>>, %arg14: memref<1x32x64xbf16, #tpu.memory_space<vmem>>, %arg15: memref<1x1x64xf32, #tpu.memory_space<vmem>>, %arg16: memref<1x32x32xbf16, #tpu.memory_space<vmem>>, %arg17: memref<1x1x32xf32, #tpu.memory_space<vmem>>, %arg18: memref<1x32x64xbf16, #tpu.memory_space<vmem>>, %arg19: memref<1x1x64xf32, #tpu.memory_space<vmem>>, %arg20: memref<1x32x32xbf16, #tpu.memory_space<vmem>>, %arg21: memref<1x1x32xf32, #tpu.memory_space<vmem>>, %arg22: memref<1x768x96xbf16, #tpu.memory_space<vmem>>, %arg23: memref<1x1x96xf32, #tpu.memory_space<vmem>>, %arg24: memref<1x32x32xbf16, #tpu.memory_space<vmem>>, %arg25: memref<1x1x32xf32, #tpu.memory_space<vmem>>, %arg26: memref<1x32x32xbf16, #tpu.memory_space<vmem>>, %arg27: memref<1x1x32xf32, #tpu.memory_space<vmem>>, %arg28: memref<1x32x768xbf16, #tpu.memory_space<vmem>>, %arg29: memref<1x1x768xf32, #tpu.memory_space<vmem>>, %arg30: memref<1x8x32xf32, #tpu.memory_space<vmem>>, %arg31: memref<1x8x768xf32, #tpu.memory_space<vmem>>, %arg32: memref<1x16x32xf32, #tpu.memory_space<vmem>>, %arg33: memref<1x8x32xf32, #tpu.memory_space<vmem>>, %arg34: memref<1x8x768xf32, #tpu.memory_space<vmem>>, %arg35: memref<1x16x32xf32, #tpu.memory_space<vmem>>, %arg36: memref<1x32x32xf32, #tpu.memory_space<vmem>>, %arg37: memref<1x32x32xf32, #tpu.memory_space<vmem>>, %arg38: memref<1x32x32xf32, #tpu.memory_space<vmem>>) attributes {dimension_semantics = [#tpu.dimension_semantics<parallel>, #tpu.dimension_semantics<arbitrary>], iteration_bounds = array<i64: 2, 2>, scalar_prefetch = 0 : i64, scratch_operands = 6 : i64, tpu.core_type = #tpu.core_type<tc>, window_params = [{transform_indices = @transform_0, window_bounds = array<i64: 1, 1, 32>}, {transform_indices = @transform_1, window_bounds = array<i64: 1, 8, 32>}, {transform_indices = @transform_2, window_bounds = array<i64: 1, 8, 32>}, {transform_indices = @transform_3, window_bounds = array<i64: 1, 16, 32>}, {transform_indices = @transform_4, window_bounds = array<i64: 1, 16, 32>}, {transform_indices = @transform_5, window_bounds = array<i64: 1, 8, 768>}, {transform_indices = @transform_6, window_bounds = array<i64: 1, 1, 32>}, {transform_indices = @transform_7, window_bounds = array<i64: 1, 1, 32>}, {transform_indices = @transform_8, window_bounds = array<i64: 1, 1, 32>}, {transform_indices = @transform_9, window_bounds = array<i64: 1, 1, 32>}, {transform_indices = @transform_10, window_bounds = array<i64: 1, 1, 768>}, {transform_indices = @transform_11, window_bounds = array<i64: 1, 1, 768>}, {transform_indices = @transform_12, window_bounds = array<i64: 1, 32, 64>}, {transform_indices = @transform_13, window_bounds = array<i64: 1, 1, 64>}, {transform_indices = @transform_14, window_bounds = array<i64: 1, 32, 32>}, {transform_indices = @transform_15, window_bounds = array<i64: 1, 1, 32>}, {transform_indices = @transform_16, window_bounds = array<i64: 1, 32, 64>}, {transform_indices = @transform_17, window_bounds = array<i64: 1, 1, 64>}, {transform_indices = @transform_18, window_bounds = array<i64: 1, 32, 32>}, {transform_indices = @transform_19, window_bounds = array<i64: 1, 1, 32>}, {transform_indices = @transform_20, window_bounds = array<i64: 1, 768, 96>}, {transform_indices = @transform_21, window_bounds = array<i64: 1, 1, 96>}, {transform_indices = @transform_22, window_bounds = array<i64: 1, 32, 32>}, {transform_indices = @transform_23, window_bounds = array<i64: 1, 1, 32>}, {transform_indices = @transform_24, window_bounds = array<i64: 1, 32, 32>}, {transform_indices = @transform_25, window_bounds = array<i64: 1, 1, 32>}, {transform_indices = @transform_26, window_bounds = array<i64: 1, 32, 768>}, {transform_indices = @transform_27, window_bounds = array<i64: 1, 1, 768>}, {transform_indices = @transform_28, window_bounds = array<i64: 1, 8, 32>}, {transform_indices = @transform_29, window_bounds = array<i64: 1, 8, 768>}, {transform_indices = @transform_30, window_bounds = array<i64: 1, 16, 32>}]} {
    %c0_i32 = arith.constant 0 : i32
    %0 = arith.cmpi eq, %arg1, %c0_i32 : i32
    %1 = arith.extui %0 : i1 to i32
    %c0_i32_0 = arith.constant 0 : i32
    %2 = arith.cmpi ne, %1, %c0_i32_0 : i32
    scf.if %2 {
      %c0_166 = arith.constant 0 : index
      %c0_167 = arith.constant 0 : index
      %c0_168 = arith.constant 0 : index
      %277 = vector.load %arg3[%c0_166, %c0_167, %c0_168] : memref<1x8x32xf32, #tpu.memory_space<vmem>>, vector<1x8x32xf32>
      %c0_169 = arith.constant 0 : index
      %c0_170 = arith.constant 0 : index
      %c0_171 = arith.constant 0 : index
      %278 = vector.load %arg33[%c0_169, %c0_170, %c0_171] : memref<1x8x32xf32, #tpu.memory_space<vmem>>, vector<1x8x32xf32>
      tpu.vector_store %arg33[%c0_169, %c0_170, %c0_171], %277 {strides = array<i32>} : memref<1x8x32xf32, #tpu.memory_space<vmem>>, vector<1x8x32xf32>,
      %c0_172 = arith.constant 0 : index
      %c0_173 = arith.constant 0 : index
      %c0_174 = arith.constant 0 : index
      %279 = vector.load %arg7[%c0_172, %c0_173, %c0_174] : memref<1x8x768xf32, #tpu.memory_space<vmem>>, vector<1x8x768xf32>
      %c0_175 = arith.constant 0 : index
      %c0_176 = arith.constant 0 : index
      %c0_177 = arith.constant 0 : index
      %280 = vector.load %arg34[%c0_175, %c0_176, %c0_177] : memref<1x8x768xf32, #tpu.memory_space<vmem>>, vector<1x8x768xf32>
      tpu.vector_store %arg34[%c0_175, %c0_176, %c0_177], %279 {strides = array<i32>} : memref<1x8x768xf32, #tpu.memory_space<vmem>>, vector<1x8x768xf32>,
      %c0_178 = arith.constant 0 : index
      %c0_179 = arith.constant 0 : index
      %c0_180 = arith.constant 0 : index
      %281 = vector.load %arg5[%c0_178, %c0_179, %c0_180] : memref<1x16x32xf32, #tpu.memory_space<vmem>>, vector<1x16x32xf32>
      %c0_181 = arith.constant 0 : index
      %c0_182 = arith.constant 0 : index
      %c0_183 = arith.constant 0 : index
      %282 = vector.load %arg35[%c0_181, %c0_182, %c0_183] : memref<1x16x32xf32, #tpu.memory_space<vmem>>, vector<1x16x32xf32>
      tpu.vector_store %arg35[%c0_181, %c0_182, %c0_183], %281 {strides = array<i32>} : memref<1x16x32xf32, #tpu.memory_space<vmem>>, vector<1x16x32xf32>,
    } else {
    }
    %c0 = arith.constant 0 : index
    %c0_1 = arith.constant 0 : index
    %c0_2 = arith.constant 0 : index
    %3 = vector.load %arg33[%c0, %c0_1, %c0_2] : memref<1x8x32xf32, #tpu.memory_space<vmem>>, vector<1x8x32xf32>
    %c0_3 = arith.constant 0 : index
    %c0_4 = arith.constant 0 : index
    %c0_5 = arith.constant 0 : index
    %4 = vector.load %arg34[%c0_3, %c0_4, %c0_5] : memref<1x8x768xf32, #tpu.memory_space<vmem>>, vector<1x8x768xf32>
    %c0_6 = arith.constant 0 : index
    %c0_7 = arith.constant 0 : index
    %c0_8 = arith.constant 0 : index
    %5 = vector.load %arg35[%c0_6, %c0_7, %c0_8] : memref<1x16x32xf32, #tpu.memory_space<vmem>>, vector<1x16x32xf32>
    %c0_9 = arith.constant 0 : index
    %c0_10 = arith.constant 0 : index
    %c0_11 = arith.constant 0 : index
    %6 = vector.load %arg4[%c0_9, %c0_10, %c0_11] : memref<1x8x32xf32, #tpu.memory_space<vmem>>, vector<1x8x32xf32>
    %c0_12 = arith.constant 0 : index
    %c0_13 = arith.constant 0 : index
    %c0_14 = arith.constant 0 : index
    %7 = vector.load %arg6[%c0_12, %c0_13, %c0_14] : memref<1x16x32xf32, #tpu.memory_space<vmem>>, vector<1x16x32xf32>
    %cst = arith.constant dense<0.000000e+00> : vector<1x8xf32>
    %8 = vector.multi_reduction <add>, %3, %cst [2] : vector<1x8x32xf32> to vector<1x8xf32>
    %9 = vector.shape_cast %8 : vector<1x8xf32> to vector<1x8x1xf32>
    %cst_15 = arith.constant 3.200000e+01 : f32
    %10 = vector.broadcast %cst_15 : f32 to vector<1x8x1xf32>
    %11 = arith.divf %9, %10 : vector<1x8x1xf32>
    %12 = vector.broadcast %11 : vector<1x8x1xf32> to vector<1x8x32xf32>
    %13 = arith.subf %3, %12 : vector<1x8x32xf32>
    %14 = arith.mulf %13, %13 : vector<1x8x32xf32>
    %cst_16 = arith.constant dense<0.000000e+00> : vector<1x8xf32>
    %15 = vector.multi_reduction <add>, %14, %cst_16 [2] : vector<1x8x32xf32> to vector<1x8xf32>
    %16 = vector.shape_cast %15 : vector<1x8xf32> to vector<1x8x1xf32>
    %cst_17 = arith.constant 3.200000e+01 : f32
    %17 = vector.broadcast %cst_17 : f32 to vector<1x8x1xf32>
    %18 = arith.divf %16, %17 : vector<1x8x1xf32>
    %19 = vector.broadcast %11 : vector<1x8x1xf32> to vector<1x8x32xf32>
    %20 = arith.subf %3, %19 : vector<1x8x32xf32>
    %cst_18 = arith.constant 9.99999974E-6 : f32
    %21 = vector.broadcast %cst_18 : f32 to vector<1x8x1xf32>
    %22 = arith.addf %18, %21 : vector<1x8x1xf32>
    %23 = math.rsqrt %22 : vector<1x8x1xf32>
    %24 = vector.broadcast %23 : vector<1x8x1xf32> to vector<1x8x32xf32>
    %25 = arith.mulf %20, %24 : vector<1x8x32xf32>
    %c0_19 = arith.constant 0 : index
    %c0_20 = arith.constant 0 : index
    %c0_21 = arith.constant 0 : index
    %26 = vector.load %arg8[%c0_19, %c0_20, %c0_21] : memref<1x1x32xf32, #tpu.memory_space<vmem>>, vector<1x1x32xf32>
    %27 = vector.shape_cast %26 : vector<1x1x32xf32> to vector<1x32xf32>
    %28 = vector.shape_cast %27 : vector<1x32xf32> to vector<1x1x32xf32>
    %29 = vector.broadcast %28 : vector<1x1x32xf32> to vector<1x8x32xf32>
    %30 = arith.mulf %25, %29 : vector<1x8x32xf32>
    %c0_22 = arith.constant 0 : index
    %c0_23 = arith.constant 0 : index
    %c0_24 = arith.constant 0 : index
    %31 = vector.load %arg9[%c0_22, %c0_23, %c0_24] : memref<1x1x32xf32, #tpu.memory_space<vmem>>, vector<1x1x32xf32>
    %32 = vector.shape_cast %31 : vector<1x1x32xf32> to vector<1x32xf32>
    %33 = vector.shape_cast %32 : vector<1x32xf32> to vector<1x1x32xf32>
    %34 = vector.broadcast %33 : vector<1x1x32xf32> to vector<1x8x32xf32>
    %35 = arith.addf %30, %34 : vector<1x8x32xf32>
    %cst_25 = arith.constant dense<0.000000e+00> : vector<1x16xf32>
    %36 = vector.multi_reduction <add>, %5, %cst_25 [2] : vector<1x16x32xf32> to vector<1x16xf32>
    %37 = vector.shape_cast %36 : vector<1x16xf32> to vector<1x16x1xf32>
    %cst_26 = arith.constant 3.200000e+01 : f32
    %38 = vector.broadcast %cst_26 : f32 to vector<1x16x1xf32>
    %39 = arith.divf %37, %38 : vector<1x16x1xf32>
    %40 = vector.broadcast %39 : vector<1x16x1xf32> to vector<1x16x32xf32>
    %41 = arith.subf %5, %40 : vector<1x16x32xf32>
    %42 = arith.mulf %41, %41 : vector<1x16x32xf32>
    %cst_27 = arith.constant dense<0.000000e+00> : vector<1x16xf32>
    %43 = vector.multi_reduction <add>, %42, %cst_27 [2] : vector<1x16x32xf32> to vector<1x16xf32>
    %44 = vector.shape_cast %43 : vector<1x16xf32> to vector<1x16x1xf32>
    %cst_28 = arith.constant 3.200000e+01 : f32
    %45 = vector.broadcast %cst_28 : f32 to vector<1x16x1xf32>
    %46 = arith.divf %44, %45 : vector<1x16x1xf32>
    %47 = vector.broadcast %39 : vector<1x16x1xf32> to vector<1x16x32xf32>
    %48 = arith.subf %5, %47 : vector<1x16x32xf32>
    %cst_29 = arith.constant 9.99999974E-6 : f32
    %49 = vector.broadcast %cst_29 : f32 to vector<1x16x1xf32>
    %50 = arith.addf %46, %49 : vector<1x16x1xf32>
    %51 = math.rsqrt %50 : vector<1x16x1xf32>
    %52 = vector.broadcast %51 : vector<1x16x1xf32> to vector<1x16x32xf32>
    %53 = arith.mulf %48, %52 : vector<1x16x32xf32>
    %c0_30 = arith.constant 0 : index
    %c0_31 = arith.constant 0 : index
    %c0_32 = arith.constant 0 : index
    %54 = vector.load %arg10[%c0_30, %c0_31, %c0_32] : memref<1x1x32xf32, #tpu.memory_space<vmem>>, vector<1x1x32xf32>
    %55 = vector.shape_cast %54 : vector<1x1x32xf32> to vector<1x32xf32>
    %56 = vector.shape_cast %55 : vector<1x32xf32> to vector<1x1x32xf32>
    %57 = vector.broadcast %56 : vector<1x1x32xf32> to vector<1x16x32xf32>
    %58 = arith.mulf %53, %57 : vector<1x16x32xf32>
    %c0_33 = arith.constant 0 : index
    %c0_34 = arith.constant 0 : index
    %c0_35 = arith.constant 0 : index
    %59 = vector.load %arg11[%c0_33, %c0_34, %c0_35] : memref<1x1x32xf32, #tpu.memory_space<vmem>>, vector<1x1x32xf32>
    %60 = vector.shape_cast %59 : vector<1x1x32xf32> to vector<1x32xf32>
    %61 = vector.shape_cast %60 : vector<1x32xf32> to vector<1x1x32xf32>
    %62 = vector.broadcast %61 : vector<1x1x32xf32> to vector<1x16x32xf32>
    %63 = arith.addf %58, %62 : vector<1x16x32xf32>
    %cst_36 = arith.constant dense<0.000000e+00> : vector<1x8xf32>
    %64 = vector.multi_reduction <add>, %4, %cst_36 [2] : vector<1x8x768xf32> to vector<1x8xf32>
    %65 = vector.shape_cast %64 : vector<1x8xf32> to vector<1x8x1xf32>
    %cst_37 = arith.constant 7.680000e+02 : f32
    %66 = vector.broadcast %cst_37 : f32 to vector<1x8x1xf32>
    %67 = arith.divf %65, %66 : vector<1x8x1xf32>
    %68 = vector.broadcast %67 : vector<1x8x1xf32> to vector<1x8x768xf32>
    %69 = arith.subf %4, %68 : vector<1x8x768xf32>
    %70 = arith.mulf %69, %69 : vector<1x8x768xf32>
    %cst_38 = arith.constant dense<0.000000e+00> : vector<1x8xf32>
    %71 = vector.multi_reduction <add>, %70, %cst_38 [2] : vector<1x8x768xf32> to vector<1x8xf32>
    %72 = vector.shape_cast %71 : vector<1x8xf32> to vector<1x8x1xf32>
    %cst_39 = arith.constant 7.680000e+02 : f32
    %73 = vector.broadcast %cst_39 : f32 to vector<1x8x1xf32>
    %74 = arith.divf %72, %73 : vector<1x8x1xf32>
    %75 = vector.broadcast %67 : vector<1x8x1xf32> to vector<1x8x768xf32>
    %76 = arith.subf %4, %75 : vector<1x8x768xf32>
    %cst_40 = arith.constant 9.99999974E-6 : f32
    %77 = vector.broadcast %cst_40 : f32 to vector<1x8x1xf32>
    %78 = arith.addf %74, %77 : vector<1x8x1xf32>
    %79 = math.rsqrt %78 : vector<1x8x1xf32>
    %80 = vector.broadcast %79 : vector<1x8x1xf32> to vector<1x8x768xf32>
    %81 = arith.mulf %76, %80 : vector<1x8x768xf32>
    %c0_41 = arith.constant 0 : index
    %c0_42 = arith.constant 0 : index
    %c0_43 = arith.constant 0 : index
    %82 = vector.load %arg12[%c0_41, %c0_42, %c0_43] : memref<1x1x768xf32, #tpu.memory_space<vmem>>, vector<1x1x768xf32>
    %83 = vector.shape_cast %82 : vector<1x1x768xf32> to vector<1x768xf32>
    %84 = vector.shape_cast %83 : vector<1x768xf32> to vector<1x1x768xf32>
    %85 = vector.broadcast %84 : vector<1x1x768xf32> to vector<1x8x768xf32>
    %86 = arith.mulf %81, %85 : vector<1x8x768xf32>
    %c0_44 = arith.constant 0 : index
    %c0_45 = arith.constant 0 : index
    %c0_46 = arith.constant 0 : index
    %87 = vector.load %arg13[%c0_44, %c0_45, %c0_46] : memref<1x1x768xf32, #tpu.memory_space<vmem>>, vector<1x1x768xf32>
    %88 = vector.shape_cast %87 : vector<1x1x768xf32> to vector<1x768xf32>
    %89 = vector.shape_cast %88 : vector<1x768xf32> to vector<1x1x768xf32>
    %90 = vector.broadcast %89 : vector<1x1x768xf32> to vector<1x8x768xf32>
    %91 = arith.addf %86, %90 : vector<1x8x768xf32>
    %92 = arith.addf %35, %6 : vector<1x8x32xf32>
    %93 = vector.shape_cast %92 : vector<1x8x32xf32> to vector<8x32xf32>
    %94 = arith.addf %63, %7 : vector<1x16x32xf32>
    %95 = vector.shape_cast %94 : vector<1x16x32xf32> to vector<16x32xf32>
    %96 = arith.truncf %93 : vector<8x32xf32> to vector<8x32xbf16>
    %c0_47 = arith.constant 0 : index
    %c0_48 = arith.constant 0 : index
    %c0_49 = arith.constant 0 : index
    %97 = vector.load %arg14[%c0_47, %c0_48, %c0_49] : memref<1x32x64xbf16, #tpu.memory_space<vmem>>, vector<1x32x64xbf16>
    %98 = vector.shape_cast %97 : vector<1x32x64xbf16> to vector<32x64xbf16>
    %cst_50 = arith.constant dense<0.000000e+00> : vector<8x64xf32>
    %99 = tpu.matmul %96, %98, %cst_50 {dimension_numbers = #tpu.dot_dimension_numbers<[1], [0], [0], [1], [0, 0, 1, 1], [], []>} : vector<8x32xbf16>, vector<32x64xbf16>, vector<8x64xf32> -> vector<8x64xf32>
    %c0_51 = arith.constant 0 : index
    %c0_52 = arith.constant 0 : index
    %c0_53 = arith.constant 0 : index
    %100 = vector.load %arg15[%c0_51, %c0_52, %c0_53] : memref<1x1x64xf32, #tpu.memory_space<vmem>>, vector<1x1x64xf32>
    %101 = vector.shape_cast %100 : vector<1x1x64xf32> to vector<1x64xf32>
    %102 = vector.broadcast %101 : vector<1x64xf32> to vector<8x64xf32>
    %103 = arith.addf %99, %102 : vector<8x64xf32>
    %104 = vector.shape_cast %35 : vector<1x8x32xf32> to vector<8x32xf32>
    %105 = arith.truncf %104 : vector<8x32xf32> to vector<8x32xbf16>
    %c0_54 = arith.constant 0 : index
    %c0_55 = arith.constant 0 : index
    %c0_56 = arith.constant 0 : index
    %106 = vector.load %arg16[%c0_54, %c0_55, %c0_56] : memref<1x32x32xbf16, #tpu.memory_space<vmem>>, vector<1x32x32xbf16>
    %107 = vector.shape_cast %106 : vector<1x32x32xbf16> to vector<32x32xbf16>
    %cst_57 = arith.constant dense<0.000000e+00> : vector<8x32xf32>
    %108 = tpu.matmul %105, %107, %cst_57 {dimension_numbers = #tpu.dot_dimension_numbers<[1], [0], [0], [1], [0, 0, 1, 1], [], []>} : vector<8x32xbf16>, vector<32x32xbf16>, vector<8x32xf32> -> vector<8x32xf32>
    %c0_58 = arith.constant 0 : index
    %c0_59 = arith.constant 0 : index
    %c0_60 = arith.constant 0 : index
    %109 = vector.load %arg17[%c0_58, %c0_59, %c0_60] : memref<1x1x32xf32, #tpu.memory_space<vmem>>, vector<1x1x32xf32>
    %110 = vector.shape_cast %109 : vector<1x1x32xf32> to vector<1x32xf32>
    %111 = vector.broadcast %110 : vector<1x32xf32> to vector<8x32xf32>
    %112 = arith.addf %108, %111 : vector<8x32xf32>
    %113 = arith.truncf %95 : vector<16x32xf32> to vector<16x32xbf16>
    %c0_61 = arith.constant 0 : index
    %c0_62 = arith.constant 0 : index
    %c0_63 = arith.constant 0 : index
    %114 = vector.load %arg18[%c0_61, %c0_62, %c0_63] : memref<1x32x64xbf16, #tpu.memory_space<vmem>>, vector<1x32x64xbf16>
    %115 = vector.shape_cast %114 : vector<1x32x64xbf16> to vector<32x64xbf16>
    %cst_64 = arith.constant dense<0.000000e+00> : vector<16x64xf32>
    %116 = tpu.matmul %113, %115, %cst_64 {dimension_numbers = #tpu.dot_dimension_numbers<[1], [0], [0], [1], [0, 0, 1, 1], [], []>} : vector<16x32xbf16>, vector<32x64xbf16>, vector<16x64xf32> -> vector<16x64xf32>
    %c0_65 = arith.constant 0 : index
    %c0_66 = arith.constant 0 : index
    %c0_67 = arith.constant 0 : index
    %117 = vector.load %arg19[%c0_65, %c0_66, %c0_67] : memref<1x1x64xf32, #tpu.memory_space<vmem>>, vector<1x1x64xf32>
    %118 = vector.shape_cast %117 : vector<1x1x64xf32> to vector<1x64xf32>
    %119 = vector.broadcast %118 : vector<1x64xf32> to vector<16x64xf32>
    %120 = arith.addf %116, %119 : vector<16x64xf32>
    %121 = vector.shape_cast %63 : vector<1x16x32xf32> to vector<16x32xf32>
    %122 = arith.truncf %121 : vector<16x32xf32> to vector<16x32xbf16>
    %c0_68 = arith.constant 0 : index
    %c0_69 = arith.constant 0 : index
    %c0_70 = arith.constant 0 : index
    %123 = vector.load %arg20[%c0_68, %c0_69, %c0_70] : memref<1x32x32xbf16, #tpu.memory_space<vmem>>, vector<1x32x32xbf16>
    %124 = vector.shape_cast %123 : vector<1x32x32xbf16> to vector<32x32xbf16>
    %cst_71 = arith.constant dense<0.000000e+00> : vector<16x32xf32>
    %125 = tpu.matmul %122, %124, %cst_71 {dimension_numbers = #tpu.dot_dimension_numbers<[1], [0], [0], [1], [0, 0, 1, 1], [], []>} : vector<16x32xbf16>, vector<32x32xbf16>, vector<16x32xf32> -> vector<16x32xf32>
    %c0_72 = arith.constant 0 : index
    %c0_73 = arith.constant 0 : index
    %c0_74 = arith.constant 0 : index
    %126 = vector.load %arg21[%c0_72, %c0_73, %c0_74] : memref<1x1x32xf32, #tpu.memory_space<vmem>>, vector<1x1x32xf32>
    %127 = vector.shape_cast %126 : vector<1x1x32xf32> to vector<1x32xf32>
    %128 = vector.broadcast %127 : vector<1x32xf32> to vector<16x32xf32>
    %129 = arith.addf %125, %128 : vector<16x32xf32>
    %130 = vector.shape_cast %91 : vector<1x8x768xf32> to vector<8x768xf32>
    %131 = arith.truncf %130 : vector<8x768xf32> to vector<8x768xbf16>
    %c0_75 = arith.constant 0 : index
    %c0_76 = arith.constant 0 : index
    %c0_77 = arith.constant 0 : index
    %132 = vector.load %arg22[%c0_75, %c0_76, %c0_77] : memref<1x768x96xbf16, #tpu.memory_space<vmem>>, vector<1x768x96xbf16>
    %133 = vector.shape_cast %132 : vector<1x768x96xbf16> to vector<768x96xbf16>
    %cst_78 = arith.constant dense<0.000000e+00> : vector<8x96xf32>
    %134 = tpu.matmul %131, %133, %cst_78 {dimension_numbers = #tpu.dot_dimension_numbers<[1], [0], [0], [1], [0, 0, 1, 1], [], []>} : vector<8x768xbf16>, vector<768x96xbf16>, vector<8x96xf32> -> vector<8x96xf32>
    %c0_79 = arith.constant 0 : index
    %c0_80 = arith.constant 0 : index
    %c0_81 = arith.constant 0 : index
    %135 = vector.load %arg23[%c0_79, %c0_80, %c0_81] : memref<1x1x96xf32, #tpu.memory_space<vmem>>, vector<1x1x96xf32>
    %136 = vector.shape_cast %135 : vector<1x1x96xf32> to vector<1x96xf32>
    %137 = vector.broadcast %136 : vector<1x96xf32> to vector<8x96xf32>
    %138 = arith.addf %134, %137 : vector<8x96xf32>
    %139 = vector.extract_strided_slice %103 {offsets = [0, 0], sizes = [8, 32], strides = [1, 1]} : vector<8x64xf32> to vector<8x32xf32>
    %140 = vector.shape_cast %139 : vector<8x32xf32> to vector<1x8x32xf32>
    %c0_82 = arith.constant 0 : index
    %c0_83 = arith.constant 0 : index
    %c0_84 = arith.constant 0 : index
    %141 = vector.load %arg36[%c0_82, %c0_83, %c0_84] : memref<1x32x32xf32, #tpu.memory_space<vmem>>, vector<1x8x32xf32>
    tpu.vector_store %arg36[%c0_82, %c0_83, %c0_84], %140 {strides = array<i32>} : memref<1x32x32xf32, #tpu.memory_space<vmem>>, vector<1x8x32xf32>,
    %142 = vector.extract_strided_slice %103 {offsets = [0, 32], sizes = [8, 32], strides = [1, 1]} : vector<8x64xf32> to vector<8x32xf32>
    %143 = vector.shape_cast %142 : vector<8x32xf32> to vector<1x8x32xf32>
    %c0_85 = arith.constant 0 : index
    %c0_86 = arith.constant 0 : index
    %c0_87 = arith.constant 0 : index
    %144 = vector.load %arg37[%c0_85, %c0_86, %c0_87] : memref<1x32x32xf32, #tpu.memory_space<vmem>>, vector<1x8x32xf32>
    tpu.vector_store %arg37[%c0_85, %c0_86, %c0_87], %143 {strides = array<i32>} : memref<1x32x32xf32, #tpu.memory_space<vmem>>, vector<1x8x32xf32>,
    %145 = vector.shape_cast %112 : vector<8x32xf32> to vector<1x8x32xf32>
    %c0_88 = arith.constant 0 : index
    %c0_89 = arith.constant 0 : index
    %c0_90 = arith.constant 0 : index
    %146 = vector.load %arg38[%c0_88, %c0_89, %c0_90] : memref<1x32x32xf32, #tpu.memory_space<vmem>>, vector<1x8x32xf32>
    tpu.vector_store %arg38[%c0_88, %c0_89, %c0_90], %145 {strides = array<i32>} : memref<1x32x32xf32, #tpu.memory_space<vmem>>, vector<1x8x32xf32>,
    %147 = vector.extract_strided_slice %138 {offsets = [0, 0], sizes = [8, 32], strides = [1, 1]} : vector<8x96xf32> to vector<8x32xf32>
    %148 = vector.shape_cast %147 : vector<8x32xf32> to vector<1x8x32xf32>
    %c0_91 = arith.constant 0 : index
    %c8 = arith.constant 8 : index
    %c0_92 = arith.constant 0 : index
    %149 = vector.load %arg36[%c0_91, %c8, %c0_92] : memref<1x32x32xf32, #tpu.memory_space<vmem>>, vector<1x8x32xf32>
    tpu.vector_store %arg36[%c0_91, %c8, %c0_92], %148 {strides = array<i32>} : memref<1x32x32xf32, #tpu.memory_space<vmem>>, vector<1x8x32xf32>,
    %150 = vector.extract_strided_slice %138 {offsets = [0, 32], sizes = [8, 32], strides = [1, 1]} : vector<8x96xf32> to vector<8x32xf32>
    %151 = vector.shape_cast %150 : vector<8x32xf32> to vector<1x8x32xf32>
    %c0_93 = arith.constant 0 : index
    %c8_94 = arith.constant 8 : index
    %c0_95 = arith.constant 0 : index
    %152 = vector.load %arg37[%c0_93, %c8_94, %c0_95] : memref<1x32x32xf32, #tpu.memory_space<vmem>>, vector<1x8x32xf32>
    tpu.vector_store %arg37[%c0_93, %c8_94, %c0_95], %151 {strides = array<i32>} : memref<1x32x32xf32, #tpu.memory_space<vmem>>, vector<1x8x32xf32>,
    %153 = vector.extract_strided_slice %138 {offsets = [0, 64], sizes = [8, 32], strides = [1, 1]} : vector<8x96xf32> to vector<8x32xf32>
    %154 = vector.shape_cast %153 : vector<8x32xf32> to vector<1x8x32xf32>
    %c0_96 = arith.constant 0 : index
    %c8_97 = arith.constant 8 : index
    %c0_98 = arith.constant 0 : index
    %155 = vector.load %arg38[%c0_96, %c8_97, %c0_98] : memref<1x32x32xf32, #tpu.memory_space<vmem>>, vector<1x8x32xf32>
    tpu.vector_store %arg38[%c0_96, %c8_97, %c0_98], %154 {strides = array<i32>} : memref<1x32x32xf32, #tpu.memory_space<vmem>>, vector<1x8x32xf32>,
    %156 = vector.extract_strided_slice %120 {offsets = [0, 0], sizes = [16, 32], strides = [1, 1]} : vector<16x64xf32> to vector<16x32xf32>
    %157 = vector.shape_cast %156 : vector<16x32xf32> to vector<1x16x32xf32>
    %c0_99 = arith.constant 0 : index
    %c16 = arith.constant 16 : index
    %c0_100 = arith.constant 0 : index
    %158 = vector.load %arg36[%c0_99, %c16, %c0_100] : memref<1x32x32xf32, #tpu.memory_space<vmem>>, vector<1x16x32xf32>
    tpu.vector_store %arg36[%c0_99, %c16, %c0_100], %157 {strides = array<i32>} : memref<1x32x32xf32, #tpu.memory_space<vmem>>, vector<1x16x32xf32>,
    %159 = vector.extract_strided_slice %120 {offsets = [0, 32], sizes = [16, 32], strides = [1, 1]} : vector<16x64xf32> to vector<16x32xf32>
    %160 = vector.shape_cast %159 : vector<16x32xf32> to vector<1x16x32xf32>
    %c0_101 = arith.constant 0 : index
    %c16_102 = arith.constant 16 : index
    %c0_103 = arith.constant 0 : index
    %161 = vector.load %arg37[%c0_101, %c16_102, %c0_103] : memref<1x32x32xf32, #tpu.memory_space<vmem>>, vector<1x16x32xf32>
    tpu.vector_store %arg37[%c0_101, %c16_102, %c0_103], %160 {strides = array<i32>} : memref<1x32x32xf32, #tpu.memory_space<vmem>>, vector<1x16x32xf32>,
    %162 = vector.shape_cast %129 : vector<16x32xf32> to vector<1x16x32xf32>
    %c0_104 = arith.constant 0 : index
    %c16_105 = arith.constant 16 : index
    %c0_106 = arith.constant 0 : index
    %163 = vector.load %arg38[%c0_104, %c16_105, %c0_106] : memref<1x32x32xf32, #tpu.memory_space<vmem>>, vector<1x16x32xf32>
    tpu.vector_store %arg38[%c0_104, %c16_105, %c0_106], %162 {strides = array<i32>} : memref<1x32x32xf32, #tpu.memory_space<vmem>>, vector<1x16x32xf32>,
    %c0_107 = arith.constant 0 : index
    %c0_108 = arith.constant 0 : index
    %c0_109 = arith.constant 0 : index
    %164 = vector.load %arg36[%c0_107, %c0_108, %c0_109] : memref<1x32x32xf32, #tpu.memory_space<vmem>>, vector<1x32x32xf32>
    %c0_110 = arith.constant 0 : index
    %c0_111 = arith.constant 0 : index
    %c0_112 = arith.constant 0 : index
    %165 = vector.load %arg37[%c0_110, %c0_111, %c0_112] : memref<1x32x32xf32, #tpu.memory_space<vmem>>, vector<1x32x32xf32>
    %c0_113 = arith.constant 0 : index
    %c0_114 = arith.constant 0 : index
    %c0_115 = arith.constant 0 : index
    %166 = vector.load %arg38[%c0_113, %c0_114, %c0_115] : memref<1x32x32xf32, #tpu.memory_space<vmem>>, vector<1x32x32xf32>
    %c0_116 = arith.constant 0 : index
    %c0_117 = arith.constant 0 : index
    %c0_118 = arith.constant 0 : index
    %167 = vector.load %arg2[%c0_116, %c0_117, %c0_118] : memref<1x1x32xf32, #tpu.memory_space<vmem>>, vector<1x1x32xf32>
    %168 = vector.shape_cast %167 : vector<1x1x32xf32> to vector<1x1x32xf32>
    %169 = vector.broadcast %168 : vector<1x1x32xf32> to vector<1x32x32xf32>
    %170 = vector.extract_strided_slice %164 {offsets = [0, 0, 0], sizes = [1, 32, 8], strides = [1, 1, 1]} : vector<1x32x32xf32> to vector<1x32x8xf32>
    %171 = vector.extract_strided_slice %165 {offsets = [0, 0, 0], sizes = [1, 32, 8], strides = [1, 1, 1]} : vector<1x32x32xf32> to vector<1x32x8xf32>
    %172 = vector.extract_strided_slice %166 {offsets = [0, 0, 0], sizes = [1, 32, 8], strides = [1, 1, 1]} : vector<1x32x32xf32> to vector<1x32x8xf32>
    %cst_119 = arith.constant dense<0.000000e+00> : vector<1x32x32xf32>
    %173 = tpu.matmul %170, %171, %cst_119 {dimension_numbers = #tpu.dot_dimension_numbers<[2], [2], [1], [1], [0, 0, 0, 1, 1, 1], [0], [0]>} : vector<1x32x8xf32>, vector<1x32x8xf32>, vector<1x32x32xf32> -> vector<1x32x32xf32>
    %174 = arith.addf %173, %169 : vector<1x32x32xf32>
    %cst_120 = arith.constant dense<0xFF800000> : vector<1x32xf32>
    %175 = vector.multi_reduction <maximumf>, %174, %cst_120 [2] : vector<1x32x32xf32> to vector<1x32xf32>
    %176 = vector.shape_cast %175 : vector<1x32xf32> to vector<1x32x1xf32>
    %177 = vector.broadcast %176 : vector<1x32x1xf32> to vector<1x32x32xf32>
    %178 = arith.subf %174, %177 : vector<1x32x32xf32>
    %179 = math.exp %178 : vector<1x32x32xf32>
    %cst_121 = arith.constant dense<0.000000e+00> : vector<1x32xf32>
    %180 = vector.multi_reduction <add>, %179, %cst_121 [2] : vector<1x32x32xf32> to vector<1x32xf32>
    %181 = vector.shape_cast %180 : vector<1x32xf32> to vector<1x32x1xf32>
    %182 = tpu.reciprocal %181 {approx = true} : vector<1x32x1xf32> -> vector<1x32x1xf32>
    %183 = vector.broadcast %182 : vector<1x32x1xf32> to vector<1x32x32xf32>
    %184 = arith.mulf %179, %183 : vector<1x32x32xf32>
    %cst_122 = arith.constant dense<0.000000e+00> : vector<1x32x8xf32>
    %185 = tpu.matmul %184, %172, %cst_122 {dimension_numbers = #tpu.dot_dimension_numbers<[2], [1], [1], [2], [0, 0, 0, 1, 1, 2], [0], [0]>} : vector<1x32x32xf32>, vector<1x32x8xf32>, vector<1x32x8xf32> -> vector<1x32x8xf32>
    %186 = vector.extract_strided_slice %164 {offsets = [0, 0, 8], sizes = [1, 32, 8], strides = [1, 1, 1]} : vector<1x32x32xf32> to vector<1x32x8xf32>
    %187 = vector.extract_strided_slice %165 {offsets = [0, 0, 8], sizes = [1, 32, 8], strides = [1, 1, 1]} : vector<1x32x32xf32> to vector<1x32x8xf32>
    %188 = vector.extract_strided_slice %166 {offsets = [0, 0, 8], sizes = [1, 32, 8], strides = [1, 1, 1]} : vector<1x32x32xf32> to vector<1x32x8xf32>
    %cst_123 = arith.constant dense<0.000000e+00> : vector<1x32x32xf32>
    %189 = tpu.matmul %186, %187, %cst_123 {dimension_numbers = #tpu.dot_dimension_numbers<[2], [2], [1], [1], [0, 0, 0, 1, 1, 1], [0], [0]>} : vector<1x32x8xf32>, vector<1x32x8xf32>, vector<1x32x32xf32> -> vector<1x32x32xf32>
    %190 = arith.addf %189, %169 : vector<1x32x32xf32>
    %cst_124 = arith.constant dense<0xFF800000> : vector<1x32xf32>
    %191 = vector.multi_reduction <maximumf>, %190, %cst_124 [2] : vector<1x32x32xf32> to vector<1x32xf32>
    %192 = vector.shape_cast %191 : vector<1x32xf32> to vector<1x32x1xf32>
    %193 = vector.broadcast %192 : vector<1x32x1xf32> to vector<1x32x32xf32>
    %194 = arith.subf %190, %193 : vector<1x32x32xf32>
    %195 = math.exp %194 : vector<1x32x32xf32>
    %cst_125 = arith.constant dense<0.000000e+00> : vector<1x32xf32>
    %196 = vector.multi_reduction <add>, %195, %cst_125 [2] : vector<1x32x32xf32> to vector<1x32xf32>
    %197 = vector.shape_cast %196 : vector<1x32xf32> to vector<1x32x1xf32>
    %198 = tpu.reciprocal %197 {approx = true} : vector<1x32x1xf32> -> vector<1x32x1xf32>
    %199 = vector.broadcast %198 : vector<1x32x1xf32> to vector<1x32x32xf32>
    %200 = arith.mulf %195, %199 : vector<1x32x32xf32>
    %cst_126 = arith.constant dense<0.000000e+00> : vector<1x32x8xf32>
    %201 = tpu.matmul %200, %188, %cst_126 {dimension_numbers = #tpu.dot_dimension_numbers<[2], [1], [1], [2], [0, 0, 0, 1, 1, 2], [0], [0]>} : vector<1x32x32xf32>, vector<1x32x8xf32>, vector<1x32x8xf32> -> vector<1x32x8xf32>
    %202 = vector.extract_strided_slice %164 {offsets = [0, 0, 16], sizes = [1, 32, 8], strides = [1, 1, 1]} : vector<1x32x32xf32> to vector<1x32x8xf32>
    %203 = vector.extract_strided_slice %165 {offsets = [0, 0, 16], sizes = [1, 32, 8], strides = [1, 1, 1]} : vector<1x32x32xf32> to vector<1x32x8xf32>
    %204 = vector.extract_strided_slice %166 {offsets = [0, 0, 16], sizes = [1, 32, 8], strides = [1, 1, 1]} : vector<1x32x32xf32> to vector<1x32x8xf32>
    %cst_127 = arith.constant dense<0.000000e+00> : vector<1x32x32xf32>
    %205 = tpu.matmul %202, %203, %cst_127 {dimension_numbers = #tpu.dot_dimension_numbers<[2], [2], [1], [1], [0, 0, 0, 1, 1, 1], [0], [0]>} : vector<1x32x8xf32>, vector<1x32x8xf32>, vector<1x32x32xf32> -> vector<1x32x32xf32>
    %206 = arith.addf %205, %169 : vector<1x32x32xf32>
    %cst_128 = arith.constant dense<0xFF800000> : vector<1x32xf32>
    %207 = vector.multi_reduction <maximumf>, %206, %cst_128 [2] : vector<1x32x32xf32> to vector<1x32xf32>
    %208 = vector.shape_cast %207 : vector<1x32xf32> to vector<1x32x1xf32>
    %209 = vector.broadcast %208 : vector<1x32x1xf32> to vector<1x32x32xf32>
    %210 = arith.subf %206, %209 : vector<1x32x32xf32>
    %211 = math.exp %210 : vector<1x32x32xf32>
    %cst_129 = arith.constant dense<0.000000e+00> : vector<1x32xf32>
    %212 = vector.multi_reduction <add>, %211, %cst_129 [2] : vector<1x32x32xf32> to vector<1x32xf32>
    %213 = vector.shape_cast %212 : vector<1x32xf32> to vector<1x32x1xf32>
    %214 = tpu.reciprocal %213 {approx = true} : vector<1x32x1xf32> -> vector<1x32x1xf32>
    %215 = vector.broadcast %214 : vector<1x32x1xf32> to vector<1x32x32xf32>
    %216 = arith.mulf %211, %215 : vector<1x32x32xf32>
    %cst_130 = arith.constant dense<0.000000e+00> : vector<1x32x8xf32>
    %217 = tpu.matmul %216, %204, %cst_130 {dimension_numbers = #tpu.dot_dimension_numbers<[2], [1], [1], [2], [0, 0, 0, 1, 1, 2], [0], [0]>} : vector<1x32x32xf32>, vector<1x32x8xf32>, vector<1x32x8xf32> -> vector<1x32x8xf32>
    %218 = vector.extract_strided_slice %164 {offsets = [0, 0, 24], sizes = [1, 32, 8], strides = [1, 1, 1]} : vector<1x32x32xf32> to vector<1x32x8xf32>
    %219 = vector.extract_strided_slice %165 {offsets = [0, 0, 24], sizes = [1, 32, 8], strides = [1, 1, 1]} : vector<1x32x32xf32> to vector<1x32x8xf32>
    %220 = vector.extract_strided_slice %166 {offsets = [0, 0, 24], sizes = [1, 32, 8], strides = [1, 1, 1]} : vector<1x32x32xf32> to vector<1x32x8xf32>
    %cst_131 = arith.constant dense<0.000000e+00> : vector<1x32x32xf32>
    %221 = tpu.matmul %218, %219, %cst_131 {dimension_numbers = #tpu.dot_dimension_numbers<[2], [2], [1], [1], [0, 0, 0, 1, 1, 1], [0], [0]>} : vector<1x32x8xf32>, vector<1x32x8xf32>, vector<1x32x32xf32> -> vector<1x32x32xf32>
    %222 = arith.addf %221, %169 : vector<1x32x32xf32>
    %cst_132 = arith.constant dense<0xFF800000> : vector<1x32xf32>
    %223 = vector.multi_reduction <maximumf>, %222, %cst_132 [2] : vector<1x32x32xf32> to vector<1x32xf32>
    %224 = vector.shape_cast %223 : vector<1x32xf32> to vector<1x32x1xf32>
    %225 = vector.broadcast %224 : vector<1x32x1xf32> to vector<1x32x32xf32>
    %226 = arith.subf %222, %225 : vector<1x32x32xf32>
    %227 = math.exp %226 : vector<1x32x32xf32>
    %cst_133 = arith.constant dense<0.000000e+00> : vector<1x32xf32>
    %228 = vector.multi_reduction <add>, %227, %cst_133 [2] : vector<1x32x32xf32> to vector<1x32xf32>
    %229 = vector.shape_cast %228 : vector<1x32xf32> to vector<1x32x1xf32>
    %230 = tpu.reciprocal %229 {approx = true} : vector<1x32x1xf32> -> vector<1x32x1xf32>
    %231 = vector.broadcast %230 : vector<1x32x1xf32> to vector<1x32x32xf32>
    %232 = arith.mulf %227, %231 : vector<1x32x32xf32>
    %cst_134 = arith.constant dense<0.000000e+00> : vector<1x32x8xf32>
    %233 = tpu.matmul %232, %220, %cst_134 {dimension_numbers = #tpu.dot_dimension_numbers<[2], [1], [1], [2], [0, 0, 0, 1, 1, 2], [0], [0]>} : vector<1x32x32xf32>, vector<1x32x8xf32>, vector<1x32x8xf32> -> vector<1x32x8xf32>
    %234 = tpu.concatenate %185, %201, %217, %233 in 2 : vector<1x32x8xf32>, vector<1x32x8xf32>, vector<1x32x8xf32>, vector<1x32x8xf32> -> vector<1x32x32xf32>
    %235 = vector.extract_strided_slice %234 {offsets = [0, 0, 0], sizes = [1, 8, 32], strides = [1, 1, 1]} : vector<1x32x32xf32> to vector<1x8x32xf32>
    %236 = vector.shape_cast %235 : vector<1x8x32xf32> to vector<8x32xf32>
    %237 = vector.extract_strided_slice %234 {offsets = [0, 8, 0], sizes = [1, 8, 32], strides = [1, 1, 1]} : vector<1x32x32xf32> to vector<1x8x32xf32>
    %238 = vector.shape_cast %237 : vector<1x8x32xf32> to vector<8x32xf32>
    %239 = vector.extract_strided_slice %234 {offsets = [0, 16, 0], sizes = [1, 16, 32], strides = [1, 1, 1]} : vector<1x32x32xf32> to vector<1x16x32xf32>
    %240 = vector.shape_cast %239 : vector<1x16x32xf32> to vector<16x32xf32>
    %241 = arith.truncf %236 : vector<8x32xf32> to vector<8x32xbf16>
    %c0_135 = arith.constant 0 : index
    %c0_136 = arith.constant 0 : index
    %c0_137 = arith.constant 0 : index
    %242 = vector.load %arg24[%c0_135, %c0_136, %c0_137] : memref<1x32x32xbf16, #tpu.memory_space<vmem>>, vector<1x32x32xbf16>
    %243 = vector.shape_cast %242 : vector<1x32x32xbf16> to vector<32x32xbf16>
    %cst_138 = arith.constant dense<0.000000e+00> : vector<8x32xf32>
    %244 = tpu.matmul %241, %243, %cst_138 {dimension_numbers = #tpu.dot_dimension_numbers<[1], [0], [0], [1], [0, 0, 1, 1], [], []>} : vector<8x32xbf16>, vector<32x32xbf16>, vector<8x32xf32> -> vector<8x32xf32>
    %c0_139 = arith.constant 0 : index
    %c0_140 = arith.constant 0 : index
    %c0_141 = arith.constant 0 : index
    %245 = vector.load %arg25[%c0_139, %c0_140, %c0_141] : memref<1x1x32xf32, #tpu.memory_space<vmem>>, vector<1x1x32xf32>
    %246 = vector.shape_cast %245 : vector<1x1x32xf32> to vector<1x32xf32>
    %247 = vector.broadcast %246 : vector<1x32xf32> to vector<8x32xf32>
    %248 = arith.addf %244, %247 : vector<8x32xf32>
    %249 = vector.shape_cast %248 : vector<8x32xf32> to vector<1x8x32xf32>
    %250 = arith.addf %249, %3 : vector<1x8x32xf32>
    %251 = arith.truncf %238 : vector<8x32xf32> to vector<8x32xbf16>
    %c0_142 = arith.constant 0 : index
    %c0_143 = arith.constant 0 : index
    %c0_144 = arith.constant 0 : index
    %252 = vector.load %arg28[%c0_142, %c0_143, %c0_144] : memref<1x32x768xbf16, #tpu.memory_space<vmem>>, vector<1x32x768xbf16>
    %253 = vector.shape_cast %252 : vector<1x32x768xbf16> to vector<32x768xbf16>
    %cst_145 = arith.constant dense<0.000000e+00> : vector<8x768xf32>
    %254 = tpu.matmul %251, %253, %cst_145 {dimension_numbers = #tpu.dot_dimension_numbers<[1], [0], [0], [1], [0, 0, 1, 1], [], []>} : vector<8x32xbf16>, vector<32x768xbf16>, vector<8x768xf32> -> vector<8x768xf32>
    %c0_146 = arith.constant 0 : index
    %c0_147 = arith.constant 0 : index
    %c0_148 = arith.constant 0 : index
    %255 = vector.load %arg29[%c0_146, %c0_147, %c0_148] : memref<1x1x768xf32, #tpu.memory_space<vmem>>, vector<1x1x768xf32>
    %256 = vector.shape_cast %255 : vector<1x1x768xf32> to vector<1x768xf32>
    %257 = vector.broadcast %256 : vector<1x768xf32> to vector<8x768xf32>
    %258 = arith.addf %254, %257 : vector<8x768xf32>
    %259 = vector.shape_cast %258 : vector<8x768xf32> to vector<1x8x768xf32>
    %260 = arith.addf %259, %4 : vector<1x8x768xf32>
    %261 = arith.truncf %240 : vector<16x32xf32> to vector<16x32xbf16>
    %c0_149 = arith.constant 0 : index
    %c0_150 = arith.constant 0 : index
    %c0_151 = arith.constant 0 : index
    %262 = vector.load %arg26[%c0_149, %c0_150, %c0_151] : memref<1x32x32xbf16, #tpu.memory_space<vmem>>, vector<1x32x32xbf16>
    %263 = vector.shape_cast %262 : vector<1x32x32xbf16> to vector<32x32xbf16>
    %cst_152 = arith.constant dense<0.000000e+00> : vector<16x32xf32>
    %264 = tpu.matmul %261, %263, %cst_152 {dimension_numbers = #tpu.dot_dimension_numbers<[1], [0], [0], [1], [0, 0, 1, 1], [], []>} : vector<16x32xbf16>, vector<32x32xbf16>, vector<16x32xf32> -> vector<16x32xf32>
    %c0_153 = arith.constant 0 : index
    %c0_154 = arith.constant 0 : index
    %c0_155 = arith.constant 0 : index
    %265 = vector.load %arg27[%c0_153, %c0_154, %c0_155] : memref<1x1x32xf32, #tpu.memory_space<vmem>>, vector<1x1x32xf32>
    %266 = vector.shape_cast %265 : vector<1x1x32xf32> to vector<1x32xf32>
    %267 = vector.broadcast %266 : vector<1x32xf32> to vector<16x32xf32>
    %268 = arith.addf %264, %267 : vector<16x32xf32>
    %269 = vector.shape_cast %268 : vector<16x32xf32> to vector<1x16x32xf32>
    %270 = arith.addf %269, %5 : vector<1x16x32xf32>
    %c0_156 = arith.constant 0 : index
    %c0_157 = arith.constant 0 : index
    %c0_158 = arith.constant 0 : index
    %271 = vector.load %arg33[%c0_156, %c0_157, %c0_158] : memref<1x8x32xf32, #tpu.memory_space<vmem>>, vector<1x8x32xf32>
    tpu.vector_store %arg33[%c0_156, %c0_157, %c0_158], %250 {strides = array<i32>} : memref<1x8x32xf32, #tpu.memory_space<vmem>>, vector<1x8x32xf32>,
    %c0_159 = arith.constant 0 : index
    %c0_160 = arith.constant 0 : index
    %c0_161 = arith.constant 0 : index
    %272 = vector.load %arg34[%c0_159, %c0_160, %c0_161] : memref<1x8x768xf32, #tpu.memory_space<vmem>>, vector<1x8x768xf32>
    tpu.vector_store %arg34[%c0_159, %c0_160, %c0_161], %260 {strides = array<i32>} : memref<1x8x768xf32, #tpu.memory_space<vmem>>, vector<1x8x768xf32>,
    %c0_162 = arith.constant 0 : index
    %c0_163 = arith.constant 0 : index
    %c0_164 = arith.constant 0 : index
    %273 = vector.load %arg35[%c0_162, %c0_163, %c0_164] : memref<1x16x32xf32, #tpu.memory_space<vmem>>, vector<1x16x32xf32>
    tpu.vector_store %arg35[%c0_162, %c0_163, %c0_164], %270 {strides = array<i32>} : memref<1x16x32xf32, #tpu.memory_space<vmem>>, vector<1x16x32xf32>,
    %c1_i32 = arith.constant 1 : i32
    %274 = arith.cmpi eq, %arg1, %c1_i32 : i32
    %275 = arith.extui %274 : i1 to i32
    %c0_i32_165 = arith.constant 0 : i32
    %276 = arith.cmpi ne, %275, %c0_i32_165 : i32
    scf.if %276 {
      %c0_166 = arith.constant 0 : index
      %c0_167 = arith.constant 0 : index
      %c0_168 = arith.constant 0 : index
      %277 = vector.load %arg30[%c0_166, %c0_167, %c0_168] : memref<1x8x32xf32, #tpu.memory_space<vmem>>, vector<1x8x32xf32>
      tpu.vector_store %arg30[%c0_166, %c0_167, %c0_168], %250 {strides = array<i32>} : memref<1x8x32xf32, #tpu.memory_space<vmem>>, vector<1x8x32xf32>,
      %c0_169 = arith.constant 0 : index
      %c0_170 = arith.constant 0 : index
      %c0_171 = arith.constant 0 : index
      %278 = vector.load %arg31[%c0_169, %c0_170, %c0_171] : memref<1x8x768xf32, #tpu.memory_space<vmem>>, vector<1x8x768xf32>
      tpu.vector_store %arg31[%c0_169, %c0_170, %c0_171], %260 {strides = array<i32>} : memref<1x8x768xf32, #tpu.memory_space<vmem>>, vector<1x8x768xf32>,
      %c0_172 = arith.constant 0 : index
      %c0_173 = arith.constant 0 : index
      %c0_174 = arith.constant 0 : index
      %279 = vector.load %arg32[%c0_172, %c0_173, %c0_174] : memref<1x16x32xf32, #tpu.memory_space<vmem>>, vector<1x16x32xf32>
      tpu.vector_store %arg32[%c0_172, %c0_173, %c0_174], %270 {strides = array<i32>} : memref<1x16x32xf32, #tpu.memory_space<vmem>>, vector<1x16x32xf32>,
    } else {
    }
    return
  }
  func.func @transform_0(%arg0: i32, %arg1: i32) -> (i32, i32, i32) {
    %c0_i32 = arith.constant 0 : i32
    %c0_i32_0 = arith.constant 0 : i32
    %c0_i32_1 = arith.constant 0 : i32
    return %arg0, %c0_i32, %c0_i32_0 : i32, i32, i32
  }
  func.func @transform_1(%arg0: i32, %arg1: i32) -> (i32, i32, i32) {
    %c0_i32 = arith.constant 0 : i32
    %c0_i32_0 = arith.constant 0 : i32
    %c0_i32_1 = arith.constant 0 : i32
    return %arg0, %c0_i32, %c0_i32_0 : i32, i32, i32
  }
  func.func @transform_2(%arg0: i32, %arg1: i32) -> (i32, i32, i32) {
    %c0_i32 = arith.constant 0 : i32
    %c0_i32_0 = arith.constant 0 : i32
    %c0_i32_1 = arith.constant 0 : i32
    return %arg0, %c0_i32, %c0_i32_0 : i32, i32, i32
  }
  func.func @transform_3(%arg0: i32, %arg1: i32) -> (i32, i32, i32) {
    %c0_i32 = arith.constant 0 : i32
    %c0_i32_0 = arith.constant 0 : i32
    %c0_i32_1 = arith.constant 0 : i32
    return %arg0, %c0_i32, %c0_i32_0 : i32, i32, i32
  }
  func.func @transform_4(%arg0: i32, %arg1: i32) -> (i32, i32, i32) {
    %c0_i32 = arith.constant 0 : i32
    %c0_i32_0 = arith.constant 0 : i32
    %c0_i32_1 = arith.constant 0 : i32
    return %arg0, %c0_i32, %c0_i32_0 : i32, i32, i32
  }
  func.func @transform_5(%arg0: i32, %arg1: i32) -> (i32, i32, i32) {
    %c0_i32 = arith.constant 0 : i32
    %c0_i32_0 = arith.constant 0 : i32
    %c0_i32_1 = arith.constant 0 : i32
    return %arg0, %c0_i32, %c0_i32_0 : i32, i32, i32
  }
  func.func @transform_6(%arg0: i32, %arg1: i32) -> (i32, i32, i32) {
    %c0_i32 = arith.constant 0 : i32
    %c0_i32_0 = arith.constant 0 : i32
    %c0_i32_1 = arith.constant 0 : i32
    return %arg1, %c0_i32, %c0_i32_0 : i32, i32, i32
  }
  func.func @transform_7(%arg0: i32, %arg1: i32) -> (i32, i32, i32) {
    %c0_i32 = arith.constant 0 : i32
    %c0_i32_0 = arith.constant 0 : i32
    %c0_i32_1 = arith.constant 0 : i32
    return %arg1, %c0_i32, %c0_i32_0 : i32, i32, i32
  }
  func.func @transform_8(%arg0: i32, %arg1: i32) -> (i32, i32, i32) {
    %c0_i32 = arith.constant 0 : i32
    %c0_i32_0 = arith.constant 0 : i32
    %c0_i32_1 = arith.constant 0 : i32
    return %arg1, %c0_i32, %c0_i32_0 : i32, i32, i32
  }
  func.func @transform_9(%arg0: i32, %arg1: i32) -> (i32, i32, i32) {
    %c0_i32 = arith.constant 0 : i32
    %c0_i32_0 = arith.constant 0 : i32
    %c0_i32_1 = arith.constant 0 : i32
    return %arg1, %c0_i32, %c0_i32_0 : i32, i32, i32
  }
  func.func @transform_10(%arg0: i32, %arg1: i32) -> (i32, i32, i32) {
    %c0_i32 = arith.constant 0 : i32
    %c0_i32_0 = arith.constant 0 : i32
    %c0_i32_1 = arith.constant 0 : i32
    return %arg1, %c0_i32, %c0_i32_0 : i32, i32, i32
  }
  func.func @transform_11(%arg0: i32, %arg1: i32) -> (i32, i32, i32) {
    %c0_i32 = arith.constant 0 : i32
    %c0_i32_0 = arith.constant 0 : i32
    %c0_i32_1 = arith.constant 0 : i32
    return %arg1, %c0_i32, %c0_i32_0 : i32, i32, i32
  }
  func.func @transform_12(%arg0: i32, %arg1: i32) -> (i32, i32, i32) {
    %c0_i32 = arith.constant 0 : i32
    %c0_i32_0 = arith.constant 0 : i32
    %c0_i32_1 = arith.constant 0 : i32
    return %arg1, %c0_i32, %c0_i32_0 : i32, i32, i32
  }
  func.func @transform_13(%arg0: i32, %arg1: i32) -> (i32, i32, i32) {
    %c0_i32 = arith.constant 0 : i32
    %c0_i32_0 = arith.constant 0 : i32
    %c0_i32_1 = arith.constant 0 : i32
    return %arg1, %c0_i32, %c0_i32_0 : i32, i32, i32
  }
  func.func @transform_14(%arg0: i32, %arg1: i32) -> (i32, i32, i32) {
    %c0_i32 = arith.constant 0 : i32
    %c0_i32_0 = arith.constant 0 : i32
    %c0_i32_1 = arith.constant 0 : i32
    return %arg1, %c0_i32, %c0_i32_0 : i32, i32, i32
  }
  func.func @transform_15(%arg0: i32, %arg1: i32) -> (i32, i32, i32) {
    %c0_i32 = arith.constant 0 : i32
    %c0_i32_0 = arith.constant 0 : i32
    %c0_i32_1 = arith.constant 0 : i32
    return %arg1, %c0_i32, %c0_i32_0 : i32, i32, i32
  }
  func.func @transform_16(%arg0: i32, %arg1: i32) -> (i32, i32, i32) {
    %c0_i32 = arith.constant 0 : i32
    %c0_i32_0 = arith.constant 0 : i32
    %c0_i32_1 = arith.constant 0 : i32
    return %arg1, %c0_i32, %c0_i32_0 : i32, i32, i32
  }
  func.func @transform_17(%arg0: i32, %arg1: i32) -> (i32, i32, i32) {
    %c0_i32 = arith.constant 0 : i32
    %c0_i32_0 = arith.constant 0 : i32
    %c0_i32_1 = arith.constant 0 : i32
    return %arg1, %c0_i32, %c0_i32_0 : i32, i32, i32
  }
  func.func @transform_18(%arg0: i32, %arg1: i32) -> (i32, i32, i32) {
    %c0_i32 = arith.constant 0 : i32
    %c0_i32_0 = arith.constant 0 : i32
    %c0_i32_1 = arith.constant 0 : i32
    return %arg1, %c0_i32, %c0_i32_0 : i32, i32, i32
  }
  func.func @transform_19(%arg0: i32, %arg1: i32) -> (i32, i32, i32) {
    %c0_i32 = arith.constant 0 : i32
    %c0_i32_0 = arith.constant 0 : i32
    %c0_i32_1 = arith.constant 0 : i32
    return %arg1, %c0_i32, %c0_i32_0 : i32, i32, i32
  }
  func.func @transform_20(%arg0: i32, %arg1: i32) -> (i32, i32, i32) {
    %c0_i32 = arith.constant 0 : i32
    %c0_i32_0 = arith.constant 0 : i32
    %c0_i32_1 = arith.constant 0 : i32
    return %arg1, %c0_i32, %c0_i32_0 : i32, i32, i32
  }
  func.func @transform_21(%arg0: i32, %arg1: i32) -> (i32, i32, i32) {
    %c0_i32 = arith.constant 0 : i32
    %c0_i32_0 = arith.constant 0 : i32
    %c0_i32_1 = arith.constant 0 : i32
    return %arg1, %c0_i32, %c0_i32_0 : i32, i32, i32
  }
  func.func @transform_22(%arg0: i32, %arg1: i32) -> (i32, i32, i32) {
    %c0_i32 = arith.constant 0 : i32
    %c0_i32_0 = arith.constant 0 : i32
    %c0_i32_1 = arith.constant 0 : i32
    return %arg1, %c0_i32, %c0_i32_0 : i32, i32, i32
  }
  func.func @transform_23(%arg0: i32, %arg1: i32) -> (i32, i32, i32) {
    %c0_i32 = arith.constant 0 : i32
    %c0_i32_0 = arith.constant 0 : i32
    %c0_i32_1 = arith.constant 0 : i32
    return %arg1, %c0_i32, %c0_i32_0 : i32, i32, i32
  }
  func.func @transform_24(%arg0: i32, %arg1: i32) -> (i32, i32, i32) {
    %c0_i32 = arith.constant 0 : i32
    %c0_i32_0 = arith.constant 0 : i32
    %c0_i32_1 = arith.constant 0 : i32
    return %arg1, %c0_i32, %c0_i32_0 : i32, i32, i32
  }
  func.func @transform_25(%arg0: i32, %arg1: i32) -> (i32, i32, i32) {
    %c0_i32 = arith.constant 0 : i32
    %c0_i32_0 = arith.constant 0 : i32
    %c0_i32_1 = arith.constant 0 : i32
    return %arg1, %c0_i32, %c0_i32_0 : i32, i32, i32
  }
  func.func @transform_26(%arg0: i32, %arg1: i32) -> (i32, i32, i32) {
    %c0_i32 = arith.constant 0 : i32
    %c0_i32_0 = arith.constant 0 : i32
    %c0_i32_1 = arith.constant 0 : i32
    return %arg1, %c0_i32, %c0_i32_0 : i32, i32, i32
  }
  func.func @transform_27(%arg0: i32, %arg1: i32) -> (i32, i32, i32) {
    %c0_i32 = arith.constant 0 : i32
    %c0_i32_0 = arith.constant 0 : i32
    %c0_i32_1 = arith.constant 0 : i32
    return %arg1, %c0_i32, %c0_i32_0 : i32, i32, i32
  }
  func.func @transform_28(%arg0: i32, %arg1: i32) -> (i32, i32, i32) {
    %c0_i32 = arith.constant 0 : i32
    %c0_i32_0 = arith.constant 0 : i32
    %c0_i32_1 = arith.constant 0 : i32
    return %arg0, %c0_i32, %c0_i32_0 : i32, i32, i32
  }
  func.func @transform_29(%arg0: i32, %arg1: i32) -> (i32, i32, i32) {
    %c0_i32 = arith.constant 0 : i32
    %c0_i32_0 = arith.constant 0 : i32
    %c0_i32_1 = arith.constant 0 : i32
    return %arg0, %c0_i32, %c0_i32_0 : i32, i32, i32
  }
  func.func @transform_30(%arg0: i32, %arg1: i32) -> (i32, i32, i32) {
    %c0_i32 = arith.constant 0 : i32
    %c0_i32_0 = arith.constant 0 : i32
    %c0_i32_1 = arith.constant 0 : i32
    return %arg0, %c0_i32, %c0_i32_0 : i32, i32, i32
  }
}

</mosaic_0001>

<llo_original>
// kernel: run.1
$region0: #{run.1}
  #allocation0 [shape = 'u32[]', space=smem, size = 0x4, offset = 0x4, fixed_abs, tag = 'smem constant byte address 0x4 - core index']
  #allocation1 [shape = 'u32[72,128]{1,0:T(1,128)}', space=vmem, size = 0x9000, scoped, tag = 'internal scratch']
  #allocation2 [shape = 'f32[1,8,32]{2,1,0:T(8,128)}', space=vmem, size = 0x1000, scoped, tag = 'scratch operand']
  #allocation3 [shape = 'f32[1,8,768]{2,1,0:T(8,128)}', space=vmem, size = 0x6000, scoped, tag = 'scratch operand']
  #allocation4 [shape = 'f32[1,16,32]{2,1,0:T(8,128)}', space=vmem, size = 0x2000, scoped, tag = 'scratch operand']
  #allocation5 [shape = 'f32[1,32,32]{2,1,0:T(8,128)}', space=vmem, size = 0x4000, scoped, tag = 'scratch operand']
  #allocation6 [shape = 'f32[1,32,32]{2,1,0:T(8,128)}', space=vmem, size = 0x4000, scoped, tag = 'scratch operand']
  #allocation7 [shape = 'f32[1,32,32]{2,1,0:T(8,128)}', space=vmem, size = 0x4000, scoped, tag = 'scratch operand']
  %s0 = inlined_call_operand.smem [shape: u32[31], index: -1, kind: input, shape index: {}]
  %s1 = sld [smem:[%s0]]
  %s2 = scalar_lea.smem %s0, 1
  %s3 = sld [smem:[%s2]]
  %s4 = scalar_lea.smem %s0, 2
  %s5 = sld [smem:[%s4]]
  %s6 = scalar_lea.smem %s0, 3
  %s7 = sld [smem:[%s6]]
  %s8 = scalar_lea.smem %s0, 4
  %s9 = sld [smem:[%s8]]
  %s10 = scalar_lea.smem %s0, 5
  %s11 = sld [smem:[%s10]]
  %s12 = scalar_lea.smem %s0, 6
  %s13 = sld [smem:[%s12]]
  %s14 = scalar_lea.smem %s0, 7
  %s15 = sld [smem:[%s14]]
  %s16 = scalar_lea.smem %s0, 8
  %s17 = sld [smem:[%s16]]
  %s18 = scalar_lea.smem %s0, 9
  %s19 = sld [smem:[%s18]]
  %s20 = scalar_lea.smem %s0, 10
  %s21 = sld [smem:[%s20]]
  %s22 = scalar_lea.smem %s0, 11
  %s23 = sld [smem:[%s22]]
  %s24 = scalar_lea.smem %s0, 12
  %s25 = sld [smem:[%s24]]
  %s26 = scalar_lea.smem %s0, 13
  %s27 = sld [smem:[%s26]]
  %s28 = scalar_lea.smem %s0, 14
  %s29 = sld [smem:[%s28]]
  %s30 = scalar_lea.smem %s0, 15
  %s31 = sld [smem:[%s30]]
  %s32 = scalar_lea.smem %s0, 16
  %s33 = sld [smem:[%s32]]
  %s34 = scalar_lea.smem %s0, 17
  %s35 = sld [smem:[%s34]]
  %s36 = scalar_lea.smem %s0, 18
  %s37 = sld [smem:[%s36]]
  %s38 = scalar_lea.smem %s0, 19
  %s39 = sld [smem:[%s38]]
  %s40 = scalar_lea.smem %s0, 20
  %s41 = sld [smem:[%s40]]
  %s42 = scalar_lea.smem %s0, 21
  %s43 = sld [smem:[%s42]]
  %s44 = scalar_lea.smem %s0, 22
  %s45 = sld [smem:[%s44]]
  %s46 = scalar_lea.smem %s0, 23
  %s47 = sld [smem:[%s46]]
  %s48 = scalar_lea.smem %s0, 24
  %s49 = sld [smem:[%s48]]
  %s50 = scalar_lea.smem %s0, 25
  %s51 = sld [smem:[%s50]]
  %s52 = scalar_lea.smem %s0, 26
  %s53 = sld [smem:[%s52]]
  %s54 = scalar_lea.smem %s0, 27
  %s55 = sld [smem:[%s54]]
  %s56 = scalar_lea.smem %s0, 28
  %s57 = sld [smem:[%s56]]
  %s58 = scalar_lea.smem %s0, 29
  %s59 = sld [smem:[%s58]]
  %s60 = scalar_lea.smem %s0, 30
  %s61 = sld [smem:[%s60]]
  %62 = xla_tuple %s57, %s59, %s61
  %s63 = sld [smem:[#allocation0]]
  $region169: #{run.1} parent=0
    _
  %s65 = ssub.s32 1, %s63
  %s66 = scalar_select 0, %s65, %s63
  loop: start=0, step=1, limit=6
  $region2: #{run.1} parent=0 // loop_pre_header
    _
  $region3: #{run.1} parent=0 // loop_header
    %s68 = sphi 0, %s72
    %p69 = scmp.ge.s32.totalorder %s68, 6
    %s75 = sphi 0, %s87
    %s76 = sphi 0, %s83
    %s77 = sphi 0, %s75
    %s78 = sphi 0, %s76
    %s79 = sphi 0, %s77
    %s80 = sphi 0, %s78
    %s90 = sphi 0, %s92
    %s93 = sphi 0, %s90
    %s94 = sphi 0, %s93
    %s110 = sphi 0, %s94
    %s116 = sphi 0, %s118
    %s119 = sphi 0, %s116
    %s120 = sphi 0, %s119
    %s136 = sphi 0, %s120
    %s142 = sphi 0, %s144
    %s145 = sphi 0, %s142
    %s146 = sphi 0, %s145
    %s162 = sphi 0, %s146
    %s168 = sphi 0, %s170
    %s171 = sphi 0, %s168
    %s172 = sphi 0, %s171
    %s188 = sphi 0, %s172
    %s194 = sphi 0, %s196
    %s197 = sphi 0, %s194
    %s198 = sphi 0, %s197
    %s214 = sphi 0, %s198
    %s220 = sphi 0, %s222
    %s223 = sphi 0, %s220
    %s224 = sphi 0, %s223
    %s240 = sphi 0, %s224
    %s246 = sphi 0, %s248
    %s249 = sphi 0, %s246
    %s250 = sphi 0, %s249
    %s266 = sphi 0, %s250
    %s272 = sphi 0, %s274
    %s275 = sphi 0, %s272
    %s276 = sphi 0, %s275
    %s292 = sphi 0, %s276
    %s298 = sphi 0, %s300
    %s301 = sphi 0, %s298
    %s302 = sphi 0, %s301
    %s318 = sphi 0, %s302
    %s324 = sphi 0, %s326
    %s327 = sphi 0, %s324
    %s328 = sphi 0, %s327
    %s344 = sphi 0, %s328
    %s350 = sphi 0, %s352
    %s353 = sphi 0, %s350
    %s354 = sphi 0, %s353
    %s370 = sphi 0, %s354
    %s376 = sphi 0, %s378
    %s379 = sphi 0, %s376
    %s380 = sphi 0, %s379
    %s396 = sphi 0, %s380
    %s402 = sphi 0, %s404
    %s405 = sphi 0, %s402
    %s406 = sphi 0, %s405
    %s422 = sphi 0, %s406
    %s428 = sphi 0, %s430
    %s431 = sphi 0, %s428
    %s432 = sphi 0, %s431
    %s448 = sphi 0, %s432
    %s454 = sphi 0, %s456
    %s457 = sphi 0, %s454
    %s458 = sphi 0, %s457
    %s474 = sphi 0, %s458
    %s480 = sphi 0, %s482
    %s483 = sphi 0, %s480
    %s484 = sphi 0, %s483
    %s500 = sphi 0, %s484
    %s506 = sphi 0, %s508
    %s509 = sphi 0, %s506
    %s510 = sphi 0, %s509
    %s526 = sphi 0, %s510
    %s532 = sphi 0, %s534
    %s535 = sphi 0, %s532
    %s536 = sphi 0, %s535
    %s552 = sphi 0, %s536
    %s558 = sphi 0, %s560
    %s561 = sphi 0, %s558
    %s562 = sphi 0, %s561
    %s578 = sphi 0, %s562
    %s584 = sphi 0, %s586
    %s587 = sphi 0, %s584
    %s588 = sphi 0, %s587
    %s604 = sphi 0, %s588
    %s610 = sphi 0, %s612
    %s613 = sphi 0, %s610
    %s614 = sphi 0, %s613
    %s630 = sphi 0, %s614
    %s636 = sphi 0, %s638
    %s639 = sphi 0, %s636
    %s640 = sphi 0, %s639
    %s656 = sphi 0, %s640
    %s662 = sphi 0, %s664
    %s665 = sphi 0, %s662
    %s666 = sphi 0, %s665
    %s682 = sphi 0, %s666
    %s688 = sphi 0, %s690
    %s691 = sphi 0, %s688
    %s692 = sphi 0, %s691
    %s708 = sphi 0, %s692
    %s714 = sphi 0, %s716
    %s717 = sphi 0, %s714
    %s718 = sphi 0, %s717
    %s734 = sphi 0, %s718
    %s740 = sphi 0, %s742
    %s743 = sphi 0, %s740
    %s744 = sphi 0, %s743
    %s760 = sphi 0, %s744
    %s766 = sphi 0, %s768
    %s769 = sphi 0, %s766
    %s770 = sphi 0, %s769
    %s786 = sphi 0, %s770
    %s792 = sphi 0, %s794
    %s795 = sphi 0, %s792
    %s796 = sphi 0, %s795
    %s812 = sphi 0, %s796
    %s818 = sphi 0, %s820
    %s821 = sphi 0, %s818
    %s822 = sphi 0, %s821
    %s838 = sphi 0, %s822
    %s844 = sphi 0, %s846
    %s847 = sphi 0, %s844
    %s848 = sphi 0, %s847
    %s864 = sphi 0, %s848
    %s870 = sphi 0, %s872
    %s873 = sphi 0, %s870
    %s874 = sphi 0, %s873
    %s890 = sphi 0, %s874
  $region4: #{run.1} parent=0 // loop_header_branch
    %71 = sbr.rel (%p69) target = $region8
  $region5: #{run.1} parent=0 // loop_body
    %s73 = ssub.s32 %s68, 1
    %s74 = ssub.s32 %s68, 2
    %s81 = sadd.s32 1, %s76
    %p82 = scmp.ge.s32.totalorder %s81, 2
    %s83 = scalar_select %p82, 0, %s81
    %s84 = sadd.s32 1, %s75
    %s85 = scalar_select %p82, %s84, %s75
    %p86 = scmp.ge.s32.totalorder %s85, 2
    %s87 = scalar_select %p86, 0, %s85
    %s88 = ssub.s32 %s75, %s87
    %p89 = scmp.eq.s32.totalorder %s88, 0
    %s91 = sadd.s32 %s90, 1
    %s92 = scalar_select %p89, %s90, %s91
    %p95 = pneg %p89
    %p96 = scmp.eq.s32.totalorder %s68, 3
    %p97 = por %p95, %p96
    %p98 = scmp.ne.s32.totalorder %s90, %s93
    %p99 = scmp.eq.s32.totalorder %s68, 0
    %p100 = por %p98, %p99
    %p101 = scmp.ne.s32.totalorder %s90, %s93
    %p102 = scmp.eq.s32.totalorder %s73, 3
    %p103 = por %p101, %p102
    %p104 = scmp.ne.s32.totalorder %s93, %s94
    %p105 = scmp.eq.s32.totalorder %s73, 0
    %p106 = por %p104, %p105
    %p107 = scmp.ne.s32.totalorder %s93, %s94
    %p108 = scmp.eq.s32.totalorder %s74, 3
    %p109 = por %p107, %p108
    %p111 = scmp.ne.s32.totalorder %s94, %s110
    %p112 = scmp.eq.s32.totalorder %s74, 0
    %p113 = por %p111, %p112
    %s114 = ssub.s32 %s75, %s87
    %p115 = scmp.eq.s32.totalorder %s114, 0
    %s117 = sadd.s32 %s116, 1
    %s118 = scalar_select %p115, %s116, %s117
    %p121 = pneg %p115
    %p122 = scmp.eq.s32.totalorder %s68, 3
    %p123 = por %p121, %p122
    %p124 = scmp.ne.s32.totalorder %s116, %s119
    %p125 = scmp.eq.s32.totalorder %s68, 0
    %p126 = por %p124, %p125
    %p127 = scmp.ne.s32.totalorder %s116, %s119
    %p128 = scmp.eq.s32.totalorder %s73, 3
    %p129 = por %p127, %p128
    %p130 = scmp.ne.s32.totalorder %s119, %s120
    %p131 = scmp.eq.s32.totalorder %s73, 0
    %p132 = por %p130, %p131
    %p133 = scmp.ne.s32.totalorder %s119, %s120
    %p134 = scmp.eq.s32.totalorder %s74, 3
    %p135 = por %p133, %p134
    %p137 = scmp.ne.s32.totalorder %s120, %s136
    %p138 = scmp.eq.s32.totalorder %s74, 0
    %p139 = por %p137, %p138
    %s140 = ssub.s32 %s75, %s87
    %p141 = scmp.eq.s32.totalorder %s140, 0
    %s143 = sadd.s32 %s142, 1
    %s144 = scalar_select %p141, %s142, %s143
    %p147 = pneg %p141
    %p148 = scmp.eq.s32.totalorder %s68, 3
    %p149 = por %p147, %p148
    %p150 = scmp.ne.s32.totalorder %s142, %s145
    %p151 = scmp.eq.s32.totalorder %s68, 0
    %p152 = por %p150, %p151
    %p153 = scmp.ne.s32.totalorder %s142, %s145
    %p154 = scmp.eq.s32.totalorder %s73, 3
    %p155 = por %p153, %p154
    %p156 = scmp.ne.s32.totalorder %s145, %s146
    %p157 = scmp.eq.s32.totalorder %s73, 0
    %p158 = por %p156, %p157
    %p159 = scmp.ne.s32.totalorder %s145, %s146
    %p160 = scmp.eq.s32.totalorder %s74, 3
    %p161 = por %p159, %p160
    %p163 = scmp.ne.s32.totalorder %s146, %s162
    %p164 = scmp.eq.s32.totalorder %s74, 0
    %p165 = por %p163, %p164
    %s166 = ssub.s32 %s75, %s87
    %p167 = scmp.eq.s32.totalorder %s166, 0
    %s169 = sadd.s32 %s168, 1
    %s170 = scalar_select %p167, %s168, %s169
    %p173 = pneg %p167
    %p174 = scmp.eq.s32.totalorder %s68, 3
    %p175 = por %p173, %p174
    %p176 = scmp.ne.s32.totalorder %s168, %s171
    %p177 = scmp.eq.s32.totalorder %s68, 0
    %p178 = por %p176, %p177
    %p179 = scmp.ne.s32.totalorder %s168, %s171
    %p180 = scmp.eq.s32.totalorder %s73, 3
    %p181 = por %p179, %p180
    %p182 = scmp.ne.s32.totalorder %s171, %s172
    %p183 = scmp.eq.s32.totalorder %s73, 0
    %p184 = por %p182, %p183
    %p185 = scmp.ne.s32.totalorder %s171, %s172
    %p186 = scmp.eq.s32.totalorder %s74, 3
    %p187 = por %p185, %p186
    %p189 = scmp.ne.s32.totalorder %s172, %s188
    %p190 = scmp.eq.s32.totalorder %s74, 0
    %p191 = por %p189, %p190
    %s192 = ssub.s32 %s75, %s87
    %p193 = scmp.eq.s32.totalorder %s192, 0
    %s195 = sadd.s32 %s194, 1
    %s196 = scalar_select %p193, %s194, %s195
    %p199 = pneg %p193
    %p200 = scmp.eq.s32.totalorder %s68, 3
    %p201 = por %p199, %p200
    %p202 = scmp.ne.s32.totalorder %s194, %s197
    %p203 = scmp.eq.s32.totalorder %s68, 0
    %p204 = por %p202, %p203
    %p205 = scmp.ne.s32.totalorder %s194, %s197
    %p206 = scmp.eq.s32.totalorder %s73, 3
    %p207 = por %p205, %p206
    %p208 = scmp.ne.s32.totalorder %s197, %s198
    %p209 = scmp.eq.s32.totalorder %s73, 0
    %p210 = por %p208, %p209
    %p211 = scmp.ne.s32.totalorder %s197, %s198
    %p212 = scmp.eq.s32.totalorder %s74, 3
    %p213 = por %p211, %p212
    %p215 = scmp.ne.s32.totalorder %s198, %s214
    %p216 = scmp.eq.s32.totalorder %s74, 0
    %p217 = por %p215, %p216
    %s218 = ssub.s32 %s75, %s87
    %p219 = scmp.eq.s32.totalorder %s218, 0
    %s221 = sadd.s32 %s220, 1
    %s222 = scalar_select %p219, %s220, %s221
    %p225 = pneg %p219
    %p226 = scmp.eq.s32.totalorder %s68, 3
    %p227 = por %p225, %p226
    %p228 = scmp.ne.s32.totalorder %s220, %s223
    %p229 = scmp.eq.s32.totalorder %s68, 0
    %p230 = por %p228, %p229
    %p231 = scmp.ne.s32.totalorder %s220, %s223
    %p232 = scmp.eq.s32.totalorder %s73, 3
    %p233 = por %p231, %p232
    %p234 = scmp.ne.s32.totalorder %s223, %s224
    %p235 = scmp.eq.s32.totalorder %s73, 0
    %p236 = por %p234, %p235
    %p237 = scmp.ne.s32.totalorder %s223, %s224
    %p238 = scmp.eq.s32.totalorder %s74, 3
    %p239 = por %p237, %p238
    %p241 = scmp.ne.s32.totalorder %s224, %s240
    %p242 = scmp.eq.s32.totalorder %s74, 0
    %p243 = por %p241, %p242
    %s244 = ssub.s32 %s76, %s83
    %p245 = scmp.eq.s32.totalorder %s244, 0
    %s247 = sadd.s32 %s246, 1
    %s248 = scalar_select %p245, %s246, %s247
    %p251 = pneg %p245
    %p252 = scmp.eq.s32.totalorder %s68, 3
    %p253 = por %p251, %p252
    %p254 = scmp.ne.s32.totalorder %s246, %s249
    %p255 = scmp.eq.s32.totalorder %s68, 0
    %p256 = por %p254, %p255
    %p257 = scmp.ne.s32.totalorder %s246, %s249
    %p258 = scmp.eq.s32.totalorder %s73, 3
    %p259 = por %p257, %p258
    %p260 = scmp.ne.s32.totalorder %s249, %s250
    %p261 = scmp.eq.s32.totalorder %s73, 0
    %p262 = por %p260, %p261
    %p263 = scmp.ne.s32.totalorder %s249, %s250
    %p264 = scmp.eq.s32.totalorder %s74, 3
    %p265 = por %p263, %p264
    %p267 = scmp.ne.s32.totalorder %s250, %s266
    %p268 = scmp.eq.s32.totalorder %s74, 0
    %p269 = por %p267, %p268
    %s270 = ssub.s32 %s76, %s83
    %p271 = scmp.eq.s32.totalorder %s270, 0
    %s273 = sadd.s32 %s272, 1
    %s274 = scalar_select %p271, %s272, %s273
    %p277 = pneg %p271
    %p278 = scmp.eq.s32.totalorder %s68, 3
    %p279 = por %p277, %p278
    %p280 = scmp.ne.s32.totalorder %s272, %s275
    %p281 = scmp.eq.s32.totalorder %s68, 0
    %p282 = por %p280, %p281
    %p283 = scmp.ne.s32.totalorder %s272, %s275
    %p284 = scmp.eq.s32.totalorder %s73, 3
    %p285 = por %p283, %p284
    %p286 = scmp.ne.s32.totalorder %s275, %s276
    %p287 = scmp.eq.s32.totalorder %s73, 0
    %p288 = por %p286, %p287
    %p289 = scmp.ne.s32.totalorder %s275, %s276
    %p290 = scmp.eq.s32.totalorder %s74, 3
    %p291 = por %p289, %p290
    %p293 = scmp.ne.s32.totalorder %s276, %s292
    %p294 = scmp.eq.s32.totalorder %s74, 0
    %p295 = por %p293, %p294
    %s296 = ssub.s32 %s76, %s83
    %p297 = scmp.eq.s32.totalorder %s296, 0
    %s299 = sadd.s32 %s298, 1
    %s300 = scalar_select %p297, %s298, %s299
    %p303 = pneg %p297
    %p304 = scmp.eq.s32.totalorder %s68, 3
    %p305 = por %p303, %p304
    %p306 = scmp.ne.s32.totalorder %s298, %s301
    %p307 = scmp.eq.s32.totalorder %s68, 0
    %p308 = por %p306, %p307
    %p309 = scmp.ne.s32.totalorder %s298, %s301
    %p310 = scmp.eq.s32.totalorder %s73, 3
    %p311 = por %p309, %p310
    %p312 = scmp.ne.s32.totalorder %s301, %s302
    %p313 = scmp.eq.s32.totalorder %s73, 0
    %p314 = por %p312, %p313
    %p315 = scmp.ne.s32.totalorder %s301, %s302
    %p316 = scmp.eq.s32.totalorder %s74, 3
    %p317 = por %p315, %p316
    %p319 = scmp.ne.s32.totalorder %s302, %s318
    %p320 = scmp.eq.s32.totalorder %s74, 0
    %p321 = por %p319, %p320
    %s322 = ssub.s32 %s76, %s83
    %p323 = scmp.eq.s32.totalorder %s322, 0
    %s325 = sadd.s32 %s324, 1
    %s326 = scalar_select %p323, %s324, %s325
    %p329 = pneg %p323
    %p330 = scmp.eq.s32.totalorder %s68, 3
    %p331 = por %p329, %p330
    %p332 = scmp.ne.s32.totalorder %s324, %s327
    %p333 = scmp.eq.s32.totalorder %s68, 0
    %p334 = por %p332, %p333
    %p335 = scmp.ne.s32.totalorder %s324, %s327
    %p336 = scmp.eq.s32.totalorder %s73, 3
    %p337 = por %p335, %p336
    %p338 = scmp.ne.s32.totalorder %s327, %s328
    %p339 = scmp.eq.s32.totalorder %s73, 0
    %p340 = por %p338, %p339
    %p341 = scmp.ne.s32.totalorder %s327, %s328
    %p342 = scmp.eq.s32.totalorder %s74, 3
    %p343 = por %p341, %p342
    %p345 = scmp.ne.s32.totalorder %s328, %s344
    %p346 = scmp.eq.s32.totalorder %s74, 0
    %p347 = por %p345, %p346
    %s348 = ssub.s32 %s76, %s83
    %p349 = scmp.eq.s32.totalorder %s348, 0
    %s351 = sadd.s32 %s350, 1
    %s352 = scalar_select %p349, %s350, %s351
    %p355 = pneg %p349
    %p356 = scmp.eq.s32.totalorder %s68, 3
    %p357 = por %p355, %p356
    %p358 = scmp.ne.s32.totalorder %s350, %s353
    %p359 = scmp.eq.s32.totalorder %s68, 0
    %p360 = por %p358, %p359
    %p361 = scmp.ne.s32.totalorder %s350, %s353
    %p362 = scmp.eq.s32.totalorder %s73, 3
    %p363 = por %p361, %p362
    %p364 = scmp.ne.s32.totalorder %s353, %s354
    %p365 = scmp.eq.s32.totalorder %s73, 0
    %p366 = por %p364, %p365
    %p367 = scmp.ne.s32.totalorder %s353, %s354
    %p368 = scmp.eq.s32.totalorder %s74, 3
    %p369 = por %p367, %p368
    %p371 = scmp.ne.s32.totalorder %s354, %s370
    %p372 = scmp.eq.s32.totalorder %s74, 0
    %p373 = por %p371, %p372
    %s374 = ssub.s32 %s76, %s83
    %p375 = scmp.eq.s32.totalorder %s374, 0
    %s377 = sadd.s32 %s376, 1
    %s378 = scalar_select %p375, %s376, %s377
    %p381 = pneg %p375
    %p382 = scmp.eq.s32.totalorder %s68, 3
    %p383 = por %p381, %p382
    %p384 = scmp.ne.s32.totalorder %s376, %s379
    %p385 = scmp.eq.s32.totalorder %s68, 0
    %p386 = por %p384, %p385
    %p387 = scmp.ne.s32.totalorder %s376, %s379
    %p388 = scmp.eq.s32.totalorder %s73, 3
    %p389 = por %p387, %p388
    %p390 = scmp.ne.s32.totalorder %s379, %s380
    %p391 = scmp.eq.s32.totalorder %s73, 0
    %p392 = por %p390, %p391
    %p393 = scmp.ne.s32.totalorder %s379, %s380
    %p394 = scmp.eq.s32.totalorder %s74, 3
    %p395 = por %p393, %p394
    %p397 = scmp.ne.s32.totalorder %s380, %s396
    %p398 = scmp.eq.s32.totalorder %s74, 0
    %p399 = por %p397, %p398
    %s400 = ssub.s32 %s76, %s83
    %p401 = scmp.eq.s32.totalorder %s400, 0
    %s403 = sadd.s32 %s402, 1
    %s404 = scalar_select %p401, %s402, %s403
    %p407 = pneg %p401
    %p408 = scmp.eq.s32.totalorder %s68, 3
    %p409 = por %p407, %p408
    %p410 = scmp.ne.s32.totalorder %s402, %s405
    %p411 = scmp.eq.s32.totalorder %s68, 0
    %p412 = por %p410, %p411
    %p413 = scmp.ne.s32.totalorder %s402, %s405
    %p414 = scmp.eq.s32.totalorder %s73, 3
    %p415 = por %p413, %p414
    %p416 = scmp.ne.s32.totalorder %s405, %s406
    %p417 = scmp.eq.s32.totalorder %s73, 0
    %p418 = por %p416, %p417
    %p419 = scmp.ne.s32.totalorder %s405, %s406
    %p420 = scmp.eq.s32.totalorder %s74, 3
    %p421 = por %p419, %p420
    %p423 = scmp.ne.s32.totalorder %s406, %s422
    %p424 = scmp.eq.s32.totalorder %s74, 0
    %p425 = por %p423, %p424
    %s426 = ssub.s32 %s76, %s83
    %p427 = scmp.eq.s32.totalorder %s426, 0
    %s429 = sadd.s32 %s428, 1
    %s430 = scalar_select %p427, %s428, %s429
    %p433 = pneg %p427
    %p434 = scmp.eq.s32.totalorder %s68, 3
    %p435 = por %p433, %p434
    %p436 = scmp.ne.s32.totalorder %s428, %s431
    %p437 = scmp.eq.s32.totalorder %s68, 0
    %p438 = por %p436, %p437
    %p439 = scmp.ne.s32.totalorder %s428, %s431
    %p440 = scmp.eq.s32.totalorder %s73, 3
    %p441 = por %p439, %p440
    %p442 = scmp.ne.s32.totalorder %s431, %s432
    %p443 = scmp.eq.s32.totalorder %s73, 0
    %p444 = por %p442, %p443
    %p445 = scmp.ne.s32.totalorder %s431, %s432
    %p446 = scmp.eq.s32.totalorder %s74, 3
    %p447 = por %p445, %p446
    %p449 = scmp.ne.s32.totalorder %s432, %s448
    %p450 = scmp.eq.s32.totalorder %s74, 0
    %p451 = por %p449, %p450
    %s452 = ssub.s32 %s76, %s83
    %p453 = scmp.eq.s32.totalorder %s452, 0
    %s455 = sadd.s32 %s454, 1
    %s456 = scalar_select %p453, %s454, %s455
    %p459 = pneg %p453
    %p460 = scmp.eq.s32.totalorder %s68, 3
    %p461 = por %p459, %p460
    %p462 = scmp.ne.s32.totalorder %s454, %s457
    %p463 = scmp.eq.s32.totalorder %s68, 0
    %p464 = por %p462, %p463
    %p465 = scmp.ne.s32.totalorder %s454, %s457
    %p466 = scmp.eq.s32.totalorder %s73, 3
    %p467 = por %p465, %p466
    %p468 = scmp.ne.s32.totalorder %s457, %s458
    %p469 = scmp.eq.s32.totalorder %s73, 0
    %p470 = por %p468, %p469
    %p471 = scmp.ne.s32.totalorder %s457, %s458
    %p472 = scmp.eq.s32.totalorder %s74, 3
    %p473 = por %p471, %p472
    %p475 = scmp.ne.s32.totalorder %s458, %s474
    %p476 = scmp.eq.s32.totalorder %s74, 0
    %p477 = por %p475, %p476
    %s478 = ssub.s32 %s76, %s83
    %p479 = scmp.eq.s32.totalorder %s478, 0
    %s481 = sadd.s32 %s480, 1
    %s482 = scalar_select %p479, %s480, %s481
    %p485 = pneg %p479
    %p486 = scmp.eq.s32.totalorder %s68, 3
    %p487 = por %p485, %p486
    %p488 = scmp.ne.s32.totalorder %s480, %s483
    %p489 = scmp.eq.s32.totalorder %s68, 0
    %p490 = por %p488, %p489
    %p491 = scmp.ne.s32.totalorder %s480, %s483
    %p492 = scmp.eq.s32.totalorder %s73, 3
    %p493 = por %p491, %p492
    %p494 = scmp.ne.s32.totalorder %s483, %s484
    %p495 = scmp.eq.s32.totalorder %s73, 0
    %p496 = por %p494, %p495
    %p497 = scmp.ne.s32.totalorder %s483, %s484
    %p498 = scmp.eq.s32.totalorder %s74, 3
    %p499 = por %p497, %p498
    %p501 = scmp.ne.s32.totalorder %s484, %s500
    %p502 = scmp.eq.s32.totalorder %s74, 0
    %p503 = por %p501, %p502
    %s504 = ssub.s32 %s76, %s83
    %p505 = scmp.eq.s32.totalorder %s504, 0
    %s507 = sadd.s32 %s506, 1
    %s508 = scalar_select %p505, %s506, %s507
    %p511 = pneg %p505
    %p512 = scmp.eq.s32.totalorder %s68, 3
    %p513 = por %p511, %p512
    %p514 = scmp.ne.s32.totalorder %s506, %s509
    %p515 = scmp.eq.s32.totalorder %s68, 0
    %p516 = por %p514, %p515
    %p517 = scmp.ne.s32.totalorder %s506, %s509
    %p518 = scmp.eq.s32.totalorder %s73, 3
    %p519 = por %p517, %p518
    %p520 = scmp.ne.s32.totalorder %s509, %s510
    %p521 = scmp.eq.s32.totalorder %s73, 0
    %p522 = por %p520, %p521
    %p523 = scmp.ne.s32.totalorder %s509, %s510
    %p524 = scmp.eq.s32.totalorder %s74, 3
    %p525 = por %p523, %p524
    %p527 = scmp.ne.s32.totalorder %s510, %s526
    %p528 = scmp.eq.s32.totalorder %s74, 0
    %p529 = por %p527, %p528
    %s530 = ssub.s32 %s76, %s83
    %p531 = scmp.eq.s32.totalorder %s530, 0
    %s533 = sadd.s32 %s532, 1
    %s534 = scalar_select %p531, %s532, %s533
    %p537 = pneg %p531
    %p538 = scmp.eq.s32.totalorder %s68, 3
    %p539 = por %p537, %p538
    %p540 = scmp.ne.s32.totalorder %s532, %s535
    %p541 = scmp.eq.s32.totalorder %s68, 0
    %p542 = por %p540, %p541
    %p543 = scmp.ne.s32.totalorder %s532, %s535
    %p544 = scmp.eq.s32.totalorder %s73, 3
    %p545 = por %p543, %p544
    %p546 = scmp.ne.s32.totalorder %s535, %s536
    %p547 = scmp.eq.s32.totalorder %s73, 0
    %p548 = por %p546, %p547
    %p549 = scmp.ne.s32.totalorder %s535, %s536
    %p550 = scmp.eq.s32.totalorder %s74, 3
    %p551 = por %p549, %p550
    %p553 = scmp.ne.s32.totalorder %s536, %s552
    %p554 = scmp.eq.s32.totalorder %s74, 0
    %p555 = por %p553, %p554
    %s556 = ssub.s32 %s76, %s83
    %p557 = scmp.eq.s32.totalorder %s556, 0
    %s559 = sadd.s32 %s558, 1
    %s560 = scalar_select %p557, %s558, %s559
    %p563 = pneg %p557
    %p564 = scmp.eq.s32.totalorder %s68, 3
    %p565 = por %p563, %p564
    %p566 = scmp.ne.s32.totalorder %s558, %s561
    %p567 = scmp.eq.s32.totalorder %s68, 0
    %p568 = por %p566, %p567
    %p569 = scmp.ne.s32.totalorder %s558, %s561
    %p570 = scmp.eq.s32.totalorder %s73, 3
    %p571 = por %p569, %p570
    %p572 = scmp.ne.s32.totalorder %s561, %s562
    %p573 = scmp.eq.s32.totalorder %s73, 0
    %p574 = por %p572, %p573
    %p575 = scmp.ne.s32.totalorder %s561, %s562
    %p576 = scmp.eq.s32.totalorder %s74, 3
    %p577 = por %p575, %p576
    %p579 = scmp.ne.s32.totalorder %s562, %s578
    %p580 = scmp.eq.s32.totalorder %s74, 0
    %p581 = por %p579, %p580
    %s582 = ssub.s32 %s76, %s83
    %p583 = scmp.eq.s32.totalorder %s582, 0
    %s585 = sadd.s32 %s584, 1
    %s586 = scalar_select %p583, %s584, %s585
    %p589 = pneg %p583
    %p590 = scmp.eq.s32.totalorder %s68, 3
    %p591 = por %p589, %p590
    %p592 = scmp.ne.s32.totalorder %s584, %s587
    %p593 = scmp.eq.s32.totalorder %s68, 0
    %p594 = por %p592, %p593
    %p595 = scmp.ne.s32.totalorder %s584, %s587
    %p596 = scmp.eq.s32.totalorder %s73, 3
    %p597 = por %p595, %p596
    %p598 = scmp.ne.s32.totalorder %s587, %s588
    %p599 = scmp.eq.s32.totalorder %s73, 0
    %p600 = por %p598, %p599
    %p601 = scmp.ne.s32.totalorder %s587, %s588
    %p602 = scmp.eq.s32.totalorder %s74, 3
    %p603 = por %p601, %p602
    %p605 = scmp.ne.s32.totalorder %s588, %s604
    %p606 = scmp.eq.s32.totalorder %s74, 0
    %p607 = por %p605, %p606
    %s608 = ssub.s32 %s76, %s83
    %p609 = scmp.eq.s32.totalorder %s608, 0
    %s611 = sadd.s32 %s610, 1
    %s612 = scalar_select %p609, %s610, %s611
    %p615 = pneg %p609
    %p616 = scmp.eq.s32.totalorder %s68, 3
    %p617 = por %p615, %p616
    %p618 = scmp.ne.s32.totalorder %s610, %s613
    %p619 = scmp.eq.s32.totalorder %s68, 0
    %p620 = por %p618, %p619
    %p621 = scmp.ne.s32.totalorder %s610, %s613
    %p622 = scmp.eq.s32.totalorder %s73, 3
    %p623 = por %p621, %p622
    %p624 = scmp.ne.s32.totalorder %s613, %s614
    %p625 = scmp.eq.s32.totalorder %s73, 0
    %p626 = por %p624, %p625
    %p627 = scmp.ne.s32.totalorder %s613, %s614
    %p628 = scmp.eq.s32.totalorder %s74, 3
    %p629 = por %p627, %p628
    %p631 = scmp.ne.s32.totalorder %s614, %s630
    %p632 = scmp.eq.s32.totalorder %s74, 0
    %p633 = por %p631, %p632
    %s634 = ssub.s32 %s76, %s83
    %p635 = scmp.eq.s32.totalorder %s634, 0
    %s637 = sadd.s32 %s636, 1
    %s638 = scalar_select %p635, %s636, %s637
    %p641 = pneg %p635
    %p642 = scmp.eq.s32.totalorder %s68, 3
    %p643 = por %p641, %p642
    %p644 = scmp.ne.s32.totalorder %s636, %s639
    %p645 = scmp.eq.s32.totalorder %s68, 0
    %p646 = por %p644, %p645
    %p647 = scmp.ne.s32.totalorder %s636, %s639
    %p648 = scmp.eq.s32.totalorder %s73, 3
    %p649 = por %p647, %p648
    %p650 = scmp.ne.s32.totalorder %s639, %s640
    %p651 = scmp.eq.s32.totalorder %s73, 0
    %p652 = por %p650, %p651
    %p653 = scmp.ne.s32.totalorder %s639, %s640
    %p654 = scmp.eq.s32.totalorder %s74, 3
    %p655 = por %p653, %p654
    %p657 = scmp.ne.s32.totalorder %s640, %s656
    %p658 = scmp.eq.s32.totalorder %s74, 0
    %p659 = por %p657, %p658
    %s660 = ssub.s32 %s76, %s83
    %p661 = scmp.eq.s32.totalorder %s660, 0
    %s663 = sadd.s32 %s662, 1
    %s664 = scalar_select %p661, %s662, %s663
    %p667 = pneg %p661
    %p668 = scmp.eq.s32.totalorder %s68, 3
    %p669 = por %p667, %p668
    %p670 = scmp.ne.s32.totalorder %s662, %s665
    %p671 = scmp.eq.s32.totalorder %s68, 0
    %p672 = por %p670, %p671
    %p673 = scmp.ne.s32.totalorder %s662, %s665
    %p674 = scmp.eq.s32.totalorder %s73, 3
    %p675 = por %p673, %p674
    %p676 = scmp.ne.s32.totalorder %s665, %s666
    %p677 = scmp.eq.s32.totalorder %s73, 0
    %p678 = por %p676, %p677
    %p679 = scmp.ne.s32.totalorder %s665, %s666
    %p680 = scmp.eq.s32.totalorder %s74, 3
    %p681 = por %p679, %p680
    %p683 = scmp.ne.s32.totalorder %s666, %s682
    %p684 = scmp.eq.s32.totalorder %s74, 0
    %p685 = por %p683, %p684
    %s686 = ssub.s32 %s76, %s83
    %p687 = scmp.eq.s32.totalorder %s686, 0
    %s689 = sadd.s32 %s688, 1
    %s690 = scalar_select %p687, %s688, %s689
    %p693 = pneg %p687
    %p694 = scmp.eq.s32.totalorder %s68, 3
    %p695 = por %p693, %p694
    %p696 = scmp.ne.s32.totalorder %s688, %s691
    %p697 = scmp.eq.s32.totalorder %s68, 0
    %p698 = por %p696, %p697
    %p699 = scmp.ne.s32.totalorder %s688, %s691
    %p700 = scmp.eq.s32.totalorder %s73, 3
    %p701 = por %p699, %p700
    %p702 = scmp.ne.s32.totalorder %s691, %s692
    %p703 = scmp.eq.s32.totalorder %s73, 0
    %p704 = por %p702, %p703
    %p705 = scmp.ne.s32.totalorder %s691, %s692
    %p706 = scmp.eq.s32.totalorder %s74, 3
    %p707 = por %p705, %p706
    %p709 = scmp.ne.s32.totalorder %s692, %s708
    %p710 = scmp.eq.s32.totalorder %s74, 0
    %p711 = por %p709, %p710
    %s712 = ssub.s32 %s76, %s83
    %p713 = scmp.eq.s32.totalorder %s712, 0
    %s715 = sadd.s32 %s714, 1
    %s716 = scalar_select %p713, %s714, %s715
    %p719 = pneg %p713
    %p720 = scmp.eq.s32.totalorder %s68, 3
    %p721 = por %p719, %p720
    %p722 = scmp.ne.s32.totalorder %s714, %s717
    %p723 = scmp.eq.s32.totalorder %s68, 0
    %p724 = por %p722, %p723
    %p725 = scmp.ne.s32.totalorder %s714, %s717
    %p726 = scmp.eq.s32.totalorder %s73, 3
    %p727 = por %p725, %p726
    %p728 = scmp.ne.s32.totalorder %s717, %s718
    %p729 = scmp.eq.s32.totalorder %s73, 0
    %p730 = por %p728, %p729
    %p731 = scmp.ne.s32.totalorder %s717, %s718
    %p732 = scmp.eq.s32.totalorder %s74, 3
    %p733 = por %p731, %p732
    %p735 = scmp.ne.s32.totalorder %s718, %s734
    %p736 = scmp.eq.s32.totalorder %s74, 0
    %p737 = por %p735, %p736
    %s738 = ssub.s32 %s76, %s83
    %p739 = scmp.eq.s32.totalorder %s738, 0
    %s741 = sadd.s32 %s740, 1
    %s742 = scalar_select %p739, %s740, %s741
    %p745 = pneg %p739
    %p746 = scmp.eq.s32.totalorder %s68, 3
    %p747 = por %p745, %p746
    %p748 = scmp.ne.s32.totalorder %s740, %s743
    %p749 = scmp.eq.s32.totalorder %s68, 0
    %p750 = por %p748, %p749
    %p751 = scmp.ne.s32.totalorder %s740, %s743
    %p752 = scmp.eq.s32.totalorder %s73, 3
    %p753 = por %p751, %p752
    %p754 = scmp.ne.s32.totalorder %s743, %s744
    %p755 = scmp.eq.s32.totalorder %s73, 0
    %p756 = por %p754, %p755
    %p757 = scmp.ne.s32.totalorder %s743, %s744
    %p758 = scmp.eq.s32.totalorder %s74, 3
    %p759 = por %p757, %p758
    %p761 = scmp.ne.s32.totalorder %s744, %s760
    %p762 = scmp.eq.s32.totalorder %s74, 0
    %p763 = por %p761, %p762
    %s764 = ssub.s32 %s76, %s83
    %p765 = scmp.eq.s32.totalorder %s764, 0
    %s767 = sadd.s32 %s766, 1
    %s768 = scalar_select %p765, %s766, %s767
    %p771 = pneg %p765
    %p772 = scmp.eq.s32.totalorder %s68, 3
    %p773 = por %p771, %p772
    %p774 = scmp.ne.s32.totalorder %s766, %s769
    %p775 = scmp.eq.s32.totalorder %s68, 0
    %p776 = por %p774, %p775
    %p777 = scmp.ne.s32.totalorder %s766, %s769
    %p778 = scmp.eq.s32.totalorder %s73, 3
    %p779 = por %p777, %p778
    %p780 = scmp.ne.s32.totalorder %s769, %s770
    %p781 = scmp.eq.s32.totalorder %s73, 0
    %p782 = por %p780, %p781
    %p783 = scmp.ne.s32.totalorder %s769, %s770
    %p784 = scmp.eq.s32.totalorder %s74, 3
    %p785 = por %p783, %p784
    %p787 = scmp.ne.s32.totalorder %s770, %s786
    %p788 = scmp.eq.s32.totalorder %s74, 0
    %p789 = por %p787, %p788
    %s790 = ssub.s32 %s76, %s83
    %p791 = scmp.eq.s32.totalorder %s790, 0
    %s793 = sadd.s32 %s792, 1
    %s794 = scalar_select %p791, %s792, %s793
    %p797 = pneg %p791
    %p798 = scmp.eq.s32.totalorder %s68, 3
    %p799 = por %p797, %p798
    %p800 = scmp.ne.s32.totalorder %s792, %s795
    %p801 = scmp.eq.s32.totalorder %s68, 0
    %p802 = por %p800, %p801
    %p803 = scmp.ne.s32.totalorder %s792, %s795
    %p804 = scmp.eq.s32.totalorder %s73, 3
    %p805 = por %p803, %p804
    %p806 = scmp.ne.s32.totalorder %s795, %s796
    %p807 = scmp.eq.s32.totalorder %s73, 0
    %p808 = por %p806, %p807
    %p809 = scmp.ne.s32.totalorder %s795, %s796
    %p810 = scmp.eq.s32.totalorder %s74, 3
    %p811 = por %p809, %p810
    %p813 = scmp.ne.s32.totalorder %s796, %s812
    %p814 = scmp.eq.s32.totalorder %s74, 0
    %p815 = por %p813, %p814
    %s816 = ssub.s32 %s75, %s87
    %p817 = scmp.eq.s32.totalorder %s816, 0
    %s819 = sadd.s32 %s818, 1
    %s820 = scalar_select %p817, %s818, %s819
    %p823 = pneg %p817
    %p824 = scmp.eq.s32.totalorder %s68, 3
    %p825 = por %p823, %p824
    %p826 = scmp.ne.s32.totalorder %s818, %s821
    %p827 = scmp.eq.s32.totalorder %s68, 0
    %p828 = por %p826, %p827
    %p829 = scmp.ne.s32.totalorder %s818, %s821
    %p830 = scmp.eq.s32.totalorder %s73, 3
    %p831 = por %p829, %p830
    %p832 = scmp.ne.s32.totalorder %s821, %s822
    %p833 = scmp.eq.s32.totalorder %s73, 0
    %p834 = por %p832, %p833
    %p835 = scmp.ne.s32.totalorder %s821, %s822
    %p836 = scmp.eq.s32.totalorder %s74, 3
    %p837 = por %p835, %p836
    %p839 = scmp.ne.s32.totalorder %s822, %s838
    %p840 = scmp.eq.s32.totalorder %s74, 0
    %p841 = por %p839, %p840
    %s842 = ssub.s32 %s75, %s87
    %p843 = scmp.eq.s32.totalorder %s842, 0
    %s845 = sadd.s32 %s844, 1
    %s846 = scalar_select %p843, %s844, %s845
    %p849 = pneg %p843
    %p850 = scmp.eq.s32.totalorder %s68, 3
    %p851 = por %p849, %p850
    %p852 = scmp.ne.s32.totalorder %s844, %s847
    %p853 = scmp.eq.s32.totalorder %s68, 0
    %p854 = por %p852, %p853
    %p855 = scmp.ne.s32.totalorder %s844, %s847
    %p856 = scmp.eq.s32.totalorder %s73, 3
    %p857 = por %p855, %p856
    %p858 = scmp.ne.s32.totalorder %s847, %s848
    %p859 = scmp.eq.s32.totalorder %s73, 0
    %p860 = por %p858, %p859
    %p861 = scmp.ne.s32.totalorder %s847, %s848
    %p862 = scmp.eq.s32.totalorder %s74, 3
    %p863 = por %p861, %p862
    %p865 = scmp.ne.s32.totalorder %s848, %s864
    %p866 = scmp.eq.s32.totalorder %s74, 0
    %p867 = por %p865, %p866
    %s868 = ssub.s32 %s75, %s87
    %p869 = scmp.eq.s32.totalorder %s868, 0
    %s871 = sadd.s32 %s870, 1
    %s872 = scalar_select %p869, %s870, %s871
    %p875 = pneg %p869
    %p876 = scmp.eq.s32.totalorder %s68, 3
    %p877 = por %p875, %p876
    %p878 = scmp.ne.s32.totalorder %s870, %s873
    %p879 = scmp.eq.s32.totalorder %s68, 0
    %p880 = por %p878, %p879
    %p881 = scmp.ne.s32.totalorder %s870, %s873
    %p882 = scmp.eq.s32.totalorder %s73, 3
    %p883 = por %p881, %p882
    %p884 = scmp.ne.s32.totalorder %s873, %s874
    %p885 = scmp.eq.s32.totalorder %s73, 0
    %p886 = por %p884, %p885
    %p887 = scmp.ne.s32.totalorder %s873, %s874
    %p888 = scmp.eq.s32.totalorder %s74, 3
    %p889 = por %p887, %p888
    %p891 = scmp.ne.s32.totalorder %s874, %s890
    %p892 = scmp.eq.s32.totalorder %s74, 0
    %p893 = por %p891, %p892
    %p894 = scmp.le.s32.totalorder 1, %s68
    %p895 = scmp.lt.s32.totalorder %s68, 5
    %p896 = pnand %p894, %p895
    %p897 = pneg %p896
    // Predicated region
    $region9: #{run.1} parent=5 // pred_check
      _
    $region10: #{run.1} parent=5 // pred_check_branch
      %899 = sbr.rel (%p896) target = $region12
    $region11: #{run.1} parent=5 // pred_region
      %s900 = ssub.s32 %s68, 1
    $region12: #{run.1} parent=5 // pred_fallthru
      _
    %p901 = scmp.lt.s32.totalorder %s68, 4
    // Predicated region
    $region13: #{run.1} parent=5 // pred_check
      %p902 = pneg %p901
    $region14: #{run.1} parent=5 // pred_check_branch
      %904 = sbr.rel (%p902) target = $region16
    $region15: #{run.1} parent=5 // pred_region
      // Predicated region
      $region17: #{run.1} parent=15 // pred_check
        %p905 = pneg %p100
      $region18: #{run.1} parent=15 // pred_check_branch
        %907 = sbr.rel (%p905) target = $region20
      $region19: #{run.1} parent=15 // pred_region
        %p908 = scmp.lt.s32.totalorder %s75, 1
        %s909 = scalar_select %p908, %s75, 1
        %s910 = scalar_lea.vmem %s1, %s909
      $region20: #{run.1} parent=15 // pred_fallthru
        _
      // Predicated region
      $region21: #{run.1} parent=15 // pred_check
        %p911 = pneg %p126
      $region22: #{run.1} parent=15 // pred_check_branch
        %913 = sbr.rel (%p911) target = $region24
      $region23: #{run.1} parent=15 // pred_region
        %p914 = scmp.lt.s32.totalorder %s75, 1
        %s915 = scalar_select %p914, %s75, 1
        %s916 = smul.addr %s915, 8
        %s917 = scalar_lea.vmem %s3, %s916
      $region24: #{run.1} parent=15 // pred_fallthru
        _
      // Predicated region
      $region25: #{run.1} parent=15 // pred_check
        %p918 = pneg %p152
      $region26: #{run.1} parent=15 // pred_check_branch
        %920 = sbr.rel (%p918) target = $region28
      $region27: #{run.1} parent=15 // pred_region
        %p921 = scmp.lt.s32.totalorder %s75, 1
        %s922 = scalar_select %p921, %s75, 1
        %s923 = smul.addr %s922, 8
        %s924 = scalar_lea.vmem %s5, %s923
      $region28: #{run.1} parent=15 // pred_fallthru
        _
      // Predicated region
      $region29: #{run.1} parent=15 // pred_check
        %p925 = pneg %p178
      $region30: #{run.1} parent=15 // pred_check_branch
        %927 = sbr.rel (%p925) target = $region32
      $region31: #{run.1} parent=15 // pred_region
        %p928 = scmp.lt.s32.totalorder %s75, 1
        %s929 = scalar_select %p928, %s75, 1
        %s930 = smul.addr %s929, 2
        %s931 = smul.addr %s930, 8
        %s932 = scalar_lea.vmem %s7, %s931
      $region32: #{run.1} parent=15 // pred_fallthru
        _
      // Predicated region
      $region33: #{run.1} parent=15 // pred_check
        %p933 = pneg %p204
      $region34: #{run.1} parent=15 // pred_check_branch
        %935 = sbr.rel (%p933) target = $region36
      $region35: #{run.1} parent=15 // pred_region
        %p936 = scmp.lt.s32.totalorder %s75, 1
        %s937 = scalar_select %p936, %s75, 1
        %s938 = smul.addr %s937, 2
        %s939 = smul.addr %s938, 8
        %s940 = scalar_lea.vmem %s9, %s939
      $region36: #{run.1} parent=15 // pred_fallthru
        _
      // Predicated region
      $region37: #{run.1} parent=15 // pred_check
        %p941 = pneg %p230
      $region38: #{run.1} parent=15 // pred_check_branch
        %943 = sbr.rel (%p941) target = $region40
      $region39: #{run.1} parent=15 // pred_region
        %p944 = scmp.lt.s32.totalorder %s75, 1
        %s945 = scalar_select %p944, %s75, 1
        %s946 = smul.addr %s945, 6
        %s947 = smul.addr %s946, 8
        %s948 = scalar_lea.vmem %s11, %s947
      $region40: #{run.1} parent=15 // pred_fallthru
        _
      // Predicated region
      $region41: #{run.1} parent=15 // pred_check
        %p949 = pneg %p256
      $region42: #{run.1} parent=15 // pred_check_branch
        %951 = sbr.rel (%p949) target = $region44
      $region43: #{run.1} parent=15 // pred_region
        %p952 = scmp.lt.s32.totalorder %s76, 1
        %s953 = scalar_select %p952, %s76, 1
        %s954 = scalar_lea.vmem %s13, %s953
      $region44: #{run.1} parent=15 // pred_fallthru
        _
      // Predicated region
      $region45: #{run.1} parent=15 // pred_check
        %p955 = pneg %p282
      $region46: #{run.1} parent=15 // pred_check_branch
        %957 = sbr.rel (%p955) target = $region48
      $region47: #{run.1} parent=15 // pred_region
        %p958 = scmp.lt.s32.totalorder %s76, 1
        %s959 = scalar_select %p958, %s76, 1
        %s960 = scalar_lea.vmem %s15, %s959
      $region48: #{run.1} parent=15 // pred_fallthru
        _
      // Predicated region
      $region49: #{run.1} parent=15 // pred_check
        %p961 = pneg %p308
      $region50: #{run.1} parent=15 // pred_check_branch
        %963 = sbr.rel (%p961) target = $region52
      $region51: #{run.1} parent=15 // pred_region
        %p964 = scmp.lt.s32.totalorder %s76, 1
        %s965 = scalar_select %p964, %s76, 1
        %s966 = scalar_lea.vmem %s17, %s965
      $region52: #{run.1} parent=15 // pred_fallthru
        _
      // Predicated region
      $region53: #{run.1} parent=15 // pred_check
        %p967 = pneg %p334
      $region54: #{run.1} parent=15 // pred_check_branch
        %969 = sbr.rel (%p967) target = $region56
      $region55: #{run.1} parent=15 // pred_region
        %p970 = scmp.lt.s32.totalorder %s76, 1
        %s971 = scalar_select %p970, %s76, 1
        %s972 = scalar_lea.vmem %s19, %s971
      $region56: #{run.1} parent=15 // pred_fallthru
        _
      // Predicated region
      $region57: #{run.1} parent=15 // pred_check
        %p973 = pneg %p360
      $region58: #{run.1} parent=15 // pred_check_branch
        %975 = sbr.rel (%p973) target = $region60
      $region59: #{run.1} parent=15 // pred_region
        %p976 = scmp.lt.s32.totalorder %s76, 1
        %s977 = scalar_select %p976, %s76, 1
        %s978 = smul.addr %s977, 6
        %s979 = scalar_lea.vmem %s21, %s978
      $region60: #{run.1} parent=15 // pred_fallthru
        _
      // Predicated region
      $region61: #{run.1} parent=15 // pred_check
        %p980 = pneg %p386
      $region62: #{run.1} parent=15 // pred_check_branch
        %982 = sbr.rel (%p980) target = $region64
      $region63: #{run.1} parent=15 // pred_region
        %p983 = scmp.lt.s32.totalorder %s76, 1
        %s984 = scalar_select %p983, %s76, 1
        %s985 = smul.addr %s984, 6
        %s986 = scalar_lea.vmem %s23, %s985
      $region64: #{run.1} parent=15 // pred_fallthru
        _
      // Predicated region
      $region65: #{run.1} parent=15 // pred_check
        %p987 = pneg %p412
      $region66: #{run.1} parent=15 // pred_check_branch
        %989 = sbr.rel (%p987) target = $region68
      $region67: #{run.1} parent=15 // pred_region
        %p990 = scmp.lt.s32.totalorder %s76, 1
        %s991 = scalar_select %p990, %s76, 1
        %s992 = smul.addr %s991, 4
        %s993 = smul.addr %s992, 4
        %s994 = scalar_lea.vmem %s25, %s993
      $region68: #{run.1} parent=15 // pred_fallthru
        _
      // Predicated region
      $region69: #{run.1} parent=15 // pred_check
        %p995 = pneg %p438
      $region70: #{run.1} parent=15 // pred_check_branch
        %997 = sbr.rel (%p995) target = $region72
      $region71: #{run.1} parent=15 // pred_region
        %p998 = scmp.lt.s32.totalorder %s76, 1
        %s999 = scalar_select %p998, %s76, 1
        %s1000 = scalar_lea.vmem %s27, %s999
      $region72: #{run.1} parent=15 // pred_fallthru
        _
      // Predicated region
      $region73: #{run.1} parent=15 // pred_check
        %p1001 = pneg %p464
      $region74: #{run.1} parent=15 // pred_check_branch
        %1003 = sbr.rel (%p1001) target = $region76
      $region75: #{run.1} parent=15 // pred_region
        %p1004 = scmp.lt.s32.totalorder %s76, 1
        %s1005 = scalar_select %p1004, %s76, 1
        %s1006 = smul.addr %s1005, 4
        %s1007 = smul.addr %s1006, 4
        %s1008 = scalar_lea.vmem %s29, %s1007
      $region76: #{run.1} parent=15 // pred_fallthru
        _
      // Predicated region
      $region77: #{run.1} parent=15 // pred_check
        %p1009 = pneg %p490
      $region78: #{run.1} parent=15 // pred_check_branch
        %1011 = sbr.rel (%p1009) target = $region80
      $region79: #{run.1} parent=15 // pred_region
        %p1012 = scmp.lt.s32.totalorder %s76, 1
        %s1013 = scalar_select %p1012, %s76, 1
        %s1014 = scalar_lea.vmem %s31, %s1013
      $region80: #{run.1} parent=15 // pred_fallthru
        _
      // Predicated region
      $region81: #{run.1} parent=15 // pred_check
        %p1015 = pneg %p516
      $region82: #{run.1} parent=15 // pred_check_branch
        %1017 = sbr.rel (%p1015) target = $region84
      $region83: #{run.1} parent=15 // pred_region
        %p1018 = scmp.lt.s32.totalorder %s76, 1
        %s1019 = scalar_select %p1018, %s76, 1
        %s1020 = smul.addr %s1019, 4
        %s1021 = smul.addr %s1020, 4
        %s1022 = scalar_lea.vmem %s33, %s1021
      $region84: #{run.1} parent=15 // pred_fallthru
        _
      // Predicated region
      $region85: #{run.1} parent=15 // pred_check
        %p1023 = pneg %p542
      $region86: #{run.1} parent=15 // pred_check_branch
        %1025 = sbr.rel (%p1023) target = $region88
      $region87: #{run.1} parent=15 // pred_region
        %p1026 = scmp.lt.s32.totalorder %s76, 1
        %s1027 = scalar_select %p1026, %s76, 1
        %s1028 = scalar_lea.vmem %s35, %s1027
      $region88: #{run.1} parent=15 // pred_fallthru
        _
      // Predicated region
      $region89: #{run.1} parent=15 // pred_check
        %p1029 = pneg %p568
      $region90: #{run.1} parent=15 // pred_check_branch
        %1031 = sbr.rel (%p1029) target = $region92
      $region91: #{run.1} parent=15 // pred_region
        %p1032 = scmp.lt.s32.totalorder %s76, 1
        %s1033 = scalar_select %p1032, %s76, 1
        %s1034 = smul.addr %s1033, 4
        %s1035 = smul.addr %s1034, 4
        %s1036 = scalar_lea.vmem %s37, %s1035
      $region92: #{run.1} parent=15 // pred_fallthru
        _
      // Predicated region
      $region93: #{run.1} parent=15 // pred_check
        %p1037 = pneg %p594
      $region94: #{run.1} parent=15 // pred_check_branch
        %1039 = sbr.rel (%p1037) target = $region96
      $region95: #{run.1} parent=15 // pred_region
        %p1040 = scmp.lt.s32.totalorder %s76, 1
        %s1041 = scalar_select %p1040, %s76, 1
        %s1042 = scalar_lea.vmem %s39, %s1041
      $region96: #{run.1} parent=15 // pred_fallthru
        _
      // Predicated region
      $region97: #{run.1} parent=15 // pred_check
        %p1043 = pneg %p620
      $region98: #{run.1} parent=15 // pred_check_branch
        %1045 = sbr.rel (%p1043) target = $region100
      $region99: #{run.1} parent=15 // pred_region
        %p1046 = scmp.lt.s32.totalorder %s76, 1
        %s1047 = scalar_select %p1046, %s76, 1
        %s1048 = smul.addr %s1047, 96
        %s1049 = smul.addr %s1048, 4
        %s1050 = scalar_lea.vmem %s41, %s1049
      $region100: #{run.1} parent=15 // pred_fallthru
        _
      // Predicated region
      $region101: #{run.1} parent=15 // pred_check
        %p1051 = pneg %p646
      $region102: #{run.1} parent=15 // pred_check_branch
        %1053 = sbr.rel (%p1051) target = $region104
      $region103: #{run.1} parent=15 // pred_region
        %p1054 = scmp.lt.s32.totalorder %s76, 1
        %s1055 = scalar_select %p1054, %s76, 1
        %s1056 = scalar_lea.vmem %s43, %s1055
      $region104: #{run.1} parent=15 // pred_fallthru
        _
      // Predicated region
      $region105: #{run.1} parent=15 // pred_check
        %p1057 = pneg %p672
      $region106: #{run.1} parent=15 // pred_check_branch
        %1059 = sbr.rel (%p1057) target = $region108
      $region107: #{run.1} parent=15 // pred_region
        %p1060 = scmp.lt.s32.totalorder %s76, 1
        %s1061 = scalar_select %p1060, %s76, 1
        %s1062 = smul.addr %s1061, 4
        %s1063 = smul.addr %s1062, 4
        %s1064 = scalar_lea.vmem %s45, %s1063
      $region108: #{run.1} parent=15 // pred_fallthru
        _
      // Predicated region
      $region109: #{run.1} parent=15 // pred_check
        %p1065 = pneg %p698
      $region110: #{run.1} parent=15 // pred_check_branch
        %1067 = sbr.rel (%p1065) target = $region112
      $region111: #{run.1} parent=15 // pred_region
        %p1068 = scmp.lt.s32.totalorder %s76, 1
        %s1069 = scalar_select %p1068, %s76, 1
        %s1070 = scalar_lea.vmem %s47, %s1069
      $region112: #{run.1} parent=15 // pred_fallthru
        _
      // Predicated region
      $region113: #{run.1} parent=15 // pred_check
        %p1071 = pneg %p724
      $region114: #{run.1} parent=15 // pred_check_branch
        %1073 = sbr.rel (%p1071) target = $region116
      $region115: #{run.1} parent=15 // pred_region
        %p1074 = scmp.lt.s32.totalorder %s76, 1
        %s1075 = scalar_select %p1074, %s76, 1
        %s1076 = smul.addr %s1075, 4
        %s1077 = smul.addr %s1076, 4
        %s1078 = scalar_lea.vmem %s49, %s1077
      $region116: #{run.1} parent=15 // pred_fallthru
        _
      // Predicated region
      $region117: #{run.1} parent=15 // pred_check
        %p1079 = pneg %p750
      $region118: #{run.1} parent=15 // pred_check_branch
        %1081 = sbr.rel (%p1079) target = $region120
      $region119: #{run.1} parent=15 // pred_region
        %p1082 = scmp.lt.s32.totalorder %s76, 1
        %s1083 = scalar_select %p1082, %s76, 1
        %s1084 = scalar_lea.vmem %s51, %s1083
      $region120: #{run.1} parent=15 // pred_fallthru
        _
      // Predicated region
      $region121: #{run.1} parent=15 // pred_check
        %p1085 = pneg %p776
      $region122: #{run.1} parent=15 // pred_check_branch
        %1087 = sbr.rel (%p1085) target = $region124
      $region123: #{run.1} parent=15 // pred_region
        %p1088 = scmp.lt.s32.totalorder %s76, 1
        %s1089 = scalar_select %p1088, %s76, 1
        %s1090 = smul.addr %s1089, 24
        %s1091 = smul.addr %s1090, 4
        %s1092 = scalar_lea.vmem %s53, %s1091
      $region124: #{run.1} parent=15 // pred_fallthru
        _
      // Predicated region
      $region125: #{run.1} parent=15 // pred_check
        %p1093 = pneg %p802
      $region126: #{run.1} parent=15 // pred_check_branch
        %1095 = sbr.rel (%p1093) target = $region128
      $region127: #{run.1} parent=15 // pred_region
        %p1096 = scmp.lt.s32.totalorder %s76, 1
        %s1097 = scalar_select %p1096, %s76, 1
        %s1098 = smul.addr %s1097, 6
        %s1099 = scalar_lea.vmem %s55, %s1098
      $region128: #{run.1} parent=15 // pred_fallthru
        _
    $region16: #{run.1} parent=5 // pred_fallthru
      _
    %p1100 = scmp.le.s32.totalorder 1, %s68
    %p1101 = scmp.lt.s32.totalorder %s68, 5
    %p1102 = pnand %p1100, %p1101
    %p1103 = pneg %p1102
    // Predicated region
    $region129: #{run.1} parent=5 // pred_check
      _
    $region130: #{run.1} parent=5 // pred_check_branch
      %1105 = sbr.rel (%p1102) target = $region132
    $region131: #{run.1} parent=5 // pred_region
      %s1106 = ssub.s32 %s68, 1
      %p1107 = scmp.lt.s32.totalorder %s77, 1
      %s1108 = scalar_select %p1107, %s77, 1
      %s1109 = scalar_lea.vmem %s1, %s1108
      %p1110 = pneg %p106
      %p1111 = pneg %p103
      %p1112 = scmp.lt.s32.totalorder %s77, 1
      %s1113 = scalar_select %p1112, %s77, 1
      %s1114 = smul.addr %s1113, 8
      %s1115 = scalar_lea.vmem %s3, %s1114
      %p1116 = pneg %p132
      %p1117 = pneg %p129
      %p1118 = scmp.lt.s32.totalorder %s77, 1
      %s1119 = scalar_select %p1118, %s77, 1
      %s1120 = smul.addr %s1119, 8
      %s1121 = scalar_lea.vmem %s5, %s1120
      %p1122 = pneg %p158
      %p1123 = pneg %p155
      %p1124 = scmp.lt.s32.totalorder %s77, 1
      %s1125 = scalar_select %p1124, %s77, 1
      %s1126 = smul.addr %s1125, 2
      %s1127 = smul.addr %s1126, 8
      %s1128 = scalar_lea.vmem %s7, %s1127
      %p1129 = pneg %p184
      %p1130 = pneg %p181
      %p1131 = scmp.lt.s32.totalorder %s77, 1
      %s1132 = scalar_select %p1131, %s77, 1
      %s1133 = smul.addr %s1132, 2
      %s1134 = smul.addr %s1133, 8
      %s1135 = scalar_lea.vmem %s9, %s1134
      %p1136 = pneg %p210
      %p1137 = pneg %p207
      %p1138 = scmp.lt.s32.totalorder %s77, 1
      %s1139 = scalar_select %p1138, %s77, 1
      %s1140 = smul.addr %s1139, 6
      %s1141 = smul.addr %s1140, 8
      %s1142 = scalar_lea.vmem %s11, %s1141
      %p1143 = pneg %p236
      %p1144 = pneg %p233
      %p1145 = scmp.lt.s32.totalorder %s78, 1
      %s1146 = scalar_select %p1145, %s78, 1
      %s1147 = scalar_lea.vmem %s13, %s1146
      %p1148 = pneg %p262
      %p1149 = pneg %p259
      %p1150 = scmp.lt.s32.totalorder %s78, 1
      %s1151 = scalar_select %p1150, %s78, 1
      %s1152 = scalar_lea.vmem %s15, %s1151
      %p1153 = pneg %p288
      %p1154 = pneg %p285
      %p1155 = scmp.lt.s32.totalorder %s78, 1
      %s1156 = scalar_select %p1155, %s78, 1
      %s1157 = scalar_lea.vmem %s17, %s1156
      %p1158 = pneg %p314
      %p1159 = pneg %p311
      %p1160 = scmp.lt.s32.totalorder %s78, 1
      %s1161 = scalar_select %p1160, %s78, 1
      %s1162 = scalar_lea.vmem %s19, %s1161
      %p1163 = pneg %p340
      %p1164 = pneg %p337
      %p1165 = scmp.lt.s32.totalorder %s78, 1
      %s1166 = scalar_select %p1165, %s78, 1
      %s1167 = smul.addr %s1166, 6
      %s1168 = scalar_lea.vmem %s21, %s1167
      %p1169 = pneg %p366
      %p1170 = pneg %p363
      %p1171 = scmp.lt.s32.totalorder %s78, 1
      %s1172 = scalar_select %p1171, %s78, 1
      %s1173 = smul.addr %s1172, 6
      %s1174 = scalar_lea.vmem %s23, %s1173
      %p1175 = pneg %p392
      %p1176 = pneg %p389
      %p1177 = scmp.lt.s32.totalorder %s78, 1
      %s1178 = scalar_select %p1177, %s78, 1
      %s1179 = smul.addr %s1178, 4
      %s1180 = smul.addr %s1179, 4
      %s1181 = scalar_lea.vmem %s25, %s1180
      %p1182 = pneg %p418
      %p1183 = pneg %p415
      %p1184 = scmp.lt.s32.totalorder %s78, 1
      %s1185 = scalar_select %p1184, %s78, 1
      %s1186 = scalar_lea.vmem %s27, %s1185
      %p1187 = pneg %p444
      %p1188 = pneg %p441
      %p1189 = scmp.lt.s32.totalorder %s78, 1
      %s1190 = scalar_select %p1189, %s78, 1
      %s1191 = smul.addr %s1190, 4
      %s1192 = smul.addr %s1191, 4
      %s1193 = scalar_lea.vmem %s29, %s1192
      %p1194 = pneg %p470
      %p1195 = pneg %p467
      %p1196 = scmp.lt.s32.totalorder %s78, 1
      %s1197 = scalar_select %p1196, %s78, 1
      %s1198 = scalar_lea.vmem %s31, %s1197
      %p1199 = pneg %p496
      %p1200 = pneg %p493
      %p1201 = scmp.lt.s32.totalorder %s78, 1
      %s1202 = scalar_select %p1201, %s78, 1
      %s1203 = smul.addr %s1202, 4
      %s1204 = smul.addr %s1203, 4
      %s1205 = scalar_lea.vmem %s33, %s1204
      %p1206 = pneg %p522
      %p1207 = pneg %p519
      %p1208 = scmp.lt.s32.totalorder %s78, 1
      %s1209 = scalar_select %p1208, %s78, 1
      %s1210 = scalar_lea.vmem %s35, %s1209
      %p1211 = pneg %p548
      %p1212 = pneg %p545
      %p1213 = scmp.lt.s32.totalorder %s78, 1
      %s1214 = scalar_select %p1213, %s78, 1
      %s1215 = smul.addr %s1214, 4
      %s1216 = smul.addr %s1215, 4
      %s1217 = scalar_lea.vmem %s37, %s1216
      %p1218 = pneg %p574
      %p1219 = pneg %p571
      %p1220 = scmp.lt.s32.totalorder %s78, 1
      %s1221 = scalar_select %p1220, %s78, 1
      %s1222 = scalar_lea.vmem %s39, %s1221
      %p1223 = pneg %p600
      %p1224 = pneg %p597
      %p1225 = scmp.lt.s32.totalorder %s78, 1
      %s1226 = scalar_select %p1225, %s78, 1
      %s1227 = smul.addr %s1226, 96
      %s1228 = smul.addr %s1227, 4
      %s1229 = scalar_lea.vmem %s41, %s1228
      %p1230 = pneg %p626
      %p1231 = pneg %p623
      %p1232 = scmp.lt.s32.totalorder %s78, 1
      %s1233 = scalar_select %p1232, %s78, 1
      %s1234 = scalar_lea.vmem %s43, %s1233
      %p1235 = pneg %p652
      %p1236 = pneg %p649
      %p1237 = scmp.lt.s32.totalorder %s78, 1
      %s1238 = scalar_select %p1237, %s78, 1
      %s1239 = smul.addr %s1238, 4
      %s1240 = smul.addr %s1239, 4
      %s1241 = scalar_lea.vmem %s45, %s1240
      %p1242 = pneg %p678
      %p1243 = pneg %p675
      %p1244 = scmp.lt.s32.totalorder %s78, 1
      %s1245 = scalar_select %p1244, %s78, 1
      %s1246 = scalar_lea.vmem %s47, %s1245
      %p1247 = pneg %p704
      %p1248 = pneg %p701
      %p1249 = scmp.lt.s32.totalorder %s78, 1
      %s1250 = scalar_select %p1249, %s78, 1
      %s1251 = smul.addr %s1250, 4
      %s1252 = smul.addr %s1251, 4
      %s1253 = scalar_lea.vmem %s49, %s1252
      %p1254 = pneg %p730
      %p1255 = pneg %p727
      %p1256 = scmp.lt.s32.totalorder %s78, 1
      %s1257 = scalar_select %p1256, %s78, 1
      %s1258 = scalar_lea.vmem %s51, %s1257
      %p1259 = pneg %p756
      %p1260 = pneg %p753
      %p1261 = scmp.lt.s32.totalorder %s78, 1
      %s1262 = scalar_select %p1261, %s78, 1
      %s1263 = smul.addr %s1262, 24
      %s1264 = smul.addr %s1263, 4
      %s1265 = scalar_lea.vmem %s53, %s1264
      %p1266 = pneg %p782
      %p1267 = pneg %p779
      %p1268 = scmp.lt.s32.totalorder %s78, 1
      %s1269 = scalar_select %p1268, %s78, 1
      %s1270 = smul.addr %s1269, 6
      %s1271 = scalar_lea.vmem %s55, %s1270
      %p1272 = pneg %p808
      %p1273 = pneg %p805
      %p1274 = pneg %p834
      %p1275 = pneg %p831
      %p1276 = scmp.lt.s32.totalorder %s77, 1
      %s1277 = scalar_select %p1276, %s77, 1
      %s1278 = smul.addr %s1277, 8
      %s1279 = scalar_lea.vmem %s57, %s1278
      %p1280 = pneg %p860
      %p1281 = pneg %p857
      %p1282 = scmp.lt.s32.totalorder %s77, 1
      %s1283 = scalar_select %p1282, %s77, 1
      %s1284 = smul.addr %s1283, 6
      %s1285 = smul.addr %s1284, 8
      %s1286 = scalar_lea.vmem %s59, %s1285
      %p1287 = pneg %p886
      %p1288 = pneg %p883
      %p1289 = scmp.lt.s32.totalorder %s77, 1
      %s1290 = scalar_select %p1289, %s77, 1
      %s1291 = smul.addr %s1290, 2
      %s1292 = smul.addr %s1291, 8
      %s1293 = scalar_lea.vmem %s61, %s1292
      %p1294 = scmp.lt.s32.totalorder %s77, 1
      %s1295 = scalar_select %p1294, %s77, 1
      %s1296 = scalar_lea.vmem %s1, %s1295
      %p1297 = scmp.lt.s32.totalorder %s77, 1
      %s1298 = scalar_select %p1297, %s77, 1
      %s1299 = smul.addr %s1298, 8
      %s1300 = scalar_lea.vmem %s3, %s1299
      %p1301 = scmp.lt.s32.totalorder %s77, 1
      %s1302 = scalar_select %p1301, %s77, 1
      %s1303 = smul.addr %s1302, 8
      %s1304 = scalar_lea.vmem %s5, %s1303
      %p1305 = scmp.lt.s32.totalorder %s77, 1
      %s1306 = scalar_select %p1305, %s77, 1
      %s1307 = smul.addr %s1306, 2
      %s1308 = smul.addr %s1307, 8
      %s1309 = scalar_lea.vmem %s7, %s1308
      %p1310 = scmp.lt.s32.totalorder %s77, 1
      %s1311 = scalar_select %p1310, %s77, 1
      %s1312 = smul.addr %s1311, 2
      %s1313 = smul.addr %s1312, 8
      %s1314 = scalar_lea.vmem %s9, %s1313
      %p1315 = scmp.lt.s32.totalorder %s77, 1
      %s1316 = scalar_select %p1315, %s77, 1
      %s1317 = smul.addr %s1316, 6
      %s1318 = smul.addr %s1317, 8
      %s1319 = scalar_lea.vmem %s11, %s1318
      %p1320 = scmp.lt.s32.totalorder %s78, 1
      %s1321 = scalar_select %p1320, %s78, 1
      %s1322 = scalar_lea.vmem %s13, %s1321
      %p1323 = scmp.lt.s32.totalorder %s78, 1
      %s1324 = scalar_select %p1323, %s78, 1
      %s1325 = scalar_lea.vmem %s15, %s1324
      %p1326 = scmp.lt.s32.totalorder %s78, 1
      %s1327 = scalar_select %p1326, %s78, 1
      %s1328 = scalar_lea.vmem %s17, %s1327
      %p1329 = scmp.lt.s32.totalorder %s78, 1
      %s1330 = scalar_select %p1329, %s78, 1
      %s1331 = scalar_lea.vmem %s19, %s1330
      %p1332 = scmp.lt.s32.totalorder %s78, 1
      %s1333 = scalar_select %p1332, %s78, 1
      %s1334 = smul.addr %s1333, 6
      %s1335 = scalar_lea.vmem %s21, %s1334
      %p1336 = scmp.lt.s32.totalorder %s78, 1
      %s1337 = scalar_select %p1336, %s78, 1
      %s1338 = smul.addr %s1337, 6
      %s1339 = scalar_lea.vmem %s23, %s1338
      %p1340 = scmp.lt.s32.totalorder %s78, 1
      %s1341 = scalar_select %p1340, %s78, 1
      %s1342 = smul.addr %s1341, 4
      %s1343 = smul.addr %s1342, 4
      %s1344 = scalar_lea.vmem %s25, %s1343
      %p1345 = scmp.lt.s32.totalorder %s78, 1
      %s1346 = scalar_select %p1345, %s78, 1
      %s1347 = scalar_lea.vmem %s27, %s1346
      %p1348 = scmp.lt.s32.totalorder %s78, 1
      %s1349 = scalar_select %p1348, %s78, 1
      %s1350 = smul.addr %s1349, 4
      %s1351 = smul.addr %s1350, 4
      %s1352 = scalar_lea.vmem %s29, %s1351
      %p1353 = scmp.lt.s32.totalorder %s78, 1
      %s1354 = scalar_select %p1353, %s78, 1
      %s1355 = scalar_lea.vmem %s31, %s1354
      %p1356 = scmp.lt.s32.totalorder %s78, 1
      %s1357 = scalar_select %p1356, %s78, 1
      %s1358 = smul.addr %s1357, 4
      %s1359 = smul.addr %s1358, 4
      %s1360 = scalar_lea.vmem %s33, %s1359
      %p1361 = scmp.lt.s32.totalorder %s78, 1
      %s1362 = scalar_select %p1361, %s78, 1
      %s1363 = scalar_lea.vmem %s35, %s1362
      %p1364 = scmp.lt.s32.totalorder %s78, 1
      %s1365 = scalar_select %p1364, %s78, 1
      %s1366 = smul.addr %s1365, 4
      %s1367 = smul.addr %s1366, 4
      %s1368 = scalar_lea.vmem %s37, %s1367
      %p1369 = scmp.lt.s32.totalorder %s78, 1
      %s1370 = scalar_select %p1369, %s78, 1
      %s1371 = scalar_lea.vmem %s39, %s1370
      %p1372 = scmp.lt.s32.totalorder %s78, 1
      %s1373 = scalar_select %p1372, %s78, 1
      %s1374 = smul.addr %s1373, 96
      %s1375 = smul.addr %s1374, 4
      %s1376 = scalar_lea.vmem %s41, %s1375
      %p1377 = scmp.lt.s32.totalorder %s78, 1
      %s1378 = scalar_select %p1377, %s78, 1
      %s1379 = scalar_lea.vmem %s43, %s1378
      %p1380 = scmp.lt.s32.totalorder %s78, 1
      %s1381 = scalar_select %p1380, %s78, 1
      %s1382 = smul.addr %s1381, 4
      %s1383 = smul.addr %s1382, 4
      %s1384 = scalar_lea.vmem %s45, %s1383
      %p1385 = scmp.lt.s32.totalorder %s78, 1
      %s1386 = scalar_select %p1385, %s78, 1
      %s1387 = scalar_lea.vmem %s47, %s1386
      %p1388 = scmp.lt.s32.totalorder %s78, 1
      %s1389 = scalar_select %p1388, %s78, 1
      %s1390 = smul.addr %s1389, 4
      %s1391 = smul.addr %s1390, 4
      %s1392 = scalar_lea.vmem %s49, %s1391
      %p1393 = scmp.lt.s32.totalorder %s78, 1
      %s1394 = scalar_select %p1393, %s78, 1
      %s1395 = scalar_lea.vmem %s51, %s1394
      %p1396 = scmp.lt.s32.totalorder %s78, 1
      %s1397 = scalar_select %p1396, %s78, 1
      %s1398 = smul.addr %s1397, 24
      %s1399 = smul.addr %s1398, 4
      %s1400 = scalar_lea.vmem %s53, %s1399
      %p1401 = scmp.lt.s32.totalorder %s78, 1
      %s1402 = scalar_select %p1401, %s78, 1
      %s1403 = smul.addr %s1402, 6
      %s1404 = scalar_lea.vmem %s55, %s1403
      %p1405 = scmp.lt.s32.totalorder %s77, 1
      %s1406 = scalar_select %p1405, %s77, 1
      %s1407 = smul.addr %s1406, 8
      %s1408 = scalar_lea.vmem %s57, %s1407
      %p1409 = scmp.lt.s32.totalorder %s77, 1
      %s1410 = scalar_select %p1409, %s77, 1
      %s1411 = smul.addr %s1410, 6
      %s1412 = smul.addr %s1411, 8
      %s1413 = scalar_lea.vmem %s59, %s1412
      %p1414 = scmp.lt.s32.totalorder %s77, 1
      %s1415 = scalar_select %p1414, %s77, 1
      %s1416 = smul.addr %s1415, 2
      %s1417 = smul.addr %s1416, 8
      %s1418 = scalar_lea.vmem %s61, %s1417
      %p1420 = scmp.eq.s32.totalorder %s78, 0
      // Predicated region
      $region133: #{run.1} parent=131 // pred_check
        %p1421 = pneg %p1420
      $region134: #{run.1} parent=131 // pred_check_branch
        %1423 = sbr.rel (%p1421) target = $region136
      $region135: #{run.1} parent=131 // pred_region
        %v1424 = vld [vmem:[%s1300] sm:$0xff]
        %vm1425 = vcmask 261120
        %1426 = vst.msk [vmem:[#allocation2] sm:$0xff] %vm1425, %v1424
        %v1427 = vld [vmem:[%s1319] sm:$0xff]
        %v1428 = vld [vmem:[%s1319 + $0x8] sm:$0xff]
        %v1429 = vld [vmem:[%s1319 + $0x10] sm:$0xff]
        %v1430 = vld [vmem:[%s1319 + $0x18] sm:$0xff]
        %v1431 = vld [vmem:[%s1319 + $0x20] sm:$0xff]
        %v1432 = vld [vmem:[%s1319 + $0x28] sm:$0xff]
        %1433 = vst [vmem:[#allocation3] sm:$0xff] %v1427
        %1434 = vst [vmem:[#allocation3 + $0x8] sm:$0xff] %v1428
        %1435 = vst [vmem:[#allocation3 + $0x10] sm:$0xff] %v1429
        %1436 = vst [vmem:[#allocation3 + $0x18] sm:$0xff] %v1430
        %1437 = vst [vmem:[#allocation3 + $0x20] sm:$0xff] %v1431
        %1438 = vst [vmem:[#allocation3 + $0x28] sm:$0xff] %v1432
        %v1439 = vld [vmem:[%s1309] sm:$0xff]
        %v1440 = vld [vmem:[%s1309 + $0x8] sm:$0xff]
        %1441 = vst.msk [vmem:[#allocation4] sm:$0xff] %vm1425, %v1439
        %1442 = vst.msk [vmem:[#allocation4 + $0x8] sm:$0xff] %vm1425, %v1440
      $region136: #{run.1} parent=131 // pred_fallthru
        _
      %v1443 = vld [vmem:[#allocation2] sm:$0xff]
      %v1444 = vld [vmem:[#allocation3] sm:$0xff]
      %v1445 = vld [vmem:[#allocation3 + $0x8] sm:$0xff]
      %v1446 = vld [vmem:[#allocation3 + $0x10] sm:$0xff]
      %v1447 = vld [vmem:[#allocation3 + $0x18] sm:$0xff]
      %v1448 = vld [vmem:[#allocation3 + $0x20] sm:$0xff]
      %v1449 = vld [vmem:[#allocation3 + $0x28] sm:$0xff]
      %v1450 = vld [vmem:[#allocation4] sm:$0xff]
      %v1451 = vld [vmem:[#allocation4 + $0x8] sm:$0xff]
      %v1452 = vld [vmem:[%s1304] sm:$0xff]
      %v1453 = vld [vmem:[%s1314] sm:$0xff]
      %v1454 = vld [vmem:[%s1314 + $0x8] sm:$0xff]
      %vm1455 = vcmask 261120
      %v1456 = vsel %vm1455, %v1443, 0.0
      %1457 = vadd.xlane.f32.xlu0 %v1456
      %v1458 = vpop.xlane.xlu0 %1457
      %v1459 = vrcp.pop 32.0
      %v1460 = vmul.f32 32.0, %v1459
      %v1461 = vsub.f32 1.0, %v1460
      %v1462 = vmul.f32 %v1459, %v1461
      %v1463 = vadd.f32 %v1459, %v1462
      %vm1464 = vweird.f32 %v1459
      %v1465 = vsel %vm1464, %v1459, %v1463
      %v1466 = vmul.f32 %v1458, %v1465
      %v1467 = vsub.f32 %v1443, %v1466
      %v1468 = vmul.f32 %v1467, %v1467
      %v1469 = vsel %vm1455, %v1468, 0.0
      %1470 = vadd.xlane.f32.xlu0 %v1469
      %v1471 = vpop.xlane.xlu0 %1470
      %v1472 = vmul.f32 %v1471, %v1465
      %v1473 = vadd.f32 %v1472, 1e-05
      %v1474 = vrsqrt.pop %v1473
      %v1475 = vmul.f32 %v1474, %v1473
      %v1476 = vmul.f32 %v1475, %v1474
      %v1477 = vmul.f32 0.5, %v1476
      %v1478 = vsub.f32 1.5, %v1477
      %v1479 = vmul.f32 %v1474, %v1478
      %vm1480 = vweird.f32 %v1473
      %vm1481 = vweird.f32 %v1474
      %vm1482 = vmor %vm1480, %vm1481
      %v1483 = vsel %vm1482, %v1474, %v1479
      %v1484 = vmul.f32 %v1467, %v1483
      %v1485 = vld [vmem:[%s1322] sm:$0x1]
      %v1487 = vperm.slane %v1485, 0
      %v1489 = vmul.f32 %v1484, %v1487
      %v1490 = vld [vmem:[%s1325] sm:$0x1]
      %v1492 = vperm.slane %v1490, 0
      %v1494 = vadd.f32 %v1489, %v1492
      %v1495 = vsel %vm1455, %v1450, 0.0
      %1496 = vadd.xlane.f32.xlu0 %v1495
      %v1497 = vpop.xlane.xlu0 %1496
      %v1498 = vsel %vm1455, %v1451, 0.0
      %1499 = vadd.xlane.f32.xlu0 %v1498
      %v1500 = vpop.xlane.xlu0 %1499
      %v1501 = vmul.f32 %v1497, %v1465
      %v1502 = vmul.f32 %v1500, %v1465
      %v1503 = vsub.f32 %v1450, %v1501
      %v1504 = vsub.f32 %v1451, %v1502
      %v1505 = vmul.f32 %v1503, %v1503
      %v1506 = vmul.f32 %v1504, %v1504
      %v1507 = vsel %vm1455, %v1505, 0.0
      %1508 = vadd.xlane.f32.xlu0 %v1507
      %v1509 = vpop.xlane.xlu0 %1508
      %v1510 = vsel %vm1455, %v1506, 0.0
      %1511 = vadd.xlane.f32.xlu0 %v1510
      %v1512 = vpop.xlane.xlu0 %1511
      %v1513 = vmul.f32 %v1509, %v1465
      %v1514 = vmul.f32 %v1512, %v1465
      %v1515 = vadd.f32 %v1513, 1e-05
      %v1516 = vadd.f32 %v1514, 1e-05
      %v1517 = vrsqrt.pop %v1515
      %v1518 = vmul.f32 %v1517, %v1515
      %v1519 = vmul.f32 %v1518, %v1517
      %v1520 = vmul.f32 0.5, %v1519
      %v1521 = vsub.f32 1.5, %v1520
      %v1522 = vmul.f32 %v1517, %v1521
      %vm1523 = vweird.f32 %v1515
      %vm1524 = vweird.f32 %v1517
      %vm1525 = vmor %vm1523, %vm1524
      %v1526 = vsel %vm1525, %v1517, %v1522
      %v1527 = vrsqrt.pop %v1516
      %v1528 = vmul.f32 %v1527, %v1516
      %v1529 = vmul.f32 %v1528, %v1527
      %v1530 = vmul.f32 0.5, %v1529
      %v1531 = vsub.f32 1.5, %v1530
      %v1532 = vmul.f32 %v1527, %v1531
      %vm1533 = vweird.f32 %v1516
      %vm1534 = vweird.f32 %v1527
      %vm1535 = vmor %vm1533, %vm1534
      %v1536 = vsel %vm1535, %v1527, %v1532
      %v1537 = vmul.f32 %v1503, %v1526
      %v1538 = vmul.f32 %v1504, %v1536
      %v1539 = vld [vmem:[%s1328] sm:$0x1]
      %v1541 = vperm.slane %v1539, 0
      %v1543 = vmul.f32 %v1537, %v1541
      %v1544 = vmul.f32 %v1538, %v1541
      %v1545 = vld [vmem:[%s1331] sm:$0x1]
      %v1547 = vperm.slane %v1545, 0
      %v1549 = vadd.f32 %v1543, %v1547
      %v1550 = vadd.f32 %v1544, %v1547
      %v1551 = vadd.f32 %v1444, %v1445
      %v1552 = vadd.f32 %v1551, %v1446
      %v1553 = vadd.f32 %v1552, %v1447
      %v1554 = vadd.f32 %v1553, %v1448
      %v1555 = vadd.f32 %v1554, %v1449
      %1556 = vadd.xlane.f32.xlu0 %v1555
      %v1557 = vpop.xlane.xlu0 %1556
      %v1558 = vrcp.pop 768.0
      %v1559 = vmul.f32 768.0, %v1558
      %v1560 = vsub.f32 1.0, %v1559
      %v1561 = vmul.f32 %v1558, %v1560
      %v1562 = vadd.f32 %v1558, %v1561
      %vm1563 = vweird.f32 %v1558
      %v1564 = vsel %vm1563, %v1558, %v1562
      %v1565 = vmul.f32 %v1557, %v1564
      %v1566 = vsub.f32 %v1444, %v1565
      %v1567 = vsub.f32 %v1445, %v1565
      %v1568 = vsub.f32 %v1446, %v1565
      %v1569 = vsub.f32 %v1447, %v1565
      %v1570 = vsub.f32 %v1448, %v1565
      %v1571 = vsub.f32 %v1449, %v1565
      %v1572 = vmul.f32 %v1566, %v1566
      %v1573 = vmul.f32 %v1567, %v1567
      %v1574 = vmul.f32 %v1568, %v1568
      %v1575 = vmul.f32 %v1569, %v1569
      %v1576 = vmul.f32 %v1570, %v1570
      %v1577 = vmul.f32 %v1571, %v1571
      %v1578 = vadd.f32 %v1572, %v1573
      %v1579 = vadd.f32 %v1578, %v1574
      %v1580 = vadd.f32 %v1579, %v1575
      %v1581 = vadd.f32 %v1580, %v1576
      %v1582 = vadd.f32 %v1581, %v1577
      %1583 = vadd.xlane.f32.xlu0 %v1582
      %v1584 = vpop.xlane.xlu0 %1583
      %v1585 = vmul.f32 %v1584, %v1564
      %v1586 = vadd.f32 %v1585, 1e-05
      %v1587 = vrsqrt.pop %v1586
      %v1588 = vmul.f32 %v1587, %v1586
      %v1589 = vmul.f32 %v1588, %v1587
      %v1590 = vmul.f32 0.5, %v1589
      %v1591 = vsub.f32 1.5, %v1590
      %v1592 = vmul.f32 %v1587, %v1591
      %vm1593 = vweird.f32 %v1586
      %vm1594 = vweird.f32 %v1587
      %vm1595 = vmor %vm1593, %vm1594
      %v1596 = vsel %vm1595, %v1587, %v1592
      %v1597 = vmul.f32 %v1566, %v1596
      %v1598 = vmul.f32 %v1567, %v1596
      %v1599 = vmul.f32 %v1568, %v1596
      %v1600 = vmul.f32 %v1569, %v1596
      %v1601 = vmul.f32 %v1570, %v1596
      %v1602 = vmul.f32 %v1571, %v1596
      %v1603 = vld [vmem:[%s1335] sm:$0x3f]
      %v1605 = vperm.slane %v1603, 0
      %v1606 = vperm.slane %v1603, 1
      %v1607 = vperm.slane %v1603, 2
      %v1608 = vperm.slane %v1603, 3
      %v1609 = vperm.slane %v1603, 4
      %v1610 = vperm.slane %v1603, 5
      %v1617 = vmul.f32 %v1597, %v1605
      %v1618 = vmul.f32 %v1598, %v1606
      %v1619 = vmul.f32 %v1599, %v1607
      %v1620 = vmul.f32 %v1600, %v1608
      %v1621 = vmul.f32 %v1601, %v1609
      %v1622 = vmul.f32 %v1602, %v1610
      %v1623 = vld [vmem:[%s1339] sm:$0x3f]
      %v1625 = vperm.slane %v1623, 0
      %v1626 = vperm.slane %v1623, 1
      %v1627 = vperm.slane %v1623, 2
      %v1628 = vperm.slane %v1623, 3
      %v1629 = vperm.slane %v1623, 4
      %v1630 = vperm.slane %v1623, 5
      %v1637 = vadd.f32 %v1617, %v1625
      %v1638 = vadd.f32 %v1618, %v1626
      %v1639 = vadd.f32 %v1619, %v1627
      %v1640 = vadd.f32 %v1620, %v1628
      %v1641 = vadd.f32 %v1621, %v1629
      %v1642 = vadd.f32 %v1622, %v1630
      %v1643 = vadd.f32 %v1494, %v1452
      %v1644 = vadd.f32 %v1549, %v1453
      %v1645 = vadd.f32 %v1550, %v1454
      %v1646 = vpack.c.bf16 %v1643, %v1643
      %v1647 = vld [vmem:[%s1344] sm:$0xf]
      %v1648 = vld [vmem:[%s1344 + $0x4] sm:$0xf]
      %v1649 = vld [vmem:[%s1344 + $0x8] sm:$0xf]
      %v1650 = vld [vmem:[%s1344 + $0xc] sm:$0xf]
      %v1651 = vld [vmem:[%s1347] sm:$0x1]
      %v1653 = vperm.slane %v1651, 0
      %v1659 = vunpack.c.l.b16 %v1647
      %v1660 = vunpack.c.l.b16 %v1648
      %v1661 = vunpack.c.l.b16 %v1649
      %v1662 = vunpack.c.l.b16 %v1650
      %v1663 = vpack.c.b16 %v1660, %v1659
      %v1664 = vpack.c.b16 %v1662, %v1661
      %v1668 = vsel %vm1455, %v1646, 0
      %1670 = vmatpush.bf16.msra.mxu0 0
      %1671 = vmatpush.bf16.msra.mxu0 0
      %1672 = vmatpush.bf16.msra.mxu0 0
      %1673 = vmatpush.bf16.msra.mxu0 0
      %1674 = vmatpush.bf16.msra.mxu0 0
      %1675 = vmatpush.bf16.msra.mxu0 0
      %1676 = vmatpush.bf16.msra.mxu0 %v1664
      %1677 = vmatpush.bf16.msra.mxu0 %v1663
      %1678 = vmatmul.bf16.gmra.mxu0 %v1668
      %v1679 = vpop.f32.mrf.mxu0
      %v1680 = vadd.f32 %v1653, %v1679
      %v1681 = vpop.f32.mrf.mxu0
      %1682 = vdwg.mxu0
      %v1683 = vpack.c.bf16 %v1494, %v1494
      %v1684 = vld [vmem:[%s1352] sm:$0xf]
      %v1685 = vld [vmem:[%s1352 + $0x4] sm:$0xf]
      %v1686 = vld [vmem:[%s1352 + $0x8] sm:$0xf]
      %v1687 = vld [vmem:[%s1352 + $0xc] sm:$0xf]
      %v1688 = vld [vmem:[%s1355] sm:$0x1]
      %v1690 = vperm.slane %v1688, 0
      %v1696 = vunpack.c.l.b16 %v1684
      %v1697 = vunpack.c.l.b16 %v1685
      %v1698 = vunpack.c.l.b16 %v1686
      %v1699 = vunpack.c.l.b16 %v1687
      %v1700 = vpack.c.b16 %v1697, %v1696
      %v1701 = vpack.c.b16 %v1699, %v1698
      %v1705 = vsel %vm1455, %v1683, 0
      %1707 = vmatpush.bf16.msra.mxu0 0
      %1708 = vmatpush.bf16.msra.mxu0 0
      %1709 = vmatpush.bf16.msra.mxu0 0
      %1710 = vmatpush.bf16.msra.mxu0 0
      %1711 = vmatpush.bf16.msra.mxu0 0
      %1712 = vmatpush.bf16.msra.mxu0 0
      %1713 = vmatpush.bf16.msra.mxu0 %v1701
      %1714 = vmatpush.bf16.msra.mxu0 %v1700
      %1715 = vmatmul.bf16.gmra.mxu0 %v1705
      %v1716 = vpop.f32.mrf.mxu0
      %v1717 = vadd.f32 %v1690, %v1716
      %v1718 = vpop.f32.mrf.mxu0
      %1719 = vdwg.mxu0
      %v1720 = vpack.c.bf16 %v1645, %v1644
      %v1721 = vld [vmem:[%s1360] sm:$0xf]
      %v1722 = vld [vmem:[%s1360 + $0x4] sm:$0xf]
      %v1723 = vld [vmem:[%s1360 + $0x8] sm:$0xf]
      %v1724 = vld [vmem:[%s1360 + $0xc] sm:$0xf]
      %v1725 = vld [vmem:[%s1363] sm:$0x1]
      %v1727 = vperm.slane %v1725, 0
      %v1733 = vunpack.c.l.b16 %v1721
      %v1734 = vunpack.c.l.b16 %v1722
      %v1735 = vunpack.c.l.b16 %v1723
      %v1736 = vunpack.c.l.b16 %v1724
      %v1737 = vpack.c.b16 %v1734, %v1733
      %v1738 = vpack.c.b16 %v1736, %v1735
      %v1742 = vsel %vm1455, %v1720, 0
      %1744 = vmatpush.bf16.msra.mxu0 0
      %1745 = vmatpush.bf16.msra.mxu0 0
      %1746 = vmatpush.bf16.msra.mxu0 0
      %1747 = vmatpush.bf16.msra.mxu0 0
      %1748 = vmatpush.bf16.msra.mxu0 0
      %1749 = vmatpush.bf16.msra.mxu0 0
      %1750 = vmatpush.bf16.msra.mxu0 %v1738
      %1751 = vmatpush.bf16.msra.mxu0 %v1737
      %1752 = vmatmul.bf16.gmra.mxu0 %v1742
      %v1753 = vpop.f32.mrf.mxu0
      %v1754 = vadd.f32 %v1727, %v1753
      %v1755 = vpop.f32.mrf.mxu0
      %v1756 = vadd.f32 %v1727, %v1755
      %1757 = vdwg.mxu0
      %v1758 = vpack.c.bf16 %v1550, %v1549
      %v1759 = vld [vmem:[%s1368] sm:$0xf]
      %v1760 = vld [vmem:[%s1368 + $0x4] sm:$0xf]
      %v1761 = vld [vmem:[%s1368 + $0x8] sm:$0xf]
      %v1762 = vld [vmem:[%s1368 + $0xc] sm:$0xf]
      %v1763 = vld [vmem:[%s1371] sm:$0x1]
      %v1765 = vperm.slane %v1763, 0
      %v1771 = vunpack.c.l.b16 %v1759
      %v1772 = vunpack.c.l.b16 %v1760
      %v1773 = vunpack.c.l.b16 %v1761
      %v1774 = vunpack.c.l.b16 %v1762
      %v1775 = vpack.c.b16 %v1772, %v1771
      %v1776 = vpack.c.b16 %v1774, %v1773
      %v1780 = vsel %vm1455, %v1758, 0
      %1782 = vmatpush.bf16.msra.mxu0 0
      %1783 = vmatpush.bf16.msra.mxu0 0
      %1784 = vmatpush.bf16.msra.mxu0 0
      %1785 = vmatpush.bf16.msra.mxu0 0
      %1786 = vmatpush.bf16.msra.mxu0 0
      %1787 = vmatpush.bf16.msra.mxu0 0
      %1788 = vmatpush.bf16.msra.mxu0 %v1776
      %1789 = vmatpush.bf16.msra.mxu0 %v1775
      %1790 = vmatmul.bf16.gmra.mxu0 %v1780
      %v1791 = vpop.f32.mrf.mxu0
      %v1792 = vadd.f32 %v1765, %v1791
      %v1793 = vpop.f32.mrf.mxu0
      %v1794 = vadd.f32 %v1765, %v1793
      %1795 = vdwg.mxu0
      %v1796 = vpack.c.bf16 %v1637, %v1637
      %v1797 = vpack.c.bf16 %v1638, %v1638
      %v1798 = vpack.c.bf16 %v1639, %v1639
      %v1799 = vpack.c.bf16 %v1640, %v1640
      %v1800 = vpack.c.bf16 %v1641, %v1641
      %v1801 = vpack.c.bf16 %v1642, %v1642
      %v1802 = vld [vmem:[%s1376] sm:$0xf]
      %v1803 = vld [vmem:[%s1376 + $0x4] sm:$0xf]
      %v1804 = vld [vmem:[%s1376 + $0x8] sm:$0xf]
      %v1805 = vld [vmem:[%s1376 + $0xc] sm:$0xf]
      %v1806 = vld [vmem:[%s1376 + $0x10] sm:$0xf]
      %v1807 = vld [vmem:[%s1376 + $0x14] sm:$0xf]
      %v1808 = vld [vmem:[%s1376 + $0x18] sm:$0xf]
      %v1809 = vld [vmem:[%s1376 + $0x1c] sm:$0xf]
      %v1810 = vld [vmem:[%s1376 + $0x20] sm:$0xf]
      %v1811 = vld [vmem:[%s1376 + $0x24] sm:$0xf]
      %v1812 = vld [vmem:[%s1376 + $0x28] sm:$0xf]
      %v1813 = vld [vmem:[%s1376 + $0x2c] sm:$0xf]
      %v1814 = vld [vmem:[%s1376 + $0x30] sm:$0xf]
      %v1815 = vld [vmem:[%s1376 + $0x34] sm:$0xf]
      %v1816 = vld [vmem:[%s1376 + $0x38] sm:$0xf]
      %v1817 = vld [vmem:[%s1376 + $0x3c] sm:$0xf]
      %v1818 = vld [vmem:[%s1376 + $0x40] sm:$0xf]
      %v1819 = vld [vmem:[%s1376 + $0x44] sm:$0xf]
      %v1820 = vld [vmem:[%s1376 + $0x48] sm:$0xf]
      %v1821 = vld [vmem:[%s1376 + $0x4c] sm:$0xf]
      %v1822 = vld [vmem:[%s1376 + $0x50] sm:$0xf]
      %v1823 = vld [vmem:[%s1376 + $0x54] sm:$0xf]
      %v1824 = vld [vmem:[%s1376 + $0x58] sm:$0xf]
      %v1825 = vld [vmem:[%s1376 + $0x5c] sm:$0xf]
      %v1826 = vld [vmem:[%s1376 + $0x60] sm:$0xf]
      %v1827 = vld [vmem:[%s1376 + $0x64] sm:$0xf]
      %v1828 = vld [vmem:[%s1376 + $0x68] sm:$0xf]
      %v1829 = vld [vmem:[%s1376 + $0x6c] sm:$0xf]
      %v1830 = vld [vmem:[%s1376 + $0x70] sm:$0xf]
      %v1831 = vld [vmem:[%s1376 + $0x74] sm:$0xf]
      %v1832 = vld [vmem:[%s1376 + $0x78] sm:$0xf]
      %v1833 = vld [vmem:[%s1376 + $0x7c] sm:$0xf]
      %v1834 = vld [vmem:[%s1376 + $0x80] sm:$0xf]
      %v1835 = vld [vmem:[%s1376 + $0x84] sm:$0xf]
      %v1836 = vld [vmem:[%s1376 + $0x88] sm:$0xf]
      %v1837 = vld [vmem:[%s1376 + $0x8c] sm:$0xf]
      %v1838 = vld [vmem:[%s1376 + $0x90] sm:$0xf]
      %v1839 = vld [vmem:[%s1376 + $0x94] sm:$0xf]
      %v1840 = vld [vmem:[%s1376 + $0x98] sm:$0xf]
      %v1841 = vld [vmem:[%s1376 + $0x9c] sm:$0xf]
      %v1842 = vld [vmem:[%s1376 + $0xa0] sm:$0xf]
      %v1843 = vld [vmem:[%s1376 + $0xa4] sm:$0xf]
      %v1844 = vld [vmem:[%s1376 + $0xa8] sm:$0xf]
      %v1845 = vld [vmem:[%s1376 + $0xac] sm:$0xf]
      %v1846 = vld [vmem:[%s1376 + $0xb0] sm:$0xf]
      %v1847 = vld [vmem:[%s1376 + $0xb4] sm:$0xf]
      %v1848 = vld [vmem:[%s1376 + $0xb8] sm:$0xf]
      %v1849 = vld [vmem:[%s1376 + $0xbc] sm:$0xf]
      %v1850 = vld [vmem:[%s1376 + $0xc0] sm:$0xf]
      %v1851 = vld [vmem:[%s1376 + $0xc4] sm:$0xf]
      %v1852 = vld [vmem:[%s1376 + $0xc8] sm:$0xf]
      %v1853 = vld [vmem:[%s1376 + $0xcc] sm:$0xf]
      %v1854 = vld [vmem:[%s1376 + $0xd0] sm:$0xf]
      %v1855 = vld [vmem:[%s1376 + $0xd4] sm:$0xf]
      %v1856 = vld [vmem:[%s1376 + $0xd8] sm:$0xf]
      %v1857 = vld [vmem:[%s1376 + $0xdc] sm:$0xf]
      %v1858 = vld [vmem:[%s1376 + $0xe0] sm:$0xf]
      %v1859 = vld [vmem:[%s1376 + $0xe4] sm:$0xf]
      %v1860 = vld [vmem:[%s1376 + $0xe8] sm:$0xf]
      %v1861 = vld [vmem:[%s1376 + $0xec] sm:$0xf]
      %v1862 = vld [vmem:[%s1376 + $0xf0] sm:$0xf]
      %v1863 = vld [vmem:[%s1376 + $0xf4] sm:$0xf]
      %v1864 = vld [vmem:[%s1376 + $0xf8] sm:$0xf]
      %v1865 = vld [vmem:[%s1376 + $0xfc] sm:$0xf]
      %v1866 = vld [vmem:[%s1376 + $0x100] sm:$0xf]
      %v1867 = vld [vmem:[%s1376 + $0x104] sm:$0xf]
      %v1868 = vld [vmem:[%s1376 + $0x108] sm:$0xf]
      %v1869 = vld [vmem:[%s1376 + $0x10c] sm:$0xf]
      %v1870 = vld [vmem:[%s1376 + $0x110] sm:$0xf]
      %v1871 = vld [vmem:[%s1376 + $0x114] sm:$0xf]
      %v1872 = vld [vmem:[%s1376 + $0x118] sm:$0xf]
      %v1873 = vld [vmem:[%s1376 + $0x11c] sm:$0xf]
      %v1874 = vld [vmem:[%s1376 + $0x120] sm:$0xf]
      %v1875 = vld [vmem:[%s1376 + $0x124] sm:$0xf]
      %v1876 = vld [vmem:[%s1376 + $0x128] sm:$0xf]
      %v1877 = vld [vmem:[%s1376 + $0x12c] sm:$0xf]
      %v1878 = vld [vmem:[%s1376 + $0x130] sm:$0xf]
      %v1879 = vld [vmem:[%s1376 + $0x134] sm:$0xf]
      %v1880 = vld [vmem:[%s1376 + $0x138] sm:$0xf]
      %v1881 = vld [vmem:[%s1376 + $0x13c] sm:$0xf]
      %v1882 = vld [vmem:[%s1376 + $0x140] sm:$0xf]
      %v1883 = vld [vmem:[%s1376 + $0x144] sm:$0xf]
      %v1884 = vld [vmem:[%s1376 + $0x148] sm:$0xf]
      %v1885 = vld [vmem:[%s1376 + $0x14c] sm:$0xf]
      %v1886 = vld [vmem:[%s1376 + $0x150] sm:$0xf]
      %v1887 = vld [vmem:[%s1376 + $0x154] sm:$0xf]
      %v1888 = vld [vmem:[%s1376 + $0x158] sm:$0xf]
      %v1889 = vld [vmem:[%s1376 + $0x15c] sm:$0xf]
      %v1890 = vld [vmem:[%s1376 + $0x160] sm:$0xf]
      %v1891 = vld [vmem:[%s1376 + $0x164] sm:$0xf]
      %v1892 = vld [vmem:[%s1376 + $0x168] sm:$0xf]
      %v1893 = vld [vmem:[%s1376 + $0x16c] sm:$0xf]
      %v1894 = vld [vmem:[%s1376 + $0x170] sm:$0xf]
      %v1895 = vld [vmem:[%s1376 + $0x174] sm:$0xf]
      %v1896 = vld [vmem:[%s1376 + $0x178] sm:$0xf]
      %v1897 = vld [vmem:[%s1376 + $0x17c] sm:$0xf]
      %v1898 = vld [vmem:[%s1379] sm:$0x1]
      %v1900 = vperm.slane %v1898, 0
      %v1998 = vunpack.c.l.b16 %v1802
      %v1999 = vunpack.c.l.b16 %v1803
      %v2000 = vunpack.c.l.b16 %v1804
      %v2001 = vunpack.c.l.b16 %v1805
      %v2002 = vunpack.c.l.b16 %v1806
      %v2003 = vunpack.c.l.b16 %v1807
      %v2004 = vunpack.c.l.b16 %v1808
      %v2005 = vunpack.c.l.b16 %v1809
      %v2006 = vunpack.c.l.b16 %v1810
      %v2007 = vunpack.c.l.b16 %v1811
      %v2008 = vunpack.c.l.b16 %v1812
      %v2009 = vunpack.c.l.b16 %v1813
      %v2010 = vunpack.c.l.b16 %v1814
      %v2011 = vunpack.c.l.b16 %v1815
      %v2012 = vunpack.c.l.b16 %v1816
      %v2013 = vunpack.c.l.b16 %v1817
      %v2014 = vunpack.c.l.b16 %v1818
      %v2015 = vunpack.c.l.b16 %v1819
      %v2016 = vunpack.c.l.b16 %v1820
      %v2017 = vunpack.c.l.b16 %v1821
      %v2018 = vunpack.c.l.b16 %v1822
      %v2019 = vunpack.c.l.b16 %v1823
      %v2020 = vunpack.c.l.b16 %v1824
      %v2021 = vunpack.c.l.b16 %v1825
      %v2022 = vunpack.c.l.b16 %v1826
      %v2023 = vunpack.c.l.b16 %v1827
      %v2024 = vunpack.c.l.b16 %v1828
      %v2025 = vunpack.c.l.b16 %v1829
      %v2026 = vunpack.c.l.b16 %v1830
      %v2027 = vunpack.c.l.b16 %v1831
      %v2028 = vunpack.c.l.b16 %v1832
      %v2029 = vunpack.c.l.b16 %v1833
      %v2030 = vunpack.c.l.b16 %v1834
      %v2031 = vunpack.c.l.b16 %v1835
      %v2032 = vunpack.c.l.b16 %v1836
      %v2033 = vunpack.c.l.b16 %v1837
      %v2034 = vunpack.c.l.b16 %v1838
      %v2035 = vunpack.c.l.b16 %v1839
      %v2036 = vunpack.c.l.b16 %v1840
      %v2037 = vunpack.c.l.b16 %v1841
      %v2038 = vunpack.c.l.b16 %v1842
      %v2039 = vunpack.c.l.b16 %v1843
      %v2040 = vunpack.c.l.b16 %v1844
      %v2041 = vunpack.c.l.b16 %v1845
      %v2042 = vunpack.c.l.b16 %v1846
      %v2043 = vunpack.c.l.b16 %v1847
      %v2044 = vunpack.c.l.b16 %v1848
      %v2045 = vunpack.c.l.b16 %v1849
      %v2046 = vunpack.c.l.b16 %v1850
      %v2047 = vunpack.c.l.b16 %v1851
      %v2048 = vunpack.c.l.b16 %v1852
      %v2049 = vunpack.c.l.b16 %v1853
      %v2050 = vunpack.c.l.b16 %v1854
      %v2051 = vunpack.c.l.b16 %v1855
      %v2052 = vunpack.c.l.b16 %v1856
      %v2053 = vunpack.c.l.b16 %v1857
      %v2054 = vunpack.c.l.b16 %v1858
      %v2055 = vunpack.c.l.b16 %v1859
      %v2056 = vunpack.c.l.b16 %v1860
      %v2057 = vunpack.c.l.b16 %v1861
      %v2058 = vunpack.c.l.b16 %v1862
      %v2059 = vunpack.c.l.b16 %v1863
      %v2060 = vunpack.c.l.b16 %v1864
      %v2061 = vunpack.c.l.b16 %v1865
      %v2062 = vunpack.c.l.b16 %v1866
      %v2063 = vunpack.c.l.b16 %v1867
      %v2064 = vunpack.c.l.b16 %v1868
      %v2065 = vunpack.c.l.b16 %v1869
      %v2066 = vunpack.c.l.b16 %v1870
      %v2067 = vunpack.c.l.b16 %v1871
      %v2068 = vunpack.c.l.b16 %v1872
      %v2069 = vunpack.c.l.b16 %v1873
      %v2070 = vunpack.c.l.b16 %v1874
      %v2071 = vunpack.c.l.b16 %v1875
      %v2072 = vunpack.c.l.b16 %v1876
      %v2073 = vunpack.c.l.b16 %v1877
      %v2074 = vunpack.c.l.b16 %v1878
      %v2075 = vunpack.c.l.b16 %v1879
      %v2076 = vunpack.c.l.b16 %v1880
      %v2077 = vunpack.c.l.b16 %v1881
      %v2078 = vunpack.c.l.b16 %v1882
      %v2079 = vunpack.c.l.b16 %v1883
      %v2080 = vunpack.c.l.b16 %v1884
      %v2081 = vunpack.c.l.b16 %v1885
      %v2082 = vunpack.c.l.b16 %v1886
      %v2083 = vunpack.c.l.b16 %v1887
      %v2084 = vunpack.c.l.b16 %v1888
      %v2085 = vunpack.c.l.b16 %v1889
      %v2086 = vunpack.c.l.b16 %v1890
      %v2087 = vunpack.c.l.b16 %v1891
      %v2088 = vunpack.c.l.b16 %v1892
      %v2089 = vunpack.c.l.b16 %v1893
      %v2090 = vunpack.c.l.b16 %v1894
      %v2091 = vunpack.c.l.b16 %v1895
      %v2092 = vunpack.c.l.b16 %v1896
      %v2093 = vunpack.c.l.b16 %v1897
      %v2094 = vpack.c.b16 %v1999, %v1998
      %v2095 = vpack.c.b16 %v2001, %v2000
      %v2096 = vpack.c.b16 %v2003, %v2002
      %v2097 = vpack.c.b16 %v2005, %v2004
      %v2098 = vpack.c.b16 %v2007, %v2006
      %v2099 = vpack.c.b16 %v2009, %v2008
      %v2100 = vpack.c.b16 %v2011, %v2010
      %v2101 = vpack.c.b16 %v2013, %v2012
      %v2102 = vpack.c.b16 %v2015, %v2014
      %v2103 = vpack.c.b16 %v2017, %v2016
      %v2104 = vpack.c.b16 %v2019, %v2018
      %v2105 = vpack.c.b16 %v2021, %v2020
      %v2106 = vpack.c.b16 %v2023, %v2022
      %v2107 = vpack.c.b16 %v2025, %v2024
      %v2108 = vpack.c.b16 %v2027, %v2026
      %v2109 = vpack.c.b16 %v2029, %v2028
      %v2110 = vpack.c.b16 %v2031, %v2030
      %v2111 = vpack.c.b16 %v2033, %v2032
      %v2112 = vpack.c.b16 %v2035, %v2034
      %v2113 = vpack.c.b16 %v2037, %v2036
      %v2114 = vpack.c.b16 %v2039, %v2038
      %v2115 = vpack.c.b16 %v2041, %v2040
      %v2116 = vpack.c.b16 %v2043, %v2042
      %v2117 = vpack.c.b16 %v2045, %v2044
      %v2118 = vpack.c.b16 %v2047, %v2046
      %v2119 = vpack.c.b16 %v2049, %v2048
      %v2120 = vpack.c.b16 %v2051, %v2050
      %v2121 = vpack.c.b16 %v2053, %v2052
      %v2122 = vpack.c.b16 %v2055, %v2054
      %v2123 = vpack.c.b16 %v2057, %v2056
      %v2124 = vpack.c.b16 %v2059, %v2058
      %v2125 = vpack.c.b16 %v2061, %v2060
      %v2126 = vpack.c.b16 %v2063, %v2062
      %v2127 = vpack.c.b16 %v2065, %v2064
      %v2128 = vpack.c.b16 %v2067, %v2066
      %v2129 = vpack.c.b16 %v2069, %v2068
      %v2130 = vpack.c.b16 %v2071, %v2070
      %v2131 = vpack.c.b16 %v2073, %v2072
      %v2132 = vpack.c.b16 %v2075, %v2074
      %v2133 = vpack.c.b16 %v2077, %v2076
      %v2134 = vpack.c.b16 %v2079, %v2078
      %v2135 = vpack.c.b16 %v2081, %v2080
      %v2136 = vpack.c.b16 %v2083, %v2082
      %v2137 = vpack.c.b16 %v2085, %v2084
      %v2138 = vpack.c.b16 %v2087, %v2086
      %v2139 = vpack.c.b16 %v2089, %v2088
      %v2140 = vpack.c.b16 %v2091, %v2090
      %v2141 = vpack.c.b16 %v2093, %v2092
      %2190 = vmatpush.bf16.msra.mxu0 %v2101
      %2191 = vmatpush.bf16.msra.mxu0 %v2100
      %2192 = vmatpush.bf16.msra.mxu0 %v2099
      %2193 = vmatpush.bf16.msra.mxu0 %v2098
      %2194 = vmatpush.bf16.msra.mxu0 %v2097
      %2195 = vmatpush.bf16.msra.mxu0 %v2096
      %2196 = vmatpush.bf16.msra.mxu0 %v2095
      %2197 = vmatpush.bf16.msra.mxu0 %v2094
      %2198 = vmatmul.bf16.gmra.mxu0 %v1796
      %v2199 = vpop.f32.mrf.mxu0
      %v2200 = vadd.f32 %v1900, %v2199
      %v2201 = vpop.f32.mrf.mxu0
      %2202 = vdwg.mxu0
      %2203 = vmatpush.bf16.msra.mxu0 %v2109
      %2204 = vmatpush.bf16.msra.mxu0 %v2108
      %2205 = vmatpush.bf16.msra.mxu0 %v2107
      %2206 = vmatpush.bf16.msra.mxu0 %v2106
      %2207 = vmatpush.bf16.msra.mxu0 %v2105
      %2208 = vmatpush.bf16.msra.mxu0 %v2104
      %2209 = vmatpush.bf16.msra.mxu0 %v2103
      %2210 = vmatpush.bf16.msra.mxu0 %v2102
      %2211 = vmatmul.bf16.gmra.mxu0 %v1797
      %v2212 = vpop.f32.mrf.mxu0
      %v2213 = vadd.f32 %v2200, %v2212
      %v2214 = vpop.f32.mrf.mxu0
      %2215 = vdwg.mxu0
      %2216 = vmatpush.bf16.msra.mxu0 %v2117
      %2217 = vmatpush.bf16.msra.mxu0 %v2116
      %2218 = vmatpush.bf16.msra.mxu0 %v2115
      %2219 = vmatpush.bf16.msra.mxu0 %v2114
      %2220 = vmatpush.bf16.msra.mxu0 %v2113
      %2221 = vmatpush.bf16.msra.mxu0 %v2112
      %2222 = vmatpush.bf16.msra.mxu0 %v2111
      %2223 = vmatpush.bf16.msra.mxu0 %v2110
      %2224 = vmatmul.bf16.gmra.mxu0 %v1798
      %v2225 = vpop.f32.mrf.mxu0
      %v2226 = vadd.f32 %v2213, %v2225
      %v2227 = vpop.f32.mrf.mxu0
      %2228 = vdwg.mxu0
      %2229 = vmatpush.bf16.msra.mxu0 %v2125
      %2230 = vmatpush.bf16.msra.mxu0 %v2124
      %2231 = vmatpush.bf16.msra.mxu0 %v2123
      %2232 = vmatpush.bf16.msra.mxu0 %v2122
      %2233 = vmatpush.bf16.msra.mxu0 %v2121
      %2234 = vmatpush.bf16.msra.mxu0 %v2120
      %2235 = vmatpush.bf16.msra.mxu0 %v2119
      %2236 = vmatpush.bf16.msra.mxu0 %v2118
      %2237 = vmatmul.bf16.gmra.mxu0 %v1799
      %v2238 = vpop.f32.mrf.mxu0
      %v2239 = vadd.f32 %v2226, %v2238
      %v2240 = vpop.f32.mrf.mxu0
      %2241 = vdwg.mxu0
      %2242 = vmatpush.bf16.msra.mxu0 %v2133
      %2243 = vmatpush.bf16.msra.mxu0 %v2132
      %2244 = vmatpush.bf16.msra.mxu0 %v2131
      %2245 = vmatpush.bf16.msra.mxu0 %v2130
      %2246 = vmatpush.bf16.msra.mxu0 %v2129
      %2247 = vmatpush.bf16.msra.mxu0 %v2128
      %2248 = vmatpush.bf16.msra.mxu0 %v2127
      %2249 = vmatpush.bf16.msra.mxu0 %v2126
      %2250 = vmatmul.bf16.gmra.mxu0 %v1800
      %v2251 = vpop.f32.mrf.mxu0
      %v2252 = vadd.f32 %v2239, %v2251
      %v2253 = vpop.f32.mrf.mxu0
      %2254 = vdwg.mxu0
      %2255 = vmatpush.bf16.msra.mxu0 %v2141
      %2256 = vmatpush.bf16.msra.mxu0 %v2140
      %2257 = vmatpush.bf16.msra.mxu0 %v2139
      %2258 = vmatpush.bf16.msra.mxu0 %v2138
      %2259 = vmatpush.bf16.msra.mxu0 %v2137
      %2260 = vmatpush.bf16.msra.mxu0 %v2136
      %2261 = vmatpush.bf16.msra.mxu0 %v2135
      %2262 = vmatpush.bf16.msra.mxu0 %v2134
      %2263 = vmatmul.bf16.gmra.mxu0 %v1801
      %v2264 = vpop.f32.mrf.mxu0
      %v2265 = vadd.f32 %v2252, %v2264
      %v2266 = vpop.f32.mrf.mxu0
      %2267 = vdwg.mxu0
      %2268 = vst.msk [vmem:[#allocation5] sm:$0xff] %vm1455, %v1680
      %2270 = vrot.lane.b32.xlu0 %v1680, 96
      %v2271 = vpop.permute.xlu0 %2270
      %2273 = vst.msk [vmem:[#allocation6] sm:$0xff] %vm1455, %v2271
      %2274 = vst.msk [vmem:[#allocation7] sm:$0xff] %vm1455, %v1717
      %2275 = vst.msk [vmem:[#allocation5 + $0x8] sm:$0xff] %vm1455, %v2265
      %2277 = vrot.lane.b32.xlu0 %v2265, 96
      %v2278 = vpop.permute.xlu0 %2277
      %2280 = vst.msk [vmem:[#allocation6 + $0x8] sm:$0xff] %vm1455, %v2278
      %2281 = vrot.lane.b32.xlu0 %v2265, 64
      %v2282 = vpop.permute.xlu0 %2281
      %2284 = vst.msk [vmem:[#allocation7 + $0x8] sm:$0xff] %vm1455, %v2282
      %2285 = vst.msk [vmem:[#allocation5 + $0x10] sm:$0xff] %vm1455, %v1754
      %2286 = vst.msk [vmem:[#allocation5 + $0x18] sm:$0xff] %vm1455, %v1756
      %2289 = vrot.lane.b32.xlu0 %v1754, 96
      %v2290 = vpop.permute.xlu0 %2289
      %2291 = vrot.lane.b32.xlu0 %v1756, 96
      %v2292 = vpop.permute.xlu0 %2291
      %2295 = vst.msk [vmem:[#allocation6 + $0x10] sm:$0xff] %vm1455, %v2290
      %2296 = vst.msk [vmem:[#allocation6 + $0x18] sm:$0xff] %vm1455, %v2292
      %2297 = vst.msk [vmem:[#allocation7 + $0x10] sm:$0xff] %vm1455, %v1792
      %2298 = vst.msk [vmem:[#allocation7 + $0x18] sm:$0xff] %vm1455, %v1794
      %v2299 = vld [vmem:[#allocation5] sm:$0xff]
      %v2300 = vld [vmem:[#allocation5 + $0x8] sm:$0xff]
      %v2301 = vld [vmem:[#allocation5 + $0x10] sm:$0xff]
      %v2302 = vld [vmem:[#allocation5 + $0x18] sm:$0xff]
      %v2303 = vld [vmem:[#allocation6] sm:$0xff]
      %v2304 = vld [vmem:[#allocation6 + $0x8] sm:$0xff]
      %v2305 = vld [vmem:[#allocation6 + $0x10] sm:$0xff]
      %v2306 = vld [vmem:[#allocation6 + $0x18] sm:$0xff]
      %v2307 = vld [vmem:[#allocation7] sm:$0xff]
      %v2308 = vld [vmem:[#allocation7 + $0x8] sm:$0xff]
      %v2309 = vld [vmem:[#allocation7 + $0x10] sm:$0xff]
      %v2310 = vld [vmem:[#allocation7 + $0x18] sm:$0xff]
      %v2311 = vld [vmem:[%s1296] sm:$0x1]
      %v2313 = vperm.slane %v2311, 0
      %vm2315 = vcmask 64512
      %v2317 = vsel %vm2315, %v2299, 0
      %v2320 = vsel %vm2315, %v2300, 0
      %v2323 = vsel %vm2315, %v2301, 0
      %v2326 = vsel %vm2315, %v2302, 0
      %v2329 = vsel %vm2315, %v2303, 0
      %v2332 = vsel %vm2315, %v2304, 0
      %v2335 = vsel %vm2315, %v2305, 0
      %v2338 = vsel %vm2315, %v2306, 0
      %2340 = vmatpush.xpose.msra.mxu0 0.0
      %2341 = vmatpush.xpose.msra.mxu0 0.0
      %2342 = vmatpush.xpose.msra.mxu0 0.0
      %2343 = vmatpush.xpose.msra.mxu0 0.0
      %2344 = vmatpush.xpose.msra.mxu0 0.0
      %2345 = vmatpush.xpose.msra.mxu0 0.0
      %2346 = vmatpush.xpose.msra.mxu0 0.0
      %2347 = vmatpush.xpose.msra.mxu0 0.0
      %2348 = vmatpush.xpose.msra.mxu0 0.0
      %2349 = vmatpush.xpose.msra.mxu0 0.0
      %2350 = vmatpush.xpose.msra.mxu0 0.0
      %2351 = vmatpush.xpose.msra.mxu0 0.0
      %2352 = vmatpush.xpose.msra.mxu0 %v2338
      %2353 = vmatpush.xpose.msra.mxu0 %v2335
      %2354 = vmatpush.xpose.msra.mxu0 %v2332
      %2355 = vmatpush.xpose.msra.mxu0 %v2329
      %2356 = vmatmul.f32.gmra.mxu0 %v2317
      %v2357 = vpop.f32.mrf.mxu0
      %v2358 = vadd.f32 %v2313, %v2357
      %2359 = vmatmul.f32.gmra.mxu0 %v2320
      %v2360 = vpop.f32.mrf.mxu0
      %v2361 = vadd.f32 %v2313, %v2360
      %2362 = vmatmul.f32.gmra.mxu0 %v2323
      %v2363 = vpop.f32.mrf.mxu0
      %v2364 = vadd.f32 %v2313, %v2363
      %2365 = vmatmul.f32.gmra.mxu0 %v2326
      %v2366 = vpop.f32.mrf.mxu0
      %v2367 = vadd.f32 %v2313, %v2366
      %2368 = vdwg.mxu0
      %v2369 = vsel %vm1455, %v2358, -inf
      %2370 = vmax.xlane.f32.xlu0 %v2369
      %v2371 = vpop.xlane.xlu0 %2370
      %v2372 = vsel %vm1455, %v2361, -inf
      %2373 = vmax.xlane.f32.xlu0 %v2372
      %v2374 = vpop.xlane.xlu0 %2373
      %v2375 = vsel %vm1455, %v2364, -inf
      %2376 = vmax.xlane.f32.xlu0 %v2375
      %v2377 = vpop.xlane.xlu0 %2376
      %v2378 = vsel %vm1455, %v2367, -inf
      %2379 = vmax.xlane.f32.xlu0 %v2378
      %v2380 = vpop.xlane.xlu0 %2379
      %v2381 = vsub.f32 %v2358, %v2371
      %v2382 = vsub.f32 %v2361, %v2374
      %v2383 = vsub.f32 %v2364, %v2377
      %v2384 = vsub.f32 %v2367, %v2380
      %v2385 = vmul.f32 %v2381, 1.442695
      %v2386 = vpow.pop %v2385
      %v2387 = vmul.f32 %v2382, 1.442695
      %v2388 = vpow.pop %v2387
      %v2389 = vmul.f32 %v2383, 1.442695
      %v2390 = vpow.pop %v2389
      %v2391 = vmul.f32 %v2384, 1.442695
      %v2392 = vpow.pop %v2391
      %v2393 = vsel %vm1455, %v2386, 0.0
      %2394 = vadd.xlane.f32.xlu0 %v2393
      %v2395 = vpop.xlane.xlu0 %2394
      %v2396 = vsel %vm1455, %v2388, 0.0
      %2397 = vadd.xlane.f32.xlu0 %v2396
      %v2398 = vpop.xlane.xlu0 %2397
      %v2399 = vsel %vm1455, %v2390, 0.0
      %2400 = vadd.xlane.f32.xlu0 %v2399
      %v2401 = vpop.xlane.xlu0 %2400
      %v2402 = vsel %vm1455, %v2392, 0.0
      %2403 = vadd.xlane.f32.xlu0 %v2402
      %v2404 = vpop.xlane.xlu0 %2403
      %v2405 = vrcp.pop %v2395
      %v2406 = vrcp.pop %v2398
      %v2407 = vrcp.pop %v2401
      %v2408 = vrcp.pop %v2404
      %v2409 = vmul.f32 %v2386, %v2405
      %v2410 = vmul.f32 %v2388, %v2406
      %v2411 = vmul.f32 %v2390, %v2407
      %v2412 = vmul.f32 %v2392, %v2408
      %v2414 = vsel %vm1455, %v2409, 0
      %v2417 = vsel %vm1455, %v2410, 0
      %v2420 = vsel %vm1455, %v2411, 0
      %v2423 = vsel %vm1455, %v2412, 0
      %2425 = vmatpush.msra.mxu0 0.0
      %2426 = vmatpush.msra.mxu0 0.0
      %2427 = vmatpush.msra.mxu0 0.0
      %2428 = vmatpush.msra.mxu0 0.0
      %2429 = vmatpush.msra.mxu0 0.0
      %2430 = vmatpush.msra.mxu0 0.0
      %2431 = vmatpush.msra.mxu0 0.0
      %2432 = vmatpush.msra.mxu0 0.0
      %2433 = vmatpush.msra.mxu0 0.0
      %2434 = vmatpush.msra.mxu0 0.0
      %2435 = vmatpush.msra.mxu0 0.0
      %2436 = vmatpush.msra.mxu0 0.0
      %2437 = vmatpush.msra.mxu0 %v2310
      %2438 = vmatpush.msra.mxu0 %v2309
      %2439 = vmatpush.msra.mxu0 %v2308
      %2440 = vmatpush.msra.mxu0 %v2307
      %2441 = vmatmul.f32.gmra.mxu0 %v2414
      %v2442 = vpop.f32.mrf.mxu0
      %v2443 = vadd.f32 0.0, %v2442
      %2444 = vmatmul.f32.gmra.mxu0 %v2417
      %v2445 = vpop.f32.mrf.mxu0
      %v2446 = vadd.f32 0.0, %v2445
      %2447 = vmatmul.f32.gmra.mxu0 %v2420
      %v2448 = vpop.f32.mrf.mxu0
      %v2449 = vadd.f32 0.0, %v2448
      %2450 = vmatmul.f32.gmra.mxu0 %v2423
      %v2451 = vpop.f32.mrf.mxu0
      %v2452 = vadd.f32 0.0, %v2451
      %2453 = vdwg.mxu0
      %2454 = vrot.lane.b32.xlu0 %v2299, 120
      %v2455 = vpop.permute.xlu0 %2454
      %2456 = vrot.lane.b32.xlu0 %v2300, 120
      %v2457 = vpop.permute.xlu0 %2456
      %2458 = vrot.lane.b32.xlu0 %v2301, 120
      %v2459 = vpop.permute.xlu0 %2458
      %2460 = vrot.lane.b32.xlu0 %v2302, 120
      %v2461 = vpop.permute.xlu0 %2460
      %2462 = vrot.lane.b32.xlu0 %v2303, 120
      %v2463 = vpop.permute.xlu0 %2462
      %2464 = vrot.lane.b32.xlu0 %v2304, 120
      %v2465 = vpop.permute.xlu0 %2464
      %2466 = vrot.lane.b32.xlu0 %v2305, 120
      %v2467 = vpop.permute.xlu0 %2466
      %2468 = vrot.lane.b32.xlu0 %v2306, 120
      %v2469 = vpop.permute.xlu0 %2468
      %v2470 = vsel %vm2315, %v2455, 0
      %v2472 = vsel %vm2315, %v2457, 0
      %v2474 = vsel %vm2315, %v2459, 0
      %v2476 = vsel %vm2315, %v2461, 0
      %v2478 = vsel %vm2315, %v2463, 0
      %v2480 = vsel %vm2315, %v2465, 0
      %v2482 = vsel %vm2315, %v2467, 0
      %v2484 = vsel %vm2315, %v2469, 0
      %2486 = vmatpush.xpose.msra.mxu0 0.0
      %2487 = vmatpush.xpose.msra.mxu0 0.0
      %2488 = vmatpush.xpose.msra.mxu0 0.0
      %2489 = vmatpush.xpose.msra.mxu0 0.0
      %2490 = vmatpush.xpose.msra.mxu0 0.0
      %2491 = vmatpush.xpose.msra.mxu0 0.0
      %2492 = vmatpush.xpose.msra.mxu0 0.0
      %2493 = vmatpush.xpose.msra.mxu0 0.0
      %2494 = vmatpush.xpose.msra.mxu0 0.0
      %2495 = vmatpush.xpose.msra.mxu0 0.0
      %2496 = vmatpush.xpose.msra.mxu0 0.0
      %2497 = vmatpush.xpose.msra.mxu0 0.0
      %2498 = vmatpush.xpose.msra.mxu0 %v2484
      %2499 = vmatpush.xpose.msra.mxu0 %v2482
      %2500 = vmatpush.xpose.msra.mxu0 %v2480
      %2501 = vmatpush.xpose.msra.mxu0 %v2478
      %2502 = vmatmul.f32.gmra.mxu0 %v2470
      %v2503 = vpop.f32.mrf.mxu0
      %v2504 = vadd.f32 %v2313, %v2503
      %2505 = vmatmul.f32.gmra.mxu0 %v2472
      %v2506 = vpop.f32.mrf.mxu0
      %v2507 = vadd.f32 %v2313, %v2506
      %2508 = vmatmul.f32.gmra.mxu0 %v2474
      %v2509 = vpop.f32.mrf.mxu0
      %v2510 = vadd.f32 %v2313, %v2509
      %2511 = vmatmul.f32.gmra.mxu0 %v2476
      %v2512 = vpop.f32.mrf.mxu0
      %v2513 = vadd.f32 %v2313, %v2512
      %2514 = vdwg.mxu0
      %v2515 = vsel %vm1455, %v2504, -inf
      %2516 = vmax.xlane.f32.xlu0 %v2515
      %v2517 = vpop.xlane.xlu0 %2516
      %v2518 = vsel %vm1455, %v2507, -inf
      %2519 = vmax.xlane.f32.xlu0 %v2518
      %v2520 = vpop.xlane.xlu0 %2519
      %v2521 = vsel %vm1455, %v2510, -inf
      %2522 = vmax.xlane.f32.xlu0 %v2521
      %v2523 = vpop.xlane.xlu0 %2522
      %v2524 = vsel %vm1455, %v2513, -inf
      %2525 = vmax.xlane.f32.xlu0 %v2524
      %v2526 = vpop.xlane.xlu0 %2525
      %v2527 = vsub.f32 %v2504, %v2517
      %v2528 = vsub.f32 %v2507, %v2520
      %v2529 = vsub.f32 %v2510, %v2523
      %v2530 = vsub.f32 %v2513, %v2526
      %v2531 = vmul.f32 %v2527, 1.442695
      %v2532 = vpow.pop %v2531
      %v2533 = vmul.f32 %v2528, 1.442695
      %v2534 = vpow.pop %v2533
      %v2535 = vmul.f32 %v2529, 1.442695
      %v2536 = vpow.pop %v2535
      %v2537 = vmul.f32 %v2530, 1.442695
      %v2538 = vpow.pop %v2537
      %v2539 = vsel %vm1455, %v2532, 0.0
      %2540 = vadd.xlane.f32.xlu0 %v2539
      %v2541 = vpop.xlane.xlu0 %2540
      %v2542 = vsel %vm1455, %v2534, 0.0
      %2543 = vadd.xlane.f32.xlu0 %v2542
      %v2544 = vpop.xlane.xlu0 %2543
      %v2545 = vsel %vm1455, %v2536, 0.0
      %2546 = vadd.xlane.f32.xlu0 %v2545
      %v2547 = vpop.xlane.xlu0 %2546
      %v2548 = vsel %vm1455, %v2538, 0.0
      %2549 = vadd.xlane.f32.xlu0 %v2548
      %v2550 = vpop.xlane.xlu0 %2549
      %v2551 = vrcp.pop %v2541
      %v2552 = vrcp.pop %v2544
      %v2553 = vrcp.pop %v2547
      %v2554 = vrcp.pop %v2550
      %v2555 = vmul.f32 %v2532, %v2551
      %v2556 = vmul.f32 %v2534, %v2552
      %v2557 = vmul.f32 %v2536, %v2553
      %v2558 = vmul.f32 %v2538, %v2554
      %2563 = vrot.lane.b32.xlu0 %v2307, 120
      %v2564 = vpop.permute.xlu0 %2563
      %2565 = vrot.lane.b32.xlu0 %v2308, 120
      %v2566 = vpop.permute.xlu0 %2565
      %2567 = vrot.lane.b32.xlu0 %v2309, 120
      %v2568 = vpop.permute.xlu0 %2567
      %2569 = vrot.lane.b32.xlu0 %v2310, 120
      %v2570 = vpop.permute.xlu0 %2569
      %v2576 = vsel %vm1455, %v2555, 0
      %v2579 = vsel %vm1455, %v2556, 0
      %v2582 = vsel %vm1455, %v2557, 0
      %v2585 = vsel %vm1455, %v2558, 0
      %2587 = vmatpush.msra.mxu0 0.0
      %2588 = vmatpush.msra.mxu0 0.0
      %2589 = vmatpush.msra.mxu0 0.0
      %2590 = vmatpush.msra.mxu0 0.0
      %2591 = vmatpush.msra.mxu0 0.0
      %2592 = vmatpush.msra.mxu0 0.0
      %2593 = vmatpush.msra.mxu0 0.0
      %2594 = vmatpush.msra.mxu0 0.0
      %2595 = vmatpush.msra.mxu0 0.0
      %2596 = vmatpush.msra.mxu0 0.0
      %2597 = vmatpush.msra.mxu0 0.0
      %2598 = vmatpush.msra.mxu0 0.0
      %2599 = vmatpush.msra.mxu0 %v2570
      %2600 = vmatpush.msra.mxu0 %v2568
      %2601 = vmatpush.msra.mxu0 %v2566
      %2602 = vmatpush.msra.mxu0 %v2564
      %2603 = vmatmul.f32.gmra.mxu0 %v2576
      %v2604 = vpop.f32.mrf.mxu0
      %v2605 = vadd.f32 0.0, %v2604
      %2606 = vmatmul.f32.gmra.mxu0 %v2579
      %v2607 = vpop.f32.mrf.mxu0
      %v2608 = vadd.f32 0.0, %v2607
      %2609 = vmatmul.f32.gmra.mxu0 %v2582
      %v2610 = vpop.f32.mrf.mxu0
      %v2611 = vadd.f32 0.0, %v2610
      %2612 = vmatmul.f32.gmra.mxu0 %v2585
      %v2613 = vpop.f32.mrf.mxu0
      %v2614 = vadd.f32 0.0, %v2613
      %2615 = vdwg.mxu0
      %2616 = vrot.lane.b32.xlu0 %v2299, 112
      %v2617 = vpop.permute.xlu0 %2616
      %2618 = vrot.lane.b32.xlu0 %v2300, 112
      %v2619 = vpop.permute.xlu0 %2618
      %2620 = vrot.lane.b32.xlu0 %v2301, 112
      %v2621 = vpop.permute.xlu0 %2620
      %2622 = vrot.lane.b32.xlu0 %v2302, 112
      %v2623 = vpop.permute.xlu0 %2622
      %2624 = vrot.lane.b32.xlu0 %v2303, 112
      %v2625 = vpop.permute.xlu0 %2624
      %2626 = vrot.lane.b32.xlu0 %v2304, 112
      %v2627 = vpop.permute.xlu0 %2626
      %2628 = vrot.lane.b32.xlu0 %v2305, 112
      %v2629 = vpop.permute.xlu0 %2628
      %2630 = vrot.lane.b32.xlu0 %v2306, 112
      %v2631 = vpop.permute.xlu0 %2630
      %v2632 = vsel %vm2315, %v2617, 0
      %v2634 = vsel %vm2315, %v2619, 0
      %v2636 = vsel %vm2315, %v2621, 0
      %v2638 = vsel %vm2315, %v2623, 0
      %v2640 = vsel %vm2315, %v2625, 0
      %v2642 = vsel %vm2315, %v2627, 0
      %v2644 = vsel %vm2315, %v2629, 0
      %v2646 = vsel %vm2315, %v2631, 0
      %2648 = vmatpush.xpose.msra.mxu0 0.0
      %2649 = vmatpush.xpose.msra.mxu0 0.0
      %2650 = vmatpush.xpose.msra.mxu0 0.0
      %2651 = vmatpush.xpose.msra.mxu0 0.0
      %2652 = vmatpush.xpose.msra.mxu0 0.0
      %2653 = vmatpush.xpose.msra.mxu0 0.0
      %2654 = vmatpush.xpose.msra.mxu0 0.0
      %2655 = vmatpush.xpose.msra.mxu0 0.0
      %2656 = vmatpush.xpose.msra.mxu0 0.0
      %2657 = vmatpush.xpose.msra.mxu0 0.0
      %2658 = vmatpush.xpose.msra.mxu0 0.0
      %2659 = vmatpush.xpose.msra.mxu0 0.0
      %2660 = vmatpush.xpose.msra.mxu0 %v2646
      %2661 = vmatpush.xpose.msra.mxu0 %v2644
      %2662 = vmatpush.xpose.msra.mxu0 %v2642
      %2663 = vmatpush.xpose.msra.mxu0 %v2640
      %2664 = vmatmul.f32.gmra.mxu0 %v2632
      %v2665 = vpop.f32.mrf.mxu0
      %v2666 = vadd.f32 %v2313, %v2665
      %2667 = vmatmul.f32.gmra.mxu0 %v2634
      %v2668 = vpop.f32.mrf.mxu0
      %v2669 = vadd.f32 %v2313, %v2668
      %2670 = vmatmul.f32.gmra.mxu0 %v2636
      %v2671 = vpop.f32.mrf.mxu0
      %v2672 = vadd.f32 %v2313, %v2671
      %2673 = vmatmul.f32.gmra.mxu0 %v2638
      %v2674 = vpop.f32.mrf.mxu0
      %v2675 = vadd.f32 %v2313, %v2674
      %2676 = vdwg.mxu0
      %v2677 = vsel %vm1455, %v2666, -inf
      %2678 = vmax.xlane.f32.xlu0 %v2677
      %v2679 = vpop.xlane.xlu0 %2678
      %v2680 = vsel %vm1455, %v2669, -inf
      %2681 = vmax.xlane.f32.xlu0 %v2680
      %v2682 = vpop.xlane.xlu0 %2681
      %v2683 = vsel %vm1455, %v2672, -inf
      %2684 = vmax.xlane.f32.xlu0 %v2683
      %v2685 = vpop.xlane.xlu0 %2684
      %v2686 = vsel %vm1455, %v2675, -inf
      %2687 = vmax.xlane.f32.xlu0 %v2686
      %v2688 = vpop.xlane.xlu0 %2687
      %v2689 = vsub.f32 %v2666, %v2679
      %v2690 = vsub.f32 %v2669, %v2682
      %v2691 = vsub.f32 %v2672, %v2685
      %v2692 = vsub.f32 %v2675, %v2688
      %v2693 = vmul.f32 %v2689, 1.442695
      %v2694 = vpow.pop %v2693
      %v2695 = vmul.f32 %v2690, 1.442695
      %v2696 = vpow.pop %v2695
      %v2697 = vmul.f32 %v2691, 1.442695
      %v2698 = vpow.pop %v2697
      %v2699 = vmul.f32 %v2692, 1.442695
      %v2700 = vpow.pop %v2699
      %v2701 = vsel %vm1455, %v2694, 0.0
      %2702 = vadd.xlane.f32.xlu0 %v2701
      %v2703 = vpop.xlane.xlu0 %2702
      %v2704 = vsel %vm1455, %v2696, 0.0
      %2705 = vadd.xlane.f32.xlu0 %v2704
      %v2706 = vpop.xlane.xlu0 %2705
      %v2707 = vsel %vm1455, %v2698, 0.0
      %2708 = vadd.xlane.f32.xlu0 %v2707
      %v2709 = vpop.xlane.xlu0 %2708
      %v2710 = vsel %vm1455, %v2700, 0.0
      %2711 = vadd.xlane.f32.xlu0 %v2710
      %v2712 = vpop.xlane.xlu0 %2711
      %v2713 = vrcp.pop %v2703
      %v2714 = vrcp.pop %v2706
      %v2715 = vrcp.pop %v2709
      %v2716 = vrcp.pop %v2712
      %v2717 = vmul.f32 %v2694, %v2713
      %v2718 = vmul.f32 %v2696, %v2714
      %v2719 = vmul.f32 %v2698, %v2715
      %v2720 = vmul.f32 %v2700, %v2716
      %2721 = vrot.lane.b32.xlu0 %v2307, 112
      %v2722 = vpop.permute.xlu0 %2721
      %2723 = vrot.lane.b32.xlu0 %v2308, 112
      %v2724 = vpop.permute.xlu0 %2723
      %2725 = vrot.lane.b32.xlu0 %v2309, 112
      %v2726 = vpop.permute.xlu0 %2725
      %2727 = vrot.lane.b32.xlu0 %v2310, 112
      %v2728 = vpop.permute.xlu0 %2727
      %v2734 = vsel %vm1455, %v2717, 0
      %v2737 = vsel %vm1455, %v2718, 0
      %v2740 = vsel %vm1455, %v2719, 0
      %v2743 = vsel %vm1455, %v2720, 0
      %2745 = vmatpush.msra.mxu0 0.0
      %2746 = vmatpush.msra.mxu0 0.0
      %2747 = vmatpush.msra.mxu0 0.0
      %2748 = vmatpush.msra.mxu0 0.0
      %2749 = vmatpush.msra.mxu0 0.0
      %2750 = vmatpush.msra.mxu0 0.0
      %2751 = vmatpush.msra.mxu0 0.0
      %2752 = vmatpush.msra.mxu0 0.0
      %2753 = vmatpush.msra.mxu0 0.0
      %2754 = vmatpush.msra.mxu0 0.0
      %2755 = vmatpush.msra.mxu0 0.0
      %2756 = vmatpush.msra.mxu0 0.0
      %2757 = vmatpush.msra.mxu0 %v2728
      %2758 = vmatpush.msra.mxu0 %v2726
      %2759 = vmatpush.msra.mxu0 %v2724
      %2760 = vmatpush.msra.mxu0 %v2722
      %2761 = vmatmul.f32.gmra.mxu0 %v2734
      %v2762 = vpop.f32.mrf.mxu0
      %v2763 = vadd.f32 0.0, %v2762
      %2764 = vmatmul.f32.gmra.mxu0 %v2737
      %v2765 = vpop.f32.mrf.mxu0
      %v2766 = vadd.f32 0.0, %v2765
      %2767 = vmatmul.f32.gmra.mxu0 %v2740
      %v2768 = vpop.f32.mrf.mxu0
      %v2769 = vadd.f32 0.0, %v2768
      %2770 = vmatmul.f32.gmra.mxu0 %v2743
      %v2771 = vpop.f32.mrf.mxu0
      %v2772 = vadd.f32 0.0, %v2771
      %2773 = vdwg.mxu0
      %2774 = vrot.lane.b32.xlu0 %v2299, 104
      %v2775 = vpop.permute.xlu0 %2774
      %2776 = vrot.lane.b32.xlu0 %v2300, 104
      %v2777 = vpop.permute.xlu0 %2776
      %2778 = vrot.lane.b32.xlu0 %v2301, 104
      %v2779 = vpop.permute.xlu0 %2778
      %2780 = vrot.lane.b32.xlu0 %v2302, 104
      %v2781 = vpop.permute.xlu0 %2780
      %2782 = vrot.lane.b32.xlu0 %v2303, 104
      %v2783 = vpop.permute.xlu0 %2782
      %2784 = vrot.lane.b32.xlu0 %v2304, 104
      %v2785 = vpop.permute.xlu0 %2784
      %2786 = vrot.lane.b32.xlu0 %v2305, 104
      %v2787 = vpop.permute.xlu0 %2786
      %2788 = vrot.lane.b32.xlu0 %v2306, 104
      %v2789 = vpop.permute.xlu0 %2788
      %v2790 = vsel %vm2315, %v2775, 0
      %v2792 = vsel %vm2315, %v2777, 0
      %v2794 = vsel %vm2315, %v2779, 0
      %v2796 = vsel %vm2315, %v2781, 0
      %v2798 = vsel %vm2315, %v2783, 0
      %v2800 = vsel %vm2315, %v2785, 0
      %v2802 = vsel %vm2315, %v2787, 0
      %v2804 = vsel %vm2315, %v2789, 0
      %2806 = vmatpush.xpose.msra.mxu0 0.0
      %2807 = vmatpush.xpose.msra.mxu0 0.0
      %2808 = vmatpush.xpose.msra.mxu0 0.0
      %2809 = vmatpush.xpose.msra.mxu0 0.0
      %2810 = vmatpush.xpose.msra.mxu0 0.0
      %2811 = vmatpush.xpose.msra.mxu0 0.0
      %2812 = vmatpush.xpose.msra.mxu0 0.0
      %2813 = vmatpush.xpose.msra.mxu0 0.0
      %2814 = vmatpush.xpose.msra.mxu0 0.0
      %2815 = vmatpush.xpose.msra.mxu0 0.0
      %2816 = vmatpush.xpose.msra.mxu0 0.0
      %2817 = vmatpush.xpose.msra.mxu0 0.0
      %2818 = vmatpush.xpose.msra.mxu0 %v2804
      %2819 = vmatpush.xpose.msra.mxu0 %v2802
      %2820 = vmatpush.xpose.msra.mxu0 %v2800
      %2821 = vmatpush.xpose.msra.mxu0 %v2798
      %2822 = vmatmul.f32.gmra.mxu0 %v2790
      %v2823 = vpop.f32.mrf.mxu0
      %v2824 = vadd.f32 %v2313, %v2823
      %2825 = vmatmul.f32.gmra.mxu0 %v2792
      %v2826 = vpop.f32.mrf.mxu0
      %v2827 = vadd.f32 %v2313, %v2826
      %2828 = vmatmul.f32.gmra.mxu0 %v2794
      %v2829 = vpop.f32.mrf.mxu0
      %v2830 = vadd.f32 %v2313, %v2829
      %2831 = vmatmul.f32.gmra.mxu0 %v2796
      %v2832 = vpop.f32.mrf.mxu0
      %v2833 = vadd.f32 %v2313, %v2832
      %2834 = vdwg.mxu0
      %v2835 = vsel %vm1455, %v2824, -inf
      %2836 = vmax.xlane.f32.xlu0 %v2835
      %v2837 = vpop.xlane.xlu0 %2836
      %v2838 = vsel %vm1455, %v2827, -inf
      %2839 = vmax.xlane.f32.xlu0 %v2838
      %v2840 = vpop.xlane.xlu0 %2839
      %v2841 = vsel %vm1455, %v2830, -inf
      %2842 = vmax.xlane.f32.xlu0 %v2841
      %v2843 = vpop.xlane.xlu0 %2842
      %v2844 = vsel %vm1455, %v2833, -inf
      %2845 = vmax.xlane.f32.xlu0 %v2844
      %v2846 = vpop.xlane.xlu0 %2845
      %v2847 = vsub.f32 %v2824, %v2837
      %v2848 = vsub.f32 %v2827, %v2840
      %v2849 = vsub.f32 %v2830, %v2843
      %v2850 = vsub.f32 %v2833, %v2846
      %v2851 = vmul.f32 %v2847, 1.442695
      %v2852 = vpow.pop %v2851
      %v2853 = vmul.f32 %v2848, 1.442695
      %v2854 = vpow.pop %v2853
      %v2855 = vmul.f32 %v2849, 1.442695
      %v2856 = vpow.pop %v2855
      %v2857 = vmul.f32 %v2850, 1.442695
      %v2858 = vpow.pop %v2857
      %v2859 = vsel %vm1455, %v2852, 0.0
      %2860 = vadd.xlane.f32.xlu0 %v2859
      %v2861 = vpop.xlane.xlu0 %2860
      %v2862 = vsel %vm1455, %v2854, 0.0
      %2863 = vadd.xlane.f32.xlu0 %v2862
      %v2864 = vpop.xlane.xlu0 %2863
      %v2865 = vsel %vm1455, %v2856, 0.0
      %2866 = vadd.xlane.f32.xlu0 %v2865
      %v2867 = vpop.xlane.xlu0 %2866
      %v2868 = vsel %vm1455, %v2858, 0.0
      %2869 = vadd.xlane.f32.xlu0 %v2868
      %v2870 = vpop.xlane.xlu0 %2869
      %v2871 = vrcp.pop %v2861
      %v2872 = vrcp.pop %v2864
      %v2873 = vrcp.pop %v2867
      %v2874 = vrcp.pop %v2870
      %v2875 = vmul.f32 %v2852, %v2871
      %v2876 = vmul.f32 %v2854, %v2872
      %v2877 = vmul.f32 %v2856, %v2873
      %v2878 = vmul.f32 %v2858, %v2874
      %2879 = vrot.lane.b32.xlu0 %v2307, 104
      %v2880 = vpop.permute.xlu0 %2879
      %2881 = vrot.lane.b32.xlu0 %v2308, 104
      %v2882 = vpop.permute.xlu0 %2881
      %2883 = vrot.lane.b32.xlu0 %v2309, 104
      %v2884 = vpop.permute.xlu0 %2883
      %2885 = vrot.lane.b32.xlu0 %v2310, 104
      %v2886 = vpop.permute.xlu0 %2885
      %v2892 = vsel %vm1455, %v2875, 0
      %v2895 = vsel %vm1455, %v2876, 0
      %v2898 = vsel %vm1455, %v2877, 0
      %v2901 = vsel %vm1455, %v2878, 0
      %2903 = vmatpush.msra.mxu0 0.0
      %2904 = vmatpush.msra.mxu0 0.0
      %2905 = vmatpush.msra.mxu0 0.0
      %2906 = vmatpush.msra.mxu0 0.0
      %2907 = vmatpush.msra.mxu0 0.0
      %2908 = vmatpush.msra.mxu0 0.0
      %2909 = vmatpush.msra.mxu0 0.0
      %2910 = vmatpush.msra.mxu0 0.0
      %2911 = vmatpush.msra.mxu0 0.0
      %2912 = vmatpush.msra.mxu0 0.0
      %2913 = vmatpush.msra.mxu0 0.0
      %2914 = vmatpush.msra.mxu0 0.0
      %2915 = vmatpush.msra.mxu0 %v2886
      %2916 = vmatpush.msra.mxu0 %v2884
      %2917 = vmatpush.msra.mxu0 %v2882
      %2918 = vmatpush.msra.mxu0 %v2880
      %2919 = vmatmul.f32.gmra.mxu0 %v2892
      %v2920 = vpop.f32.mrf.mxu0
      %v2921 = vadd.f32 0.0, %v2920
      %2922 = vmatmul.f32.gmra.mxu0 %v2895
      %v2923 = vpop.f32.mrf.mxu0
      %v2924 = vadd.f32 0.0, %v2923
      %2925 = vmatmul.f32.gmra.mxu0 %v2898
      %v2926 = vpop.f32.mrf.mxu0
      %v2927 = vadd.f32 0.0, %v2926
      %2928 = vmatmul.f32.gmra.mxu0 %v2901
      %v2929 = vpop.f32.mrf.mxu0
      %v2930 = vadd.f32 0.0, %v2929
      %2931 = vdwg.mxu0
      %2936 = vrot.lane.b32.xlu0 %v2605, 8
      %v2937 = vpop.permute.xlu0 %2936
      %2938 = vrot.lane.b32.xlu0 %v2608, 8
      %v2939 = vpop.permute.xlu0 %2938
      %2940 = vrot.lane.b32.xlu0 %v2611, 8
      %v2941 = vpop.permute.xlu0 %2940
      %2942 = vrot.lane.b32.xlu0 %v2614, 8
      %v2943 = vpop.permute.xlu0 %2942
      %2952 = vrot.lane.b32.xlu0 %v2763, 16
      %v2953 = vpop.permute.xlu0 %2952
      %2954 = vrot.lane.b32.xlu0 %v2766, 16
      %v2955 = vpop.permute.xlu0 %2954
      %2956 = vrot.lane.b32.xlu0 %v2769, 16
      %v2957 = vpop.permute.xlu0 %2956
      %2958 = vrot.lane.b32.xlu0 %v2772, 16
      %v2959 = vpop.permute.xlu0 %2958
      %2968 = vrot.lane.b32.xlu0 %v2921, 24
      %v2969 = vpop.permute.xlu0 %2968
      %2970 = vrot.lane.b32.xlu0 %v2924, 24
      %v2971 = vpop.permute.xlu0 %2970
      %2972 = vrot.lane.b32.xlu0 %v2927, 24
      %v2973 = vpop.permute.xlu0 %2972
      %2974 = vrot.lane.b32.xlu0 %v2930, 24
      %v2975 = vpop.permute.xlu0 %2974
      %v2980 = vsel %vm2315, %v2443, %v2937
      %v2981 = vsel %vm2315, %v2446, %v2939
      %v2982 = vsel %vm2315, %v2449, %v2941
      %v2983 = vsel %vm2315, %v2452, %v2943
      %vm2984 = vcmask 130048
      %v2985 = vsel %vm2984, %v2980, %v2953
      %v2986 = vsel %vm2984, %v2981, %v2955
      %v2987 = vsel %vm2984, %v2982, %v2957
      %v2988 = vsel %vm2984, %v2983, %v2959
      %vm2989 = vcmask 195584
      %v2990 = vsel %vm2989, %v2985, %v2969
      %v2991 = vsel %vm2989, %v2986, %v2971
      %v2992 = vsel %vm2989, %v2987, %v2973
      %v2993 = vsel %vm2989, %v2988, %v2975
      %v2994 = vpack.c.bf16 %v2990, %v2990
      %v2995 = vld [vmem:[%s1384] sm:$0xf]
      %v2996 = vld [vmem:[%s1384 + $0x4] sm:$0xf]
      %v2997 = vld [vmem:[%s1384 + $0x8] sm:$0xf]
      %v2998 = vld [vmem:[%s1384 + $0xc] sm:$0xf]
      %v2999 = vld [vmem:[%s1387] sm:$0x1]
      %v3001 = vperm.slane %v2999, 0
      %v3007 = vunpack.c.l.b16 %v2995
      %v3008 = vunpack.c.l.b16 %v2996
      %v3009 = vunpack.c.l.b16 %v2997
      %v3010 = vunpack.c.l.b16 %v2998
      %v3011 = vpack.c.b16 %v3008, %v3007
      %v3012 = vpack.c.b16 %v3010, %v3009
      %v3016 = vsel %vm1455, %v2994, 0
      %3018 = vmatpush.bf16.msra.mxu0 0
      %3019 = vmatpush.bf16.msra.mxu0 0
      %3020 = vmatpush.bf16.msra.mxu0 0
      %3021 = vmatpush.bf16.msra.mxu0 0
      %3022 = vmatpush.bf16.msra.mxu0 0
      %3023 = vmatpush.bf16.msra.mxu0 0
      %3024 = vmatpush.bf16.msra.mxu0 %v3012
      %3025 = vmatpush.bf16.msra.mxu0 %v3011
      %3026 = vmatmul.bf16.gmra.mxu0 %v3016
      %v3027 = vpop.f32.mrf.mxu0
      %v3028 = vadd.f32 %v3001, %v3027
      %v3029 = vpop.f32.mrf.mxu0
      %3030 = vdwg.mxu0
      %v3031 = vadd.f32 %v3028, %v1443
      %v3032 = vpack.c.bf16 %v2991, %v2991
      %v3033 = vld [vmem:[%s1400] sm:$0xff]
      %v3034 = vld [vmem:[%s1400 + $0x8] sm:$0xff]
      %v3035 = vld [vmem:[%s1400 + $0x10] sm:$0xff]
      %v3036 = vld [vmem:[%s1400 + $0x18] sm:$0xff]
      %v3037 = vld [vmem:[%s1400 + $0x20] sm:$0xff]
      %v3038 = vld [vmem:[%s1400 + $0x28] sm:$0xff]
      %v3039 = vld [vmem:[%s1400 + $0x30] sm:$0xff]
      %v3040 = vld [vmem:[%s1400 + $0x38] sm:$0xff]
      %v3041 = vld [vmem:[%s1400 + $0x40] sm:$0xff]
      %v3042 = vld [vmem:[%s1400 + $0x48] sm:$0xff]
      %v3043 = vld [vmem:[%s1400 + $0x50] sm:$0xff]
      %v3044 = vld [vmem:[%s1400 + $0x58] sm:$0xff]
      %v3045 = vld [vmem:[%s1404] sm:$0x3f]
      %v3047 = vperm.slane %v3045, 0
      %v3048 = vperm.slane %v3045, 1
      %v3049 = vperm.slane %v3045, 2
      %v3050 = vperm.slane %v3045, 3
      %v3051 = vperm.slane %v3045, 4
      %v3052 = vperm.slane %v3045, 5
      %v3071 = vunpack.c.l.b16 %v3033
      %v3072 = vunpack.c.h.b16 %v3033
      %v3073 = vunpack.c.l.b16 %v3034
      %v3074 = vunpack.c.h.b16 %v3034
      %v3075 = vunpack.c.l.b16 %v3035
      %v3076 = vunpack.c.h.b16 %v3035
      %v3077 = vunpack.c.l.b16 %v3036
      %v3078 = vunpack.c.h.b16 %v3036
      %v3079 = vunpack.c.l.b16 %v3037
      %v3080 = vunpack.c.h.b16 %v3037
      %v3081 = vunpack.c.l.b16 %v3038
      %v3082 = vunpack.c.h.b16 %v3038
      %v3083 = vunpack.c.l.b16 %v3039
      %v3084 = vunpack.c.h.b16 %v3039
      %v3085 = vunpack.c.l.b16 %v3040
      %v3086 = vunpack.c.h.b16 %v3040
      %v3087 = vunpack.c.l.b16 %v3041
      %v3088 = vunpack.c.h.b16 %v3041
      %v3089 = vunpack.c.l.b16 %v3042
      %v3090 = vunpack.c.h.b16 %v3042
      %v3091 = vunpack.c.l.b16 %v3043
      %v3092 = vunpack.c.h.b16 %v3043
      %v3093 = vunpack.c.l.b16 %v3044
      %v3094 = vunpack.c.h.b16 %v3044
      %v3095 = vpack.c.b16 %v3077, %v3071
      %v3096 = vpack.c.b16 %v3078, %v3072
      %v3097 = vpack.c.b16 %v3079, %v3073
      %v3098 = vpack.c.b16 %v3080, %v3074
      %v3099 = vpack.c.b16 %v3081, %v3075
      %v3100 = vpack.c.b16 %v3082, %v3076
      %v3101 = vpack.c.b16 %v3089, %v3083
      %v3102 = vpack.c.b16 %v3090, %v3084
      %v3103 = vpack.c.b16 %v3091, %v3085
      %v3104 = vpack.c.b16 %v3092, %v3086
      %v3105 = vpack.c.b16 %v3093, %v3087
      %v3106 = vpack.c.b16 %v3094, %v3088
      %v3120 = vsel %vm1455, %v3032, 0
      %3122 = vmatpush.bf16.msra.mxu0 0
      %3123 = vmatpush.bf16.msra.mxu0 0
      %3124 = vmatpush.bf16.msra.mxu0 0
      %3125 = vmatpush.bf16.msra.mxu0 0
      %3126 = vmatpush.bf16.msra.mxu0 0
      %3127 = vmatpush.bf16.msra.mxu0 0
      %3128 = vmatpush.bf16.msra.mxu0 %v3101
      %3129 = vmatpush.bf16.msra.mxu0 %v3095
      %3130 = vmatmul.bf16.gmra.mxu0 %v3120
      %v3131 = vpop.f32.mrf.mxu0
      %v3132 = vadd.f32 %v3047, %v3131
      %v3133 = vpop.f32.mrf.mxu0
      %3134 = vdwg.mxu0
      %3135 = vmatpush.bf16.msra.mxu0 0
      %3136 = vmatpush.bf16.msra.mxu0 0
      %3137 = vmatpush.bf16.msra.mxu0 0
      %3138 = vmatpush.bf16.msra.mxu0 0
      %3139 = vmatpush.bf16.msra.mxu0 0
      %3140 = vmatpush.bf16.msra.mxu0 0
      %3141 = vmatpush.bf16.msra.mxu0 %v3102
      %3142 = vmatpush.bf16.msra.mxu0 %v3096
      %3143 = vmatmul.bf16.gmra.mxu0 %v3120
      %v3144 = vpop.f32.mrf.mxu0
      %v3145 = vadd.f32 %v3048, %v3144
      %v3146 = vpop.f32.mrf.mxu0
      %3147 = vdwg.mxu0
      %3148 = vmatpush.bf16.msra.mxu0 0
      %3149 = vmatpush.bf16.msra.mxu0 0
      %3150 = vmatpush.bf16.msra.mxu0 0
      %3151 = vmatpush.bf16.msra.mxu0 0
      %3152 = vmatpush.bf16.msra.mxu0 0
      %3153 = vmatpush.bf16.msra.mxu0 0
      %3154 = vmatpush.bf16.msra.mxu0 %v3103
      %3155 = vmatpush.bf16.msra.mxu0 %v3097
      %3156 = vmatmul.bf16.gmra.mxu0 %v3120
      %v3157 = vpop.f32.mrf.mxu0
      %v3158 = vadd.f32 %v3049, %v3157
      %v3159 = vpop.f32.mrf.mxu0
      %3160 = vdwg.mxu0
      %3161 = vmatpush.bf16.msra.mxu0 0
      %3162 = vmatpush.bf16.msra.mxu0 0
      %3163 = vmatpush.bf16.msra.mxu0 0
      %3164 = vmatpush.bf16.msra.mxu0 0
      %3165 = vmatpush.bf16.msra.mxu0 0
      %3166 = vmatpush.bf16.msra.mxu0 0
      %3167 = vmatpush.bf16.msra.mxu0 %v3104
      %3168 = vmatpush.bf16.msra.mxu0 %v3098
      %3169 = vmatmul.bf16.gmra.mxu0 %v3120
      %v3170 = vpop.f32.mrf.mxu0
      %v3171 = vadd.f32 %v3050, %v3170
      %v3172 = vpop.f32.mrf.mxu0
      %3173 = vdwg.mxu0
      %3174 = vmatpush.bf16.msra.mxu0 0
      %3175 = vmatpush.bf16.msra.mxu0 0
      %3176 = vmatpush.bf16.msra.mxu0 0
      %3177 = vmatpush.bf16.msra.mxu0 0
      %3178 = vmatpush.bf16.msra.mxu0 0
      %3179 = vmatpush.bf16.msra.mxu0 0
      %3180 = vmatpush.bf16.msra.mxu0 %v3105
      %3181 = vmatpush.bf16.msra.mxu0 %v3099
      %3182 = vmatmul.bf16.gmra.mxu0 %v3120
      %v3183 = vpop.f32.mrf.mxu0
      %v3184 = vadd.f32 %v3051, %v3183
      %v3185 = vpop.f32.mrf.mxu0
      %3186 = vdwg.mxu0
      %3187 = vmatpush.bf16.msra.mxu0 0
      %3188 = vmatpush.bf16.msra.mxu0 0
      %3189 = vmatpush.bf16.msra.mxu0 0
      %3190 = vmatpush.bf16.msra.mxu0 0
      %3191 = vmatpush.bf16.msra.mxu0 0
      %3192 = vmatpush.bf16.msra.mxu0 0
      %3193 = vmatpush.bf16.msra.mxu0 %v3106
      %3194 = vmatpush.bf16.msra.mxu0 %v3100
      %3195 = vmatmul.bf16.gmra.mxu0 %v3120
      %v3196 = vpop.f32.mrf.mxu0
      %v3197 = vadd.f32 %v3052, %v3196
      %v3198 = vpop.f32.mrf.mxu0
      %3199 = vdwg.mxu0
      %v3200 = vadd.f32 %v3132, %v1444
      %v3201 = vadd.f32 %v3145, %v1445
      %v3202 = vadd.f32 %v3158, %v1446
      %v3203 = vadd.f32 %v3171, %v1447
      %v3204 = vadd.f32 %v3184, %v1448
      %v3205 = vadd.f32 %v3197, %v1449
      %v3206 = vpack.c.bf16 %v2993, %v2992
      %v3207 = vld [vmem:[%s1392] sm:$0xf]
      %v3208 = vld [vmem:[%s1392 + $0x4] sm:$0xf]
      %v3209 = vld [vmem:[%s1392 + $0x8] sm:$0xf]
      %v3210 = vld [vmem:[%s1392 + $0xc] sm:$0xf]
      %v3211 = vld [vmem:[%s1395] sm:$0x1]
      %v3213 = vperm.slane %v3211, 0
      %v3219 = vunpack.c.l.b16 %v3207
      %v3220 = vunpack.c.l.b16 %v3208
      %v3221 = vunpack.c.l.b16 %v3209
      %v3222 = vunpack.c.l.b16 %v3210
      %v3223 = vpack.c.b16 %v3220, %v3219
      %v3224 = vpack.c.b16 %v3222, %v3221
      %v3228 = vsel %vm1455, %v3206, 0
      %3230 = vmatpush.bf16.msra.mxu0 0
      %3231 = vmatpush.bf16.msra.mxu0 0
      %3232 = vmatpush.bf16.msra.mxu0 0
      %3233 = vmatpush.bf16.msra.mxu0 0
      %3234 = vmatpush.bf16.msra.mxu0 0
      %3235 = vmatpush.bf16.msra.mxu0 0
      %3236 = vmatpush.bf16.msra.mxu0 %v3224
      %3237 = vmatpush.bf16.msra.mxu0 %v3223
      %3238 = vmatmul.bf16.gmra.mxu0 %v3228
      %v3239 = vpop.f32.mrf.mxu0
      %v3240 = vadd.f32 %v3213, %v3239
      %v3241 = vpop.f32.mrf.mxu0
      %v3242 = vadd.f32 %v3213, %v3241
      %3243 = vdwg.mxu0
      %v3244 = vadd.f32 %v3240, %v1450
      %v3245 = vadd.f32 %v3242, %v1451
      %3246 = vst.msk [vmem:[#allocation2] sm:$0xff] %vm1455, %v3031
      %3247 = vst [vmem:[#allocation3] sm:$0xff] %v3200
      %3248 = vst [vmem:[#allocation3 + $0x8] sm:$0xff] %v3201
      %3249 = vst [vmem:[#allocation3 + $0x10] sm:$0xff] %v3202
      %3250 = vst [vmem:[#allocation3 + $0x18] sm:$0xff] %v3203
      %3251 = vst [vmem:[#allocation3 + $0x20] sm:$0xff] %v3204
      %3252 = vst [vmem:[#allocation3 + $0x28] sm:$0xff] %v3205
      %3253 = vst.msk [vmem:[#allocation4] sm:$0xff] %vm1455, %v3244
      %3254 = vst.msk [vmem:[#allocation4 + $0x8] sm:$0xff] %vm1455, %v3245
      %p3255 = scmp.eq.s32.totalorder %s78, 1
      // Predicated region
      $region137: #{run.1} parent=131 // pred_check
        %p3256 = pneg %p3255
      $region138: #{run.1} parent=131 // pred_check_branch
        %3258 = sbr.rel (%p3256) target = $region140
      $region139: #{run.1} parent=131 // pred_region
        %3259 = vst.msk [vmem:[%s1408] sm:$0xff] %vm1455, %v3031
        %3260 = vst [vmem:[%s1413] sm:$0xff] %v3200
        %3261 = vst [vmem:[%s1413 + $0x8] sm:$0xff] %v3201
        %3262 = vst [vmem:[%s1413 + $0x10] sm:$0xff] %v3202
        %3263 = vst [vmem:[%s1413 + $0x18] sm:$0xff] %v3203
        %3264 = vst [vmem:[%s1413 + $0x20] sm:$0xff] %v3204
        %3265 = vst [vmem:[%s1413 + $0x28] sm:$0xff] %v3205
        %3266 = vst.msk [vmem:[%s1418] sm:$0xff] %vm1455, %v3244
        %3267 = vst.msk [vmem:[%s1418 + $0x8] sm:$0xff] %vm1455, %v3245
      $region140: #{run.1} parent=131 // pred_fallthru
        _
      %p3268 = scmp.lt.s32.totalorder %s77, 1
      %s3269 = scalar_select %p3268, %s77, 1
      %s3270 = smul.addr %s3269, 8
      %s3271 = scalar_lea.vmem %s57, %s3270
      %p3272 = scmp.lt.s32.totalorder %s77, 1
      %s3273 = scalar_select %p3272, %s77, 1
      %s3274 = smul.addr %s3273, 6
      %s3275 = smul.addr %s3274, 8
      %s3276 = scalar_lea.vmem %s59, %s3275
      %p3277 = scmp.lt.s32.totalorder %s77, 1
      %s3278 = scalar_select %p3277, %s77, 1
      %s3279 = smul.addr %s3278, 2
      %s3280 = smul.addr %s3279, 8
      %s3281 = scalar_lea.vmem %s61, %s3280
      // Predicated region
      $region141: #{run.1} parent=131 // pred_check
        %p3282 = pneg %p831
      $region142: #{run.1} parent=131 // pred_check_branch
        %3284 = sbr.rel (%p3282) target = $region144
      $region143: #{run.1} parent=131 // pred_region
        _
      $region144: #{run.1} parent=131 // pred_fallthru
        _
      // Predicated region
      $region145: #{run.1} parent=131 // pred_check
        %p3285 = pneg %p857
      $region146: #{run.1} parent=131 // pred_check_branch
        %3287 = sbr.rel (%p3285) target = $region148
      $region147: #{run.1} parent=131 // pred_region
        _
      $region148: #{run.1} parent=131 // pred_fallthru
        _
      // Predicated region
      $region149: #{run.1} parent=131 // pred_check
        %p3288 = pneg %p883
      $region150: #{run.1} parent=131 // pred_check_branch
        %3290 = sbr.rel (%p3288) target = $region152
      $region151: #{run.1} parent=131 // pred_region
        _
      $region152: #{run.1} parent=131 // pred_fallthru
        _
    $region132: #{run.1} parent=5 // pred_fallthru
      _
    %p3291 = scmp.le.s32.totalorder 2, %s68
    // Predicated region
    $region153: #{run.1} parent=5 // pred_check
      %p3292 = pneg %p3291
    $region154: #{run.1} parent=5 // pred_check_branch
      %3294 = sbr.rel (%p3292) target = $region156
    $region155: #{run.1} parent=5 // pred_region
      %s3295 = ssub.s32 %s68, 2
      // Predicated region
      $region157: #{run.1} parent=155 // pred_check
        %p3296 = pneg %p837
      $region158: #{run.1} parent=155 // pred_check_branch
        %3298 = sbr.rel (%p3296) target = $region160
      $region159: #{run.1} parent=155 // pred_region
        %p3299 = scmp.lt.s32.totalorder %s79, 1
        %s3300 = scalar_select %p3299, %s79, 1
        %s3301 = smul.addr %s3300, 8
        %s3302 = scalar_lea.vmem %s57, %s3301
      $region160: #{run.1} parent=155 // pred_fallthru
        _
      // Predicated region
      $region161: #{run.1} parent=155 // pred_check
        %p3303 = pneg %p863
      $region162: #{run.1} parent=155 // pred_check_branch
        %3305 = sbr.rel (%p3303) target = $region164
      $region163: #{run.1} parent=155 // pred_region
        %p3306 = scmp.lt.s32.totalorder %s79, 1
        %s3307 = scalar_select %p3306, %s79, 1
        %s3308 = smul.addr %s3307, 6
        %s3309 = smul.addr %s3308, 8
        %s3310 = scalar_lea.vmem %s59, %s3309
      $region164: #{run.1} parent=155 // pred_fallthru
        _
      // Predicated region
      $region165: #{run.1} parent=155 // pred_check
        %p3311 = pneg %p889
      $region166: #{run.1} parent=155 // pred_check_branch
        %3313 = sbr.rel (%p3311) target = $region168
      $region167: #{run.1} parent=155 // pred_region
        %p3314 = scmp.lt.s32.totalorder %s79, 1
        %s3315 = scalar_select %p3314, %s79, 1
        %s3316 = smul.addr %s3315, 2
        %s3317 = smul.addr %s3316, 8
        %s3318 = scalar_lea.vmem %s61, %s3317
      $region168: #{run.1} parent=155 // pred_fallthru
        _
    $region156: #{run.1} parent=5 // pred_fallthru
      _
  $region6: #{run.1} parent=0 // loop_footer
    %s72 = sadd.s32 1, %s68
  $region7: #{run.1} parent=0 // loop_footer_branch
    %67 = sbr.rel target = $region3
  $region8: #{run.1} parent=0 // loop_exit
    _

</llo_original>
